<compile_context>
chip_gen: v7x
topology: tpu7x:2x2x1
jax: 0.10.0
libtpu: 0.0.40
codegen_flags: <defaults>
</compile_context>

<pallas_src>
import functools

import numpy as np
import jax
import jax.numpy as jnp
from jax import lax
from jax.experimental import pallas as pl
from jax.experimental.pallas import tpu as pltpu

# ----------------------------------------------------------------------------
# Static KAN / spline configuration (module defaults: num=5, k=3).
# ----------------------------------------------------------------------------
NUM_SPLINES = 5                              # G (grid intervals)
SPLINE_ORDER = 3                             # k
N_BASIS = NUM_SPLINES + SPLINE_ORDER         # G + k = 8 basis functions
N_FEATS = 1 + N_BASIS                        # [silu base] + 8 bases
LANE = 128
SUBLANE = 8


def _make_grid(lo, hi, num=NUM_SPLINES, k=SPLINE_ORDER):
    """extend_grid(linspace(lo, hi, num+1), k) -> tuple of python floats."""
    base = list(np.linspace(lo, hi, num + 1))
    h = (hi - lo) / num
    left = [lo - h * (i + 1) for i in range(k)][::-1]
    right = [hi + h * (i + 1) for i in range(k)]
    return tuple(float(v) for v in (left + base + right))


GRID11 = _make_grid(-1.0, 1.0)   # main KAN layers (grid_range=[-1, 1])
GRID01 = _make_grid(0.0, 1.0)    # position KAN    (grid_range=[0, 1])
K11_LO = float(GRID11[0])
K11_INV_H = float(1.0 / (GRID11[1] - GRID11[0]))


def _round_up(x, m):
    return ((x + m - 1) // m) * m


# ----------------------------------------------------------------------------
# In-kernel helper: stage fused KAN features [silu | B_0..B_7] into VMEM.
#
# Closed-form uniform cubic B-spline: with t = (x - knot0)/h, m = floor(t),
# u = t - m, the only nonzero bases at x are B_{m-3..m} with the standard
# blending polynomials N0..N3 of u (partition of unity).  Outside the extended
# grid no basis index matches, giving exactly zero like the reference
# recursion's half-open order-0 indicator.
# ----------------------------------------------------------------------------
def _stage_kan_features(x_ref, feat_ref, n_rows, d_pad, chunk, lo, inv_h, approx):
    def do_chunk(r):
        x = x_ref[pl.ds(r, chunk), pl.ds(0, d_pad)]            # (chunk, d_pad) f32

        def put(idx, val):
            feat_ref[pl.ds(r, chunk), pl.ds(idx * d_pad, d_pad)] = (
                val.astype(feat_ref.dtype))

        # SiLU base (EUP reciprocal on the fast path).
        put(0, x * pl.reciprocal(1.0 + jnp.exp(-x), approx=approx))

        t = (x - lo) * inv_h
        m = jnp.floor(t)
        u = t - m
        u2 = u * u
        u3 = u2 * u
        n3 = u3 * (1.0 / 6.0)                       # rising piece
        omu = 1.0 - u
        n0 = omu * omu * omu * (1.0 / 6.0)          # falling piece
        n1 = (2.0 / 3.0) + u2 * (0.5 * u - 1.0)
        n2 = 1.0 - (n0 + n1 + n3)                   # partition of unity
        zero = jnp.zeros_like(x)
        for j in range(N_BASIS):
            d = m - float(j)
            put(1 + j,
                jnp.where(d == 0.0, n3,
                jnp.where(d == 1.0, n2,
                jnp.where(d == 2.0, n1,
                jnp.where(d == 3.0, n0, zero)))))

    if n_rows == chunk:
        do_chunk(0)
    else:
        def body(c, carry):
            do_chunk(pl.multiple_of(c * chunk, chunk))
            return carry
        lax.fori_loop(0, n_rows // chunk, body, 0)


# ----------------------------------------------------------------------------
# The Pallas kernel: one batch tile of the full forward pass.
# ----------------------------------------------------------------------------
def _forward_kernel(emb_ref, aproj_ref, w1_ref, w2_ref, wout_ref, bout_ref,
                    out_ref, xs_ref, feat_ref, *,
                    chunk, approx, grid_lo, grid_inv_h):
    TB, S, E = emb_ref.shape
    Dmax = xs_ref.shape[1]
    Dp = w1_ref.shape[0] // N_FEATS
    Hp = w2_ref.shape[0] // N_FEATS
    d_enc = 3 * E

    # ---- pooling over the sequence (pe + position-KAN already folded in) ----
    emb = emb_ref[...].astype(jnp.float32)                        # (TB, S, E)
    scores = jnp.sum(emb * aproj_ref[...][None, :, :], axis=-1)   # (TB, S)
    mx = jnp.max(scores, axis=-1, keepdims=True)
    ex = jnp.exp(scores - mx)
    # Exact reciprocal here: approx would perturb the attention weights.
    attn = ex / jnp.sum(ex, axis=-1, keepdims=True)
    attended = jnp.sum(emb * attn[:, :, None], axis=1)            # (TB, E)
    mean_f = jnp.mean(emb, axis=1)                                # (TB, E)
    max_f = jnp.max(emb, axis=1)                                  # (TB, E)

    # Stage the (lane-padded) encoder output into the f32 x-scratch with one
    # aligned full-width store; zero padding lanes meet zero weight rows.
    parts = [attended, mean_f, max_f]
    if d_enc < Dmax:
        parts.append(jnp.zeros((TB, Dmax - d_enc), jnp.float32))
    xs_ref[...] = jnp.concatenate(parts, axis=-1)                 # (TB, Dmax)

    # ---- KAN layer 1: chunked feature staging -> one fused MXU matmul -------
    _stage_kan_features(xs_ref, feat_ref, TB, Dp, chunk, grid_lo, grid_inv_h,
                        approx)
    h = jnp.dot(feat_ref[:, pl.ds(0, N_FEATS * Dp)], w1_ref[...],
                preferred_element_type=jnp.float32)               # (TB, Hp)

    # ---- KAN layer 2 ---------------------------------------------------------
    xs_ref[:, pl.ds(0, Hp)] = h          # padding cols of w1 are zero -> h pad = 0
    _stage_kan_features(xs_ref, feat_ref, TB, Hp, chunk, grid_lo, grid_inv_h,
                        approx)
    h2 = jnp.dot(feat_ref[:, pl.ds(0, N_FEATS * Hp)], w2_ref[...],
                 preferred_element_type=jnp.float32)              # (TB, Hp)

    # ---- output projection (lane-dense Vp, unmasked store) ------------------
    logits = jnp.dot(h2.astype(wout_ref.dtype), wout_ref[...],
                     preferred_element_type=jnp.float32)
    out_ref[...] = logits + bout_ref[...]


# ----------------------------------------------------------------------------
# Weight packing (done once outside the kernel; pure reshuffle + zero padding).
# ----------------------------------------------------------------------------
def _pack_kan_weights(lp, d_in_pad, d_out_pad, dtype):
    """(9*d_in_pad, d_out_pad) fused weight.  Row blocks: [base | basis_0..7].

    w[base]    = mask * scale_base
    w[basis_j] = mask * scale_sp * coef[:, :, j]
    Padding rows/cols are zero, so padded activation lanes never contribute.
    """
    d_in, d_out = lp["scale_base"].shape
    wb = lp["mask"] * lp["scale_base"]                                  # (D, H)
    wsp = (lp["mask"] * lp["scale_sp"])[:, :, None] * lp["coef"]        # (D, H, 8)
    blocks = [wb] + [wsp[:, :, j] for j in range(N_BASIS)]
    blocks = [jnp.pad(b, ((0, d_in_pad - d_in), (0, d_out_pad - d_out)))
              for b in blocks]
    return jnp.concatenate(blocks, axis=0).astype(dtype)


# ----------------------------------------------------------------------------
# Pure-JAX reference pieces (also used to precompute the position-KAN bias).
# ----------------------------------------------------------------------------
def _ref_bspline(x, grid_vals):
    g = jnp.asarray(grid_vals, jnp.float32)[None, None, :]
    xe = x[:, :, None]
    val = ((xe >= g[:, :, :-1]) & (xe < g[:, :, 1:])).astype(x.dtype)
    for kk in range(1, SPLINE_ORDER + 1):
        val = ((xe - g[:, :, :-(kk + 1)])
               / (g[:, :, kk:-1] - g[:, :, :-(kk + 1)]) * val[:, :, :-1]
               + (g[:, :, kk + 1:] - xe)
               / (g[:, :, kk + 1:] - g[:, :, 1:-kk]) * val[:, :, 1:])
    return val


def _ref_kan_layer(x, lp, grid_vals):
    base = jax.nn.silu(x)
    bs = _ref_bspline(x, grid_vals)
    y = jnp.einsum('ijk,jlk->ijl', bs, lp["coef"])
    y = lp["scale_base"][None] * base[:, :, None] + lp["scale_sp"][None] * y
    y = lp["mask"][None] * y
    return jnp.sum(y, axis=1)


def ref_forward(params, token_ids):
    emb = jnp.take(params["embedding"], token_ids, axis=0) + params["pe"][None]
    S = emb.shape[1]
    positions = (jnp.arange(S, dtype=jnp.float32) / max(S - 1, 1)).reshape(S, 1)
    pos_enc = _ref_kan_layer(positions, params["pos_kan"], GRID01)      # (S, E)
    emb = emb + pos_enc[None]
    scores = jnp.einsum('bse,e->bs', emb, params["attn_proj"])
    attn = jax.nn.softmax(scores, axis=1)
    attended = jnp.einsum('bse,bs->be', emb, attn)
    mean_f = jnp.mean(emb, axis=1)
    max_f = jnp.max(emb, axis=1)
    enc = jnp.concatenate([attended, mean_f, max_f], axis=-1)           # (B, 3E)
    h = _ref_kan_layer(enc, params["kan1"], GRID11)
    h = _ref_kan_layer(h, params["kan2"], GRID11)
    return h @ params["w_out"] + params["b_out"][None, :]


# ----------------------------------------------------------------------------
# Wrapper: glue (gather + static position bias) + one pallas_call.
# ----------------------------------------------------------------------------
def event_kan_forward(params, token_ids, matmul_dtype=jnp.bfloat16):
    E = params["embedding"].shape[1]
    H, V = params["w_out"].shape
    S = params["pe"].shape[0]
    B = token_ids.shape[0]

    Hp = _round_up(H, LANE)
    Vp = _round_up(V, LANE)
    Dp = _round_up(3 * E, LANE)            # padded encoder feature dim
    Dmax = max(Dp, Hp)

    stream_dtype = matmul_dtype            # bf16 stream on the fast path
    stream_isz = jnp.dtype(stream_dtype).itemsize
    mm_isz = jnp.dtype(matmul_dtype).itemsize

    def tile_vmem_bytes(tb):
        stream = 2 * (tb * S * E * stream_isz + tb * Vp * 4)   # dbl-buffered in/out
        scratch = tb * Dmax * 4 + tb * N_FEATS * Dmax * mm_isz
        return stream + scratch

    # Batch tile: biggest power-of-two multiple of 8 (<=128) that fits the
    # per-tile VMEM budget; keep >= 2 grid steps when the batch allows so the
    # "parallel" axis can shard across both v7x TensorCores.
    TILE_BUDGET = 8 * 1024 * 1024
    TB = SUBLANE
    while TB * 2 <= 128 and TB * 2 <= _round_up(B, SUBLANE):
        TB *= 2
    while TB > SUBLANE and tile_vmem_bytes(TB) > TILE_BUDGET:
        TB //= 2
    if B > SUBLANE and _round_up(B, TB) == TB:
        TB = max(SUBLANE, TB // 2)
    Bp = _round_up(B, TB)
    CHUNK = min(32, TB)                    # VPU working-set chunk (divides TB)

    # ---- hoisted: pe + position-KAN encoding depends only on S / weights ----
    positions = (jnp.arange(S, dtype=jnp.float32) / max(S - 1, 1)).reshape(S, 1)
    pos_enc = _ref_kan_layer(positions, params["pos_kan"], GRID01)       # (S, E)
    seq_bias = params["pe"].astype(jnp.float32) + pos_enc                # (S, E)

    ids = jnp.pad(token_ids, ((0, Bp - B), (0, 0)))
    embedded = (jnp.take(params["embedding"], ids, axis=0).astype(jnp.float32)
                + seq_bias[None]).astype(stream_dtype)                   # (Bp,S,E)

    # Pack / pad weights once (in production this would be cached).
    w1 = _pack_kan_weights(params["kan1"], Dp, Hp, matmul_dtype)         # (9Dp, Hp)
    w2 = _pack_kan_weights(params["kan2"], Hp, Hp, matmul_dtype)         # (9Hp, Hp)
    w_out = jnp.pad(params["w_out"],
                    ((0, Hp - H), (0, Vp - V))).astype(matmul_dtype)     # (Hp, Vp)
    b_out = jnp.pad(params["b_out"].reshape(1, V),
                    ((0, 0), (0, Vp - V))).astype(jnp.float32)           # (1, Vp)
    a_proj = params["attn_proj"].reshape(1, E).astype(jnp.float32)

    # VMEM budget estimate -> raise the scoped limit only when needed.
    weight_bytes = ((N_FEATS * Dp * Hp + N_FEATS * Hp * Hp + Hp * Vp) * mm_isz
                    + Vp * 4 + E * 4)
    est_total = tile_vmem_bytes(TB) + 2 * weight_bytes + (2 << 20)
    vmem_limit = (int(min(est_total, 100 * 1024 * 1024))
                  if est_total > 30 * 1024 * 1024 else None)

    approx = bool(jnp.dtype(matmul_dtype) == jnp.dtype(jnp.bfloat16))
    kernel = functools.partial(_forward_kernel, chunk=CHUNK, approx=approx,
                               grid_lo=K11_LO, grid_inv_h=K11_INV_H)

    out = pl.pallas_call(
        kernel,
        out_shape=jax.ShapeDtypeStruct((Bp, Vp), jnp.float32),
        grid=(Bp // TB,),
        in_specs=[
            pl.BlockSpec((TB, S, E), lambda b: (b, 0, 0)),        # embedded (+bias)
            pl.BlockSpec((1, E), lambda b: (0, 0)),               # attn projection
            pl.BlockSpec((N_FEATS * Dp, Hp), lambda b: (0, 0)),   # KAN layer 1 w
            pl.BlockSpec((N_FEATS * Hp, Hp), lambda b: (0, 0)),   # KAN layer 2 w
            pl.BlockSpec((Hp, Vp), lambda b: (0, 0)),             # output w
            pl.BlockSpec((1, Vp), lambda b: (0, 0)),              # output bias
        ],
        out_specs=pl.BlockSpec((TB, Vp), lambda b: (b, 0)),
        scratch_shapes=[
            pltpu.VMEM((TB, Dmax), jnp.float32),                  # layer input x
            pltpu.VMEM((TB, N_FEATS * Dmax), matmul_dtype),       # staged features
        ],
        compiler_params=pltpu.CompilerParams(
            dimension_semantics=("parallel",),   # batch axis: megacore / v7x 2 TCs
            vmem_limit_bytes=vmem_limit),
    )(embedded, a_proj, w1, w2, w_out, b_out)

    return out[:B, :V]


# ----------------------------------------------------------------------------
# Deterministic parameter construction (synthetic; mirrors __init__ shapes).
# ----------------------------------------------------------------------------
def _kan_layer_params(key, in_dim, out_dim, scale_base_sigma):
    k1, k2 = jax.random.split(key)
    scale_base = (scale_base_sigma
                  * (jax.random.uniform(k1, (in_dim, out_dim), jnp.float32) * 2.0 - 1.0)
                  / np.sqrt(in_dim))
    scale_sp = jnp.ones((in_dim, out_dim), jnp.float32) / np.sqrt(in_dim)
    mask = jnp.ones((in_dim, out_dim), jnp.float32)
    # TODO(synk): the original module fits `coef` with torch.linalg.lstsq over
    # noise (curve2coef); here a deterministic random init of the same shape
    # (in_dim, out_dim, G+k) is used since parameters are synthetic.
    coef = jax.random.normal(k2, (in_dim, out_dim, N_BASIS), jnp.float32) * 0.1
    return dict(scale_base=scale_base, scale_sp=scale_sp, mask=mask, coef=coef)


def init_params(key, num_events, embedding_dim, hidden_dim, seq_len):
    keys = jax.random.split(key, 8)
    params = {}
    params["embedding"] = jax.random.normal(
        keys[0], (num_events, embedding_dim), jnp.float32)

    position = np.arange(seq_len, dtype=np.float32)[:, None]
    div_term = np.exp(np.arange(0, embedding_dim, 2, dtype=np.float32)
                      * -(np.log(10000.0) / embedding_dim))
    pe = np.zeros((seq_len, embedding_dim), np.float32)
    pe[:, 0::2] = np.sin(position * div_term)
    pe[:, 1::2] = np.cos(position * div_term)
    params["pe"] = jnp.asarray(pe)

    # position KAN: in_dim=1 -> embedding_dim, scale_base == 0 per the module.
    params["pos_kan"] = _kan_layer_params(keys[1], 1, embedding_dim,
                                          scale_base_sigma=0.0)
    # TODO(synk): the PyTorch encoder draws this projection with torch.randn at
    # every forward call; here it is frozen into a deterministic parameter.
    params["attn_proj"] = jax.random.normal(keys[2], (embedding_dim,), jnp.float32)

    params["kan1"] = _kan_layer_params(keys[3], 3 * embedding_dim, hidden_dim,
                                       scale_base_sigma=0.2)
    params["kan2"] = _kan_layer_params(keys[4], hidden_dim, hidden_dim,
                                       scale_base_sigma=0.2)

    bound = 1.0 / np.sqrt(hidden_dim)
    params["w_out"] = jax.random.uniform(keys[5], (hidden_dim, num_events),
                                         jnp.float32, -bound, bound)
    params["b_out"] = jax.random.uniform(keys[6], (num_events,),
                                         jnp.float32, -bound, bound)
    return params


# ----------------------------------------------------------------------------
if __name__ == "__main__":
    num_events, embedding_dim, hidden_dim, seq_len, batch = 10, 32, 64, 10, 2

    key = jax.random.PRNGKey(0)
    pkey, xkey = jax.random.split(key)
    params = init_params(pkey, num_events, embedding_dim, hidden_dim, seq_len)
    token_ids = jax.random.randint(xkey, (batch, seq_len), 0, num_events,
                                   dtype=jnp.int32)

    ref = np.asarray(jax.block_until_ready(ref_forward(params, token_ids)))

    # Precise path (f32 operands, exact reciprocals): tight correctness check.
    out_f32 = jax.block_until_ready(
        event_kan_forward(params, token_ids, matmul_dtype=jnp.float32))
    assert out_f32.shape == (batch, num_events)
    diff32 = float(np.max(np.abs(np.asarray(out_f32) - ref)))
    if not np.allclose(np.asarray(out_f32), ref, rtol=1e-3, atol=1e-3):
        raise AssertionError(f"f32 kernel/reference mismatch: max abs diff {diff32}")

    # Fast path (default: bf16 stream + bf16 MXU operands, f32 accumulation).
    out_bf16 = jax.block_until_ready(
        event_kan_forward(params, token_ids, matmul_dtype=jnp.bfloat16))
    assert out_bf16.shape == (batch, num_events)
    diffbf = float(np.max(np.abs(np.asarray(out_bf16) - ref)))
    if not np.allclose(np.asarray(out_bf16), ref, rtol=1e-1, atol=1e-1):
        raise AssertionError(f"bf16 kernel/reference mismatch: max abs diff {diffbf}")

    print("KERNEL_OK")
</pallas_src>

<mosaic_0001>
module attributes {stable_mosaic.version = 11 : i64} {
  func.func @_forward_kernel(%arg0: i32, %arg1: memref<8x10x32xf32, #tpu.memory_space<vmem>>, %arg2: memref<1x32xf32, #tpu.memory_space<vmem>>, %arg3: memref<1152x128xf32, #tpu.memory_space<vmem>>, %arg4: memref<1152x128xf32, #tpu.memory_space<vmem>>, %arg5: memref<128x128xf32, #tpu.memory_space<vmem>>, %arg6: memref<1x128xf32, #tpu.memory_space<vmem>>, %arg7: memref<8x128xf32, #tpu.memory_space<vmem>>, %arg8: memref<8x128xf32, #tpu.memory_space<vmem>>, %arg9: memref<8x1152xf32, #tpu.memory_space<vmem>>) attributes {dimension_semantics = [#tpu.dimension_semantics<parallel>], iteration_bounds = array<i64: 1>, scalar_prefetch = 0 : i64, scratch_operands = 2 : i64, tpu.core_type = #tpu.core_type<tc>, window_params = [{transform_indices = @transform_0, window_bounds = array<i64: 8, 10, 32>}, {pipeline_mode = #tpu.pipeline_mode<synchronous>, transform_indices = @transform_1, window_bounds = array<i64: 1, 32>}, {pipeline_mode = #tpu.pipeline_mode<synchronous>, transform_indices = @transform_2, window_bounds = array<i64: 1152, 128>}, {pipeline_mode = #tpu.pipeline_mode<synchronous>, transform_indices = @transform_3, window_bounds = array<i64: 1152, 128>}, {pipeline_mode = #tpu.pipeline_mode<synchronous>, transform_indices = @transform_4, window_bounds = array<i64: 128, 128>}, {pipeline_mode = #tpu.pipeline_mode<synchronous>, transform_indices = @transform_5, window_bounds = array<i64: 1, 128>}, {transform_indices = @transform_6, window_bounds = array<i64: 8, 128>}]} {
    %c0 = arith.constant 0 : index
    %c0_0 = arith.constant 0 : index
    %c0_1 = arith.constant 0 : index
    %0 = vector.load %arg1[%c0, %c0_0, %c0_1] : memref<8x10x32xf32, #tpu.memory_space<vmem>>, vector<8x10x32xf32>
    %c0_2 = arith.constant 0 : index
    %c0_3 = arith.constant 0 : index
    %1 = vector.load %arg2[%c0_2, %c0_3] : memref<1x32xf32, #tpu.memory_space<vmem>>, vector<1x32xf32>
    %2 = vector.shape_cast %1 : vector<1x32xf32> to vector<1x1x32xf32>
    %3 = vector.broadcast %2 : vector<1x1x32xf32> to vector<8x10x32xf32>
    %4 = arith.mulf %0, %3 : vector<8x10x32xf32>
    %cst = arith.constant dense<0.000000e+00> : vector<8x10xf32>
    %5 = vector.multi_reduction <add>, %4, %cst [2] : vector<8x10x32xf32> to vector<8x10xf32>
    %cst_4 = arith.constant dense<0xFF800000> : vector<8xf32>
    %6 = vector.multi_reduction <maximumf>, %5, %cst_4 [1] : vector<8x10xf32> to vector<8xf32>
    %7 = vector.shape_cast %6 : vector<8xf32> to vector<8x1xf32>
    %8 = vector.broadcast %7 : vector<8x1xf32> to vector<8x10xf32>
    %9 = arith.subf %5, %8 : vector<8x10xf32>
    %10 = math.exp %9 : vector<8x10xf32>
    %cst_5 = arith.constant dense<0.000000e+00> : vector<8xf32>
    %11 = vector.multi_reduction <add>, %10, %cst_5 [1] : vector<8x10xf32> to vector<8xf32>
    %12 = vector.shape_cast %11 : vector<8xf32> to vector<8x1xf32>
    %13 = vector.broadcast %12 : vector<8x1xf32> to vector<8x10xf32>
    %14 = arith.divf %10, %13 : vector<8x10xf32>
    %15 = vector.shape_cast %14 : vector<8x10xf32> to vector<8x10x1xf32>
    %16 = vector.broadcast %15 : vector<8x10x1xf32> to vector<8x10x32xf32>
    %17 = arith.mulf %0, %16 : vector<8x10x32xf32>
    %cst_6 = arith.constant dense<0.000000e+00> : vector<8x32xf32>
    %18 = vector.multi_reduction <add>, %17, %cst_6 [1] : vector<8x10x32xf32> to vector<8x32xf32>
    %cst_7 = arith.constant dense<0.000000e+00> : vector<8x32xf32>
    %19 = vector.multi_reduction <add>, %0, %cst_7 [1] : vector<8x10x32xf32> to vector<8x32xf32>
    %cst_8 = arith.constant 1.000000e+01 : f32
    %20 = vector.broadcast %cst_8 : f32 to vector<8x32xf32>
    %21 = arith.divf %19, %20 : vector<8x32xf32>
    %cst_9 = arith.constant dense<0xFF800000> : vector<8x32xf32>
    %22 = vector.multi_reduction <maximumf>, %0, %cst_9 [1] : vector<8x10x32xf32> to vector<8x32xf32>
    %cst_10 = arith.constant 0.000000e+00 : f32
    %23 = vector.broadcast %cst_10 : f32 to vector<8x32xf32>
    %24 = tpu.concatenate %18, %21, %22, %23 in 1 : vector<8x32xf32>, vector<8x32xf32>, vector<8x32xf32>, vector<8x32xf32> -> vector<8x128xf32>
    %c0_11 = arith.constant 0 : index
    %c0_12 = arith.constant 0 : index
    %25 = vector.load %arg8[%c0_11, %c0_12] : memref<8x128xf32, #tpu.memory_space<vmem>>, vector<8x128xf32>
    tpu.vector_store %arg8[%c0_11, %c0_12], %24 {strides = array<i32>} : memref<8x128xf32, #tpu.memory_space<vmem>>, vector<8x128xf32>,
    %c0_13 = arith.constant 0 : index
    %c0_14 = arith.constant 0 : index
    %26 = vector.load %arg8[%c0_13, %c0_14] : memref<8x128xf32, #tpu.memory_space<vmem>>, vector<8x128xf32>
    %cst_15 = arith.constant 0.000000e+00 : f32
    %27 = vector.broadcast %cst_15 : f32 to vector<8x128xf32>
    %28 = arith.subf %27, %26 : vector<8x128xf32>
    %29 = math.exp %28 : vector<8x128xf32>
    %cst_16 = arith.constant 1.000000e+00 : f32
    %30 = vector.broadcast %cst_16 : f32 to vector<8x128xf32>
    %31 = arith.addf %30, %29 : vector<8x128xf32>
    %32 = tpu.reciprocal %31 : vector<8x128xf32> -> vector<8x128xf32>
    %33 = arith.mulf %26, %32 : vector<8x128xf32>
    %c0_17 = arith.constant 0 : index
    %c0_18 = arith.constant 0 : index
    %34 = vector.load %arg9[%c0_17, %c0_18] : memref<8x1152xf32, #tpu.memory_space<vmem>>, vector<8x128xf32>
    tpu.vector_store %arg9[%c0_17, %c0_18], %33 {strides = array<i32>} : memref<8x1152xf32, #tpu.memory_space<vmem>>, vector<8x128xf32>,
    %cst_19 = arith.constant -2.200000e+00 : f32
    %35 = vector.broadcast %cst_19 : f32 to vector<8x128xf32>
    %36 = arith.subf %26, %35 : vector<8x128xf32>
    %cst_20 = arith.constant 2.500000e+00 : f32
    %37 = vector.broadcast %cst_20 : f32 to vector<8x128xf32>
    %38 = arith.mulf %36, %37 : vector<8x128xf32>
    %39 = math.floor %38 : vector<8x128xf32>
    %40 = arith.subf %38, %39 : vector<8x128xf32>
    %41 = arith.mulf %40, %40 : vector<8x128xf32>
    %42 = arith.mulf %41, %40 : vector<8x128xf32>
    %cst_21 = arith.constant 0.166666672 : f32
    %43 = vector.broadcast %cst_21 : f32 to vector<8x128xf32>
    %44 = arith.mulf %42, %43 : vector<8x128xf32>
    %cst_22 = arith.constant 1.000000e+00 : f32
    %45 = vector.broadcast %cst_22 : f32 to vector<8x128xf32>
    %46 = arith.subf %45, %40 : vector<8x128xf32>
    %47 = arith.mulf %46, %46 : vector<8x128xf32>
    %48 = arith.mulf %47, %46 : vector<8x128xf32>
    %cst_23 = arith.constant 0.166666672 : f32
    %49 = vector.broadcast %cst_23 : f32 to vector<8x128xf32>
    %50 = arith.mulf %48, %49 : vector<8x128xf32>
    %cst_24 = arith.constant 5.000000e-01 : f32
    %51 = vector.broadcast %cst_24 : f32 to vector<8x128xf32>
    %52 = arith.mulf %51, %40 : vector<8x128xf32>
    %cst_25 = arith.constant 1.000000e+00 : f32
    %53 = vector.broadcast %cst_25 : f32 to vector<8x128xf32>
    %54 = arith.subf %52, %53 : vector<8x128xf32>
    %55 = arith.mulf %41, %54 : vector<8x128xf32>
    %cst_26 = arith.constant 0.666666686 : f32
    %56 = vector.broadcast %cst_26 : f32 to vector<8x128xf32>
    %57 = arith.addf %56, %55 : vector<8x128xf32>
    %58 = arith.addf %50, %57 : vector<8x128xf32>
    %59 = arith.addf %58, %44 : vector<8x128xf32>
    %cst_27 = arith.constant 1.000000e+00 : f32
    %60 = vector.broadcast %cst_27 : f32 to vector<8x128xf32>
    %61 = arith.subf %60, %59 : vector<8x128xf32>
    %cst_28 = arith.constant 0.000000e+00 : f32
    %62 = vector.broadcast %cst_28 : f32 to vector<8x128xf32>
    %cst_29 = arith.constant 0.000000e+00 : f32
    %63 = vector.broadcast %cst_29 : f32 to vector<8x128xf32>
    %64 = arith.subf %39, %63 : vector<8x128xf32>
    %cst_30 = arith.constant 0.000000e+00 : f32
    %65 = vector.broadcast %cst_30 : f32 to vector<8x128xf32>
    %66 = arith.cmpf oeq, %64, %65 : vector<8x128xf32>
    %cst_31 = arith.constant 1.000000e+00 : f32
    %67 = vector.broadcast %cst_31 : f32 to vector<8x128xf32>
    %68 = arith.cmpf oeq, %64, %67 : vector<8x128xf32>
    %cst_32 = arith.constant 2.000000e+00 : f32
    %69 = vector.broadcast %cst_32 : f32 to vector<8x128xf32>
    %70 = arith.cmpf oeq, %64, %69 : vector<8x128xf32>
    %cst_33 = arith.constant 3.000000e+00 : f32
    %71 = vector.broadcast %cst_33 : f32 to vector<8x128xf32>
    %72 = arith.cmpf oeq, %64, %71 : vector<8x128xf32>
    %73 = arith.select %72, %50, %62 : vector<8x128xi1>, vector<8x128xf32>
    %74 = arith.select %70, %57, %73 : vector<8x128xi1>, vector<8x128xf32>
    %75 = arith.select %68, %61, %74 : vector<8x128xi1>, vector<8x128xf32>
    %76 = arith.select %66, %44, %75 : vector<8x128xi1>, vector<8x128xf32>
    %c0_34 = arith.constant 0 : index
    %c128 = arith.constant 128 : index
    %77 = vector.load %arg9[%c0_34, %c128] : memref<8x1152xf32, #tpu.memory_space<vmem>>, vector<8x128xf32>
    tpu.vector_store %arg9[%c0_34, %c128], %76 {strides = array<i32>} : memref<8x1152xf32, #tpu.memory_space<vmem>>, vector<8x128xf32>,
    %cst_35 = arith.constant 1.000000e+00 : f32
    %78 = vector.broadcast %cst_35 : f32 to vector<8x128xf32>
    %79 = arith.subf %39, %78 : vector<8x128xf32>
    %cst_36 = arith.constant 0.000000e+00 : f32
    %80 = vector.broadcast %cst_36 : f32 to vector<8x128xf32>
    %81 = arith.cmpf oeq, %79, %80 : vector<8x128xf32>
    %cst_37 = arith.constant 1.000000e+00 : f32
    %82 = vector.broadcast %cst_37 : f32 to vector<8x128xf32>
    %83 = arith.cmpf oeq, %79, %82 : vector<8x128xf32>
    %cst_38 = arith.constant 2.000000e+00 : f32
    %84 = vector.broadcast %cst_38 : f32 to vector<8x128xf32>
    %85 = arith.cmpf oeq, %79, %84 : vector<8x128xf32>
    %cst_39 = arith.constant 3.000000e+00 : f32
    %86 = vector.broadcast %cst_39 : f32 to vector<8x128xf32>
    %87 = arith.cmpf oeq, %79, %86 : vector<8x128xf32>
    %88 = arith.select %87, %50, %62 : vector<8x128xi1>, vector<8x128xf32>
    %89 = arith.select %85, %57, %88 : vector<8x128xi1>, vector<8x128xf32>
    %90 = arith.select %83, %61, %89 : vector<8x128xi1>, vector<8x128xf32>
    %91 = arith.select %81, %44, %90 : vector<8x128xi1>, vector<8x128xf32>
    %c0_40 = arith.constant 0 : index
    %c256 = arith.constant 256 : index
    %92 = vector.load %arg9[%c0_40, %c256] : memref<8x1152xf32, #tpu.memory_space<vmem>>, vector<8x128xf32>
    tpu.vector_store %arg9[%c0_40, %c256], %91 {strides = array<i32>} : memref<8x1152xf32, #tpu.memory_space<vmem>>, vector<8x128xf32>,
    %cst_41 = arith.constant 2.000000e+00 : f32
    %93 = vector.broadcast %cst_41 : f32 to vector<8x128xf32>
    %94 = arith.subf %39, %93 : vector<8x128xf32>
    %cst_42 = arith.constant 0.000000e+00 : f32
    %95 = vector.broadcast %cst_42 : f32 to vector<8x128xf32>
    %96 = arith.cmpf oeq, %94, %95 : vector<8x128xf32>
    %cst_43 = arith.constant 1.000000e+00 : f32
    %97 = vector.broadcast %cst_43 : f32 to vector<8x128xf32>
    %98 = arith.cmpf oeq, %94, %97 : vector<8x128xf32>
    %cst_44 = arith.constant 2.000000e+00 : f32
    %99 = vector.broadcast %cst_44 : f32 to vector<8x128xf32>
    %100 = arith.cmpf oeq, %94, %99 : vector<8x128xf32>
    %cst_45 = arith.constant 3.000000e+00 : f32
    %101 = vector.broadcast %cst_45 : f32 to vector<8x128xf32>
    %102 = arith.cmpf oeq, %94, %101 : vector<8x128xf32>
    %103 = arith.select %102, %50, %62 : vector<8x128xi1>, vector<8x128xf32>
    %104 = arith.select %100, %57, %103 : vector<8x128xi1>, vector<8x128xf32>
    %105 = arith.select %98, %61, %104 : vector<8x128xi1>, vector<8x128xf32>
    %106 = arith.select %96, %44, %105 : vector<8x128xi1>, vector<8x128xf32>
    %c0_46 = arith.constant 0 : index
    %c384 = arith.constant 384 : index
    %107 = vector.load %arg9[%c0_46, %c384] : memref<8x1152xf32, #tpu.memory_space<vmem>>, vector<8x128xf32>
    tpu.vector_store %arg9[%c0_46, %c384], %106 {strides = array<i32>} : memref<8x1152xf32, #tpu.memory_space<vmem>>, vector<8x128xf32>,
    %cst_47 = arith.constant 3.000000e+00 : f32
    %108 = vector.broadcast %cst_47 : f32 to vector<8x128xf32>
    %109 = arith.subf %39, %108 : vector<8x128xf32>
    %cst_48 = arith.constant 0.000000e+00 : f32
    %110 = vector.broadcast %cst_48 : f32 to vector<8x128xf32>
    %111 = arith.cmpf oeq, %109, %110 : vector<8x128xf32>
    %cst_49 = arith.constant 1.000000e+00 : f32
    %112 = vector.broadcast %cst_49 : f32 to vector<8x128xf32>
    %113 = arith.cmpf oeq, %109, %112 : vector<8x128xf32>
    %cst_50 = arith.constant 2.000000e+00 : f32
    %114 = vector.broadcast %cst_50 : f32 to vector<8x128xf32>
    %115 = arith.cmpf oeq, %109, %114 : vector<8x128xf32>
    %cst_51 = arith.constant 3.000000e+00 : f32
    %116 = vector.broadcast %cst_51 : f32 to vector<8x128xf32>
    %117 = arith.cmpf oeq, %109, %116 : vector<8x128xf32>
    %118 = arith.select %117, %50, %62 : vector<8x128xi1>, vector<8x128xf32>
    %119 = arith.select %115, %57, %118 : vector<8x128xi1>, vector<8x128xf32>
    %120 = arith.select %113, %61, %119 : vector<8x128xi1>, vector<8x128xf32>
    %121 = arith.select %111, %44, %120 : vector<8x128xi1>, vector<8x128xf32>
    %c0_52 = arith.constant 0 : index
    %c512 = arith.constant 512 : index
    %122 = vector.load %arg9[%c0_52, %c512] : memref<8x1152xf32, #tpu.memory_space<vmem>>, vector<8x128xf32>
    tpu.vector_store %arg9[%c0_52, %c512], %121 {strides = array<i32>} : memref<8x1152xf32, #tpu.memory_space<vmem>>, vector<8x128xf32>,
    %cst_53 = arith.constant 4.000000e+00 : f32
    %123 = vector.broadcast %cst_53 : f32 to vector<8x128xf32>
    %124 = arith.subf %39, %123 : vector<8x128xf32>
    %cst_54 = arith.constant 0.000000e+00 : f32
    %125 = vector.broadcast %cst_54 : f32 to vector<8x128xf32>
    %126 = arith.cmpf oeq, %124, %125 : vector<8x128xf32>
    %cst_55 = arith.constant 1.000000e+00 : f32
    %127 = vector.broadcast %cst_55 : f32 to vector<8x128xf32>
    %128 = arith.cmpf oeq, %124, %127 : vector<8x128xf32>
    %cst_56 = arith.constant 2.000000e+00 : f32
    %129 = vector.broadcast %cst_56 : f32 to vector<8x128xf32>
    %130 = arith.cmpf oeq, %124, %129 : vector<8x128xf32>
    %cst_57 = arith.constant 3.000000e+00 : f32
    %131 = vector.broadcast %cst_57 : f32 to vector<8x128xf32>
    %132 = arith.cmpf oeq, %124, %131 : vector<8x128xf32>
    %133 = arith.select %132, %50, %62 : vector<8x128xi1>, vector<8x128xf32>
    %134 = arith.select %130, %57, %133 : vector<8x128xi1>, vector<8x128xf32>
    %135 = arith.select %128, %61, %134 : vector<8x128xi1>, vector<8x128xf32>
    %136 = arith.select %126, %44, %135 : vector<8x128xi1>, vector<8x128xf32>
    %c0_58 = arith.constant 0 : index
    %c640 = arith.constant 640 : index
    %137 = vector.load %arg9[%c0_58, %c640] : memref<8x1152xf32, #tpu.memory_space<vmem>>, vector<8x128xf32>
    tpu.vector_store %arg9[%c0_58, %c640], %136 {strides = array<i32>} : memref<8x1152xf32, #tpu.memory_space<vmem>>, vector<8x128xf32>,
    %cst_59 = arith.constant 5.000000e+00 : f32
    %138 = vector.broadcast %cst_59 : f32 to vector<8x128xf32>
    %139 = arith.subf %39, %138 : vector<8x128xf32>
    %cst_60 = arith.constant 0.000000e+00 : f32
    %140 = vector.broadcast %cst_60 : f32 to vector<8x128xf32>
    %141 = arith.cmpf oeq, %139, %140 : vector<8x128xf32>
    %cst_61 = arith.constant 1.000000e+00 : f32
    %142 = vector.broadcast %cst_61 : f32 to vector<8x128xf32>
    %143 = arith.cmpf oeq, %139, %142 : vector<8x128xf32>
    %cst_62 = arith.constant 2.000000e+00 : f32
    %144 = vector.broadcast %cst_62 : f32 to vector<8x128xf32>
    %145 = arith.cmpf oeq, %139, %144 : vector<8x128xf32>
    %cst_63 = arith.constant 3.000000e+00 : f32
    %146 = vector.broadcast %cst_63 : f32 to vector<8x128xf32>
    %147 = arith.cmpf oeq, %139, %146 : vector<8x128xf32>
    %148 = arith.select %147, %50, %62 : vector<8x128xi1>, vector<8x128xf32>
    %149 = arith.select %145, %57, %148 : vector<8x128xi1>, vector<8x128xf32>
    %150 = arith.select %143, %61, %149 : vector<8x128xi1>, vector<8x128xf32>
    %151 = arith.select %141, %44, %150 : vector<8x128xi1>, vector<8x128xf32>
    %c0_64 = arith.constant 0 : index
    %c768 = arith.constant 768 : index
    %152 = vector.load %arg9[%c0_64, %c768] : memref<8x1152xf32, #tpu.memory_space<vmem>>, vector<8x128xf32>
    tpu.vector_store %arg9[%c0_64, %c768], %151 {strides = array<i32>} : memref<8x1152xf32, #tpu.memory_space<vmem>>, vector<8x128xf32>,
    %cst_65 = arith.constant 6.000000e+00 : f32
    %153 = vector.broadcast %cst_65 : f32 to vector<8x128xf32>
    %154 = arith.subf %39, %153 : vector<8x128xf32>
    %cst_66 = arith.constant 0.000000e+00 : f32
    %155 = vector.broadcast %cst_66 : f32 to vector<8x128xf32>
    %156 = arith.cmpf oeq, %154, %155 : vector<8x128xf32>
    %cst_67 = arith.constant 1.000000e+00 : f32
    %157 = vector.broadcast %cst_67 : f32 to vector<8x128xf32>
    %158 = arith.cmpf oeq, %154, %157 : vector<8x128xf32>
    %cst_68 = arith.constant 2.000000e+00 : f32
    %159 = vector.broadcast %cst_68 : f32 to vector<8x128xf32>
    %160 = arith.cmpf oeq, %154, %159 : vector<8x128xf32>
    %cst_69 = arith.constant 3.000000e+00 : f32
    %161 = vector.broadcast %cst_69 : f32 to vector<8x128xf32>
    %162 = arith.cmpf oeq, %154, %161 : vector<8x128xf32>
    %163 = arith.select %162, %50, %62 : vector<8x128xi1>, vector<8x128xf32>
    %164 = arith.select %160, %57, %163 : vector<8x128xi1>, vector<8x128xf32>
    %165 = arith.select %158, %61, %164 : vector<8x128xi1>, vector<8x128xf32>
    %166 = arith.select %156, %44, %165 : vector<8x128xi1>, vector<8x128xf32>
    %c0_70 = arith.constant 0 : index
    %c896 = arith.constant 896 : index
    %167 = vector.load %arg9[%c0_70, %c896] : memref<8x1152xf32, #tpu.memory_space<vmem>>, vector<8x128xf32>
    tpu.vector_store %arg9[%c0_70, %c896], %166 {strides = array<i32>} : memref<8x1152xf32, #tpu.memory_space<vmem>>, vector<8x128xf32>,
    %cst_71 = arith.constant 7.000000e+00 : f32
    %168 = vector.broadcast %cst_71 : f32 to vector<8x128xf32>
    %169 = arith.subf %39, %168 : vector<8x128xf32>
    %cst_72 = arith.constant 0.000000e+00 : f32
    %170 = vector.broadcast %cst_72 : f32 to vector<8x128xf32>
    %171 = arith.cmpf oeq, %169, %170 : vector<8x128xf32>
    %cst_73 = arith.constant 1.000000e+00 : f32
    %172 = vector.broadcast %cst_73 : f32 to vector<8x128xf32>
    %173 = arith.cmpf oeq, %169, %172 : vector<8x128xf32>
    %cst_74 = arith.constant 2.000000e+00 : f32
    %174 = vector.broadcast %cst_74 : f32 to vector<8x128xf32>
    %175 = arith.cmpf oeq, %169, %174 : vector<8x128xf32>
    %cst_75 = arith.constant 3.000000e+00 : f32
    %176 = vector.broadcast %cst_75 : f32 to vector<8x128xf32>
    %177 = arith.cmpf oeq, %169, %176 : vector<8x128xf32>
    %178 = arith.select %177, %50, %62 : vector<8x128xi1>, vector<8x128xf32>
    %179 = arith.select %175, %57, %178 : vector<8x128xi1>, vector<8x128xf32>
    %180 = arith.select %173, %61, %179 : vector<8x128xi1>, vector<8x128xf32>
    %181 = arith.select %171, %44, %180 : vector<8x128xi1>, vector<8x128xf32>
    %c0_76 = arith.constant 0 : index
    %c1024 = arith.constant 1024 : index
    %182 = vector.load %arg9[%c0_76, %c1024] : memref<8x1152xf32, #tpu.memory_space<vmem>>, vector<8x128xf32>
    tpu.vector_store %arg9[%c0_76, %c1024], %181 {strides = array<i32>} : memref<8x1152xf32, #tpu.memory_space<vmem>>, vector<8x128xf32>,
    %c0_77 = arith.constant 0 : index
    %c0_78 = arith.constant 0 : index
    %183 = vector.load %arg9[%c0_77, %c0_78] : memref<8x1152xf32, #tpu.memory_space<vmem>>, vector<8x1152xf32>
    %c0_79 = arith.constant 0 : index
    %c0_80 = arith.constant 0 : index
    %184 = vector.load %arg3[%c0_79, %c0_80] : memref<1152x128xf32, #tpu.memory_space<vmem>>, vector<1152x128xf32>
    %cst_81 = arith.constant dense<0.000000e+00> : vector<8x128xf32>
    %185 = tpu.matmul %183, %184, %cst_81 {dimension_numbers = #tpu.dot_dimension_numbers<[1], [0], [0], [1], [0, 0, 1, 1], [], []>} : vector<8x1152xf32>, vector<1152x128xf32>, vector<8x128xf32> -> vector<8x128xf32>
    %c0_82 = arith.constant 0 : index
    %c0_83 = arith.constant 0 : index
    %186 = vector.load %arg8[%c0_82, %c0_83] : memref<8x128xf32, #tpu.memory_space<vmem>>, vector<8x128xf32>
    tpu.vector_store %arg8[%c0_82, %c0_83], %185 {strides = array<i32>} : memref<8x128xf32, #tpu.memory_space<vmem>>, vector<8x128xf32>,
    %c0_84 = arith.constant 0 : index
    %c0_85 = arith.constant 0 : index
    %187 = vector.load %arg8[%c0_84, %c0_85] : memref<8x128xf32, #tpu.memory_space<vmem>>, vector<8x128xf32>
    %cst_86 = arith.constant 0.000000e+00 : f32
    %188 = vector.broadcast %cst_86 : f32 to vector<8x128xf32>
    %189 = arith.subf %188, %187 : vector<8x128xf32>
    %190 = math.exp %189 : vector<8x128xf32>
    %cst_87 = arith.constant 1.000000e+00 : f32
    %191 = vector.broadcast %cst_87 : f32 to vector<8x128xf32>
    %192 = arith.addf %191, %190 : vector<8x128xf32>
    %193 = tpu.reciprocal %192 : vector<8x128xf32> -> vector<8x128xf32>
    %194 = arith.mulf %187, %193 : vector<8x128xf32>
    %c0_88 = arith.constant 0 : index
    %c0_89 = arith.constant 0 : index
    %195 = vector.load %arg9[%c0_88, %c0_89] : memref<8x1152xf32, #tpu.memory_space<vmem>>, vector<8x128xf32>
    tpu.vector_store %arg9[%c0_88, %c0_89], %194 {strides = array<i32>} : memref<8x1152xf32, #tpu.memory_space<vmem>>, vector<8x128xf32>,
    %cst_90 = arith.constant -2.200000e+00 : f32
    %196 = vector.broadcast %cst_90 : f32 to vector<8x128xf32>
    %197 = arith.subf %187, %196 : vector<8x128xf32>
    %cst_91 = arith.constant 2.500000e+00 : f32
    %198 = vector.broadcast %cst_91 : f32 to vector<8x128xf32>
    %199 = arith.mulf %197, %198 : vector<8x128xf32>
    %200 = math.floor %199 : vector<8x128xf32>
    %201 = arith.subf %199, %200 : vector<8x128xf32>
    %202 = arith.mulf %201, %201 : vector<8x128xf32>
    %203 = arith.mulf %202, %201 : vector<8x128xf32>
    %cst_92 = arith.constant 0.166666672 : f32
    %204 = vector.broadcast %cst_92 : f32 to vector<8x128xf32>
    %205 = arith.mulf %203, %204 : vector<8x128xf32>
    %cst_93 = arith.constant 1.000000e+00 : f32
    %206 = vector.broadcast %cst_93 : f32 to vector<8x128xf32>
    %207 = arith.subf %206, %201 : vector<8x128xf32>
    %208 = arith.mulf %207, %207 : vector<8x128xf32>
    %209 = arith.mulf %208, %207 : vector<8x128xf32>
    %cst_94 = arith.constant 0.166666672 : f32
    %210 = vector.broadcast %cst_94 : f32 to vector<8x128xf32>
    %211 = arith.mulf %209, %210 : vector<8x128xf32>
    %cst_95 = arith.constant 5.000000e-01 : f32
    %212 = vector.broadcast %cst_95 : f32 to vector<8x128xf32>
    %213 = arith.mulf %212, %201 : vector<8x128xf32>
    %cst_96 = arith.constant 1.000000e+00 : f32
    %214 = vector.broadcast %cst_96 : f32 to vector<8x128xf32>
    %215 = arith.subf %213, %214 : vector<8x128xf32>
    %216 = arith.mulf %202, %215 : vector<8x128xf32>
    %cst_97 = arith.constant 0.666666686 : f32
    %217 = vector.broadcast %cst_97 : f32 to vector<8x128xf32>
    %218 = arith.addf %217, %216 : vector<8x128xf32>
    %219 = arith.addf %211, %218 : vector<8x128xf32>
    %220 = arith.addf %219, %205 : vector<8x128xf32>
    %cst_98 = arith.constant 1.000000e+00 : f32
    %221 = vector.broadcast %cst_98 : f32 to vector<8x128xf32>
    %222 = arith.subf %221, %220 : vector<8x128xf32>
    %cst_99 = arith.constant 0.000000e+00 : f32
    %223 = vector.broadcast %cst_99 : f32 to vector<8x128xf32>
    %cst_100 = arith.constant 0.000000e+00 : f32
    %224 = vector.broadcast %cst_100 : f32 to vector<8x128xf32>
    %225 = arith.subf %200, %224 : vector<8x128xf32>
    %cst_101 = arith.constant 0.000000e+00 : f32
    %226 = vector.broadcast %cst_101 : f32 to vector<8x128xf32>
    %227 = arith.cmpf oeq, %225, %226 : vector<8x128xf32>
    %cst_102 = arith.constant 1.000000e+00 : f32
    %228 = vector.broadcast %cst_102 : f32 to vector<8x128xf32>
    %229 = arith.cmpf oeq, %225, %228 : vector<8x128xf32>
    %cst_103 = arith.constant 2.000000e+00 : f32
    %230 = vector.broadcast %cst_103 : f32 to vector<8x128xf32>
    %231 = arith.cmpf oeq, %225, %230 : vector<8x128xf32>
    %cst_104 = arith.constant 3.000000e+00 : f32
    %232 = vector.broadcast %cst_104 : f32 to vector<8x128xf32>
    %233 = arith.cmpf oeq, %225, %232 : vector<8x128xf32>
    %234 = arith.select %233, %211, %223 : vector<8x128xi1>, vector<8x128xf32>
    %235 = arith.select %231, %218, %234 : vector<8x128xi1>, vector<8x128xf32>
    %236 = arith.select %229, %222, %235 : vector<8x128xi1>, vector<8x128xf32>
    %237 = arith.select %227, %205, %236 : vector<8x128xi1>, vector<8x128xf32>
    %c0_105 = arith.constant 0 : index
    %c128_106 = arith.constant 128 : index
    %238 = vector.load %arg9[%c0_105, %c128_106] : memref<8x1152xf32, #tpu.memory_space<vmem>>, vector<8x128xf32>
    tpu.vector_store %arg9[%c0_105, %c128_106], %237 {strides = array<i32>} : memref<8x1152xf32, #tpu.memory_space<vmem>>, vector<8x128xf32>,
    %cst_107 = arith.constant 1.000000e+00 : f32
    %239 = vector.broadcast %cst_107 : f32 to vector<8x128xf32>
    %240 = arith.subf %200, %239 : vector<8x128xf32>
    %cst_108 = arith.constant 0.000000e+00 : f32
    %241 = vector.broadcast %cst_108 : f32 to vector<8x128xf32>
    %242 = arith.cmpf oeq, %240, %241 : vector<8x128xf32>
    %cst_109 = arith.constant 1.000000e+00 : f32
    %243 = vector.broadcast %cst_109 : f32 to vector<8x128xf32>
    %244 = arith.cmpf oeq, %240, %243 : vector<8x128xf32>
    %cst_110 = arith.constant 2.000000e+00 : f32
    %245 = vector.broadcast %cst_110 : f32 to vector<8x128xf32>
    %246 = arith.cmpf oeq, %240, %245 : vector<8x128xf32>
    %cst_111 = arith.constant 3.000000e+00 : f32
    %247 = vector.broadcast %cst_111 : f32 to vector<8x128xf32>
    %248 = arith.cmpf oeq, %240, %247 : vector<8x128xf32>
    %249 = arith.select %248, %211, %223 : vector<8x128xi1>, vector<8x128xf32>
    %250 = arith.select %246, %218, %249 : vector<8x128xi1>, vector<8x128xf32>
    %251 = arith.select %244, %222, %250 : vector<8x128xi1>, vector<8x128xf32>
    %252 = arith.select %242, %205, %251 : vector<8x128xi1>, vector<8x128xf32>
    %c0_112 = arith.constant 0 : index
    %c256_113 = arith.constant 256 : index
    %253 = vector.load %arg9[%c0_112, %c256_113] : memref<8x1152xf32, #tpu.memory_space<vmem>>, vector<8x128xf32>
    tpu.vector_store %arg9[%c0_112, %c256_113], %252 {strides = array<i32>} : memref<8x1152xf32, #tpu.memory_space<vmem>>, vector<8x128xf32>,
    %cst_114 = arith.constant 2.000000e+00 : f32
    %254 = vector.broadcast %cst_114 : f32 to vector<8x128xf32>
    %255 = arith.subf %200, %254 : vector<8x128xf32>
    %cst_115 = arith.constant 0.000000e+00 : f32
    %256 = vector.broadcast %cst_115 : f32 to vector<8x128xf32>
    %257 = arith.cmpf oeq, %255, %256 : vector<8x128xf32>
    %cst_116 = arith.constant 1.000000e+00 : f32
    %258 = vector.broadcast %cst_116 : f32 to vector<8x128xf32>
    %259 = arith.cmpf oeq, %255, %258 : vector<8x128xf32>
    %cst_117 = arith.constant 2.000000e+00 : f32
    %260 = vector.broadcast %cst_117 : f32 to vector<8x128xf32>
    %261 = arith.cmpf oeq, %255, %260 : vector<8x128xf32>
    %cst_118 = arith.constant 3.000000e+00 : f32
    %262 = vector.broadcast %cst_118 : f32 to vector<8x128xf32>
    %263 = arith.cmpf oeq, %255, %262 : vector<8x128xf32>
    %264 = arith.select %263, %211, %223 : vector<8x128xi1>, vector<8x128xf32>
    %265 = arith.select %261, %218, %264 : vector<8x128xi1>, vector<8x128xf32>
    %266 = arith.select %259, %222, %265 : vector<8x128xi1>, vector<8x128xf32>
    %267 = arith.select %257, %205, %266 : vector<8x128xi1>, vector<8x128xf32>
    %c0_119 = arith.constant 0 : index
    %c384_120 = arith.constant 384 : index
    %268 = vector.load %arg9[%c0_119, %c384_120] : memref<8x1152xf32, #tpu.memory_space<vmem>>, vector<8x128xf32>
    tpu.vector_store %arg9[%c0_119, %c384_120], %267 {strides = array<i32>} : memref<8x1152xf32, #tpu.memory_space<vmem>>, vector<8x128xf32>,
    %cst_121 = arith.constant 3.000000e+00 : f32
    %269 = vector.broadcast %cst_121 : f32 to vector<8x128xf32>
    %270 = arith.subf %200, %269 : vector<8x128xf32>
    %cst_122 = arith.constant 0.000000e+00 : f32
    %271 = vector.broadcast %cst_122 : f32 to vector<8x128xf32>
    %272 = arith.cmpf oeq, %270, %271 : vector<8x128xf32>
    %cst_123 = arith.constant 1.000000e+00 : f32
    %273 = vector.broadcast %cst_123 : f32 to vector<8x128xf32>
    %274 = arith.cmpf oeq, %270, %273 : vector<8x128xf32>
    %cst_124 = arith.constant 2.000000e+00 : f32
    %275 = vector.broadcast %cst_124 : f32 to vector<8x128xf32>
    %276 = arith.cmpf oeq, %270, %275 : vector<8x128xf32>
    %cst_125 = arith.constant 3.000000e+00 : f32
    %277 = vector.broadcast %cst_125 : f32 to vector<8x128xf32>
    %278 = arith.cmpf oeq, %270, %277 : vector<8x128xf32>
    %279 = arith.select %278, %211, %223 : vector<8x128xi1>, vector<8x128xf32>
    %280 = arith.select %276, %218, %279 : vector<8x128xi1>, vector<8x128xf32>
    %281 = arith.select %274, %222, %280 : vector<8x128xi1>, vector<8x128xf32>
    %282 = arith.select %272, %205, %281 : vector<8x128xi1>, vector<8x128xf32>
    %c0_126 = arith.constant 0 : index
    %c512_127 = arith.constant 512 : index
    %283 = vector.load %arg9[%c0_126, %c512_127] : memref<8x1152xf32, #tpu.memory_space<vmem>>, vector<8x128xf32>
    tpu.vector_store %arg9[%c0_126, %c512_127], %282 {strides = array<i32>} : memref<8x1152xf32, #tpu.memory_space<vmem>>, vector<8x128xf32>,
    %cst_128 = arith.constant 4.000000e+00 : f32
    %284 = vector.broadcast %cst_128 : f32 to vector<8x128xf32>
    %285 = arith.subf %200, %284 : vector<8x128xf32>
    %cst_129 = arith.constant 0.000000e+00 : f32
    %286 = vector.broadcast %cst_129 : f32 to vector<8x128xf32>
    %287 = arith.cmpf oeq, %285, %286 : vector<8x128xf32>
    %cst_130 = arith.constant 1.000000e+00 : f32
    %288 = vector.broadcast %cst_130 : f32 to vector<8x128xf32>
    %289 = arith.cmpf oeq, %285, %288 : vector<8x128xf32>
    %cst_131 = arith.constant 2.000000e+00 : f32
    %290 = vector.broadcast %cst_131 : f32 to vector<8x128xf32>
    %291 = arith.cmpf oeq, %285, %290 : vector<8x128xf32>
    %cst_132 = arith.constant 3.000000e+00 : f32
    %292 = vector.broadcast %cst_132 : f32 to vector<8x128xf32>
    %293 = arith.cmpf oeq, %285, %292 : vector<8x128xf32>
    %294 = arith.select %293, %211, %223 : vector<8x128xi1>, vector<8x128xf32>
    %295 = arith.select %291, %218, %294 : vector<8x128xi1>, vector<8x128xf32>
    %296 = arith.select %289, %222, %295 : vector<8x128xi1>, vector<8x128xf32>
    %297 = arith.select %287, %205, %296 : vector<8x128xi1>, vector<8x128xf32>
    %c0_133 = arith.constant 0 : index
    %c640_134 = arith.constant 640 : index
    %298 = vector.load %arg9[%c0_133, %c640_134] : memref<8x1152xf32, #tpu.memory_space<vmem>>, vector<8x128xf32>
    tpu.vector_store %arg9[%c0_133, %c640_134], %297 {strides = array<i32>} : memref<8x1152xf32, #tpu.memory_space<vmem>>, vector<8x128xf32>,
    %cst_135 = arith.constant 5.000000e+00 : f32
    %299 = vector.broadcast %cst_135 : f32 to vector<8x128xf32>
    %300 = arith.subf %200, %299 : vector<8x128xf32>
    %cst_136 = arith.constant 0.000000e+00 : f32
    %301 = vector.broadcast %cst_136 : f32 to vector<8x128xf32>
    %302 = arith.cmpf oeq, %300, %301 : vector<8x128xf32>
    %cst_137 = arith.constant 1.000000e+00 : f32
    %303 = vector.broadcast %cst_137 : f32 to vector<8x128xf32>
    %304 = arith.cmpf oeq, %300, %303 : vector<8x128xf32>
    %cst_138 = arith.constant 2.000000e+00 : f32
    %305 = vector.broadcast %cst_138 : f32 to vector<8x128xf32>
    %306 = arith.cmpf oeq, %300, %305 : vector<8x128xf32>
    %cst_139 = arith.constant 3.000000e+00 : f32
    %307 = vector.broadcast %cst_139 : f32 to vector<8x128xf32>
    %308 = arith.cmpf oeq, %300, %307 : vector<8x128xf32>
    %309 = arith.select %308, %211, %223 : vector<8x128xi1>, vector<8x128xf32>
    %310 = arith.select %306, %218, %309 : vector<8x128xi1>, vector<8x128xf32>
    %311 = arith.select %304, %222, %310 : vector<8x128xi1>, vector<8x128xf32>
    %312 = arith.select %302, %205, %311 : vector<8x128xi1>, vector<8x128xf32>
    %c0_140 = arith.constant 0 : index
    %c768_141 = arith.constant 768 : index
    %313 = vector.load %arg9[%c0_140, %c768_141] : memref<8x1152xf32, #tpu.memory_space<vmem>>, vector<8x128xf32>
    tpu.vector_store %arg9[%c0_140, %c768_141], %312 {strides = array<i32>} : memref<8x1152xf32, #tpu.memory_space<vmem>>, vector<8x128xf32>,
    %cst_142 = arith.constant 6.000000e+00 : f32
    %314 = vector.broadcast %cst_142 : f32 to vector<8x128xf32>
    %315 = arith.subf %200, %314 : vector<8x128xf32>
    %cst_143 = arith.constant 0.000000e+00 : f32
    %316 = vector.broadcast %cst_143 : f32 to vector<8x128xf32>
    %317 = arith.cmpf oeq, %315, %316 : vector<8x128xf32>
    %cst_144 = arith.constant 1.000000e+00 : f32
    %318 = vector.broadcast %cst_144 : f32 to vector<8x128xf32>
    %319 = arith.cmpf oeq, %315, %318 : vector<8x128xf32>
    %cst_145 = arith.constant 2.000000e+00 : f32
    %320 = vector.broadcast %cst_145 : f32 to vector<8x128xf32>
    %321 = arith.cmpf oeq, %315, %320 : vector<8x128xf32>
    %cst_146 = arith.constant 3.000000e+00 : f32
    %322 = vector.broadcast %cst_146 : f32 to vector<8x128xf32>
    %323 = arith.cmpf oeq, %315, %322 : vector<8x128xf32>
    %324 = arith.select %323, %211, %223 : vector<8x128xi1>, vector<8x128xf32>
    %325 = arith.select %321, %218, %324 : vector<8x128xi1>, vector<8x128xf32>
    %326 = arith.select %319, %222, %325 : vector<8x128xi1>, vector<8x128xf32>
    %327 = arith.select %317, %205, %326 : vector<8x128xi1>, vector<8x128xf32>
    %c0_147 = arith.constant 0 : index
    %c896_148 = arith.constant 896 : index
    %328 = vector.load %arg9[%c0_147, %c896_148] : memref<8x1152xf32, #tpu.memory_space<vmem>>, vector<8x128xf32>
    tpu.vector_store %arg9[%c0_147, %c896_148], %327 {strides = array<i32>} : memref<8x1152xf32, #tpu.memory_space<vmem>>, vector<8x128xf32>,
    %cst_149 = arith.constant 7.000000e+00 : f32
    %329 = vector.broadcast %cst_149 : f32 to vector<8x128xf32>
    %330 = arith.subf %200, %329 : vector<8x128xf32>
    %cst_150 = arith.constant 0.000000e+00 : f32
    %331 = vector.broadcast %cst_150 : f32 to vector<8x128xf32>
    %332 = arith.cmpf oeq, %330, %331 : vector<8x128xf32>
    %cst_151 = arith.constant 1.000000e+00 : f32
    %333 = vector.broadcast %cst_151 : f32 to vector<8x128xf32>
    %334 = arith.cmpf oeq, %330, %333 : vector<8x128xf32>
    %cst_152 = arith.constant 2.000000e+00 : f32
    %335 = vector.broadcast %cst_152 : f32 to vector<8x128xf32>
    %336 = arith.cmpf oeq, %330, %335 : vector<8x128xf32>
    %cst_153 = arith.constant 3.000000e+00 : f32
    %337 = vector.broadcast %cst_153 : f32 to vector<8x128xf32>
    %338 = arith.cmpf oeq, %330, %337 : vector<8x128xf32>
    %339 = arith.select %338, %211, %223 : vector<8x128xi1>, vector<8x128xf32>
    %340 = arith.select %336, %218, %339 : vector<8x128xi1>, vector<8x128xf32>
    %341 = arith.select %334, %222, %340 : vector<8x128xi1>, vector<8x128xf32>
    %342 = arith.select %332, %205, %341 : vector<8x128xi1>, vector<8x128xf32>
    %c0_154 = arith.constant 0 : index
    %c1024_155 = arith.constant 1024 : index
    %343 = vector.load %arg9[%c0_154, %c1024_155] : memref<8x1152xf32, #tpu.memory_space<vmem>>, vector<8x128xf32>
    tpu.vector_store %arg9[%c0_154, %c1024_155], %342 {strides = array<i32>} : memref<8x1152xf32, #tpu.memory_space<vmem>>, vector<8x128xf32>,
    %c0_156 = arith.constant 0 : index
    %c0_157 = arith.constant 0 : index
    %344 = vector.load %arg9[%c0_156, %c0_157] : memref<8x1152xf32, #tpu.memory_space<vmem>>, vector<8x1152xf32>
    %c0_158 = arith.constant 0 : index
    %c0_159 = arith.constant 0 : index
    %345 = vector.load %arg4[%c0_158, %c0_159] : memref<1152x128xf32, #tpu.memory_space<vmem>>, vector<1152x128xf32>
    %cst_160 = arith.constant dense<0.000000e+00> : vector<8x128xf32>
    %346 = tpu.matmul %344, %345, %cst_160 {dimension_numbers = #tpu.dot_dimension_numbers<[1], [0], [0], [1], [0, 0, 1, 1], [], []>} : vector<8x1152xf32>, vector<1152x128xf32>, vector<8x128xf32> -> vector<8x128xf32>
    %c0_161 = arith.constant 0 : index
    %c0_162 = arith.constant 0 : index
    %347 = vector.load %arg5[%c0_161, %c0_162] : memref<128x128xf32, #tpu.memory_space<vmem>>, vector<128x128xf32>
    %cst_163 = arith.constant dense<0.000000e+00> : vector<8x128xf32>
    %348 = tpu.matmul %346, %347, %cst_163 {dimension_numbers = #tpu.dot_dimension_numbers<[1], [0], [0], [1], [0, 0, 1, 1], [], []>} : vector<8x128xf32>, vector<128x128xf32>, vector<8x128xf32> -> vector<8x128xf32>
    %c0_164 = arith.constant 0 : index
    %c0_165 = arith.constant 0 : index
    %349 = vector.load %arg6[%c0_164, %c0_165] : memref<1x128xf32, #tpu.memory_space<vmem>>, vector<1x128xf32>
    %350 = vector.broadcast %349 : vector<1x128xf32> to vector<8x128xf32>
    %351 = arith.addf %348, %350 : vector<8x128xf32>
    %c0_166 = arith.constant 0 : index
    %c0_167 = arith.constant 0 : index
    %352 = vector.load %arg7[%c0_166, %c0_167] : memref<8x128xf32, #tpu.memory_space<vmem>>, vector<8x128xf32>
    tpu.vector_store %arg7[%c0_166, %c0_167], %351 {strides = array<i32>} : memref<8x128xf32, #tpu.memory_space<vmem>>, vector<8x128xf32>,
    return
  }
  func.func @transform_0(%arg0: i32) -> (i32, i32, i32) {
    %c0_i32 = arith.constant 0 : i32
    %c0_i32_0 = arith.constant 0 : i32
    %c0_i32_1 = arith.constant 0 : i32
    return %arg0, %c0_i32, %c0_i32_0 : i32, i32, i32
  }
  func.func @transform_1(%arg0: i32) -> (i32, i32) {
    %c0_i32 = arith.constant 0 : i32
    %c0_i32_0 = arith.constant 0 : i32
    %c0_i32_1 = arith.constant 0 : i32
    return %c0_i32, %c0_i32_0 : i32, i32
  }
  func.func @transform_2(%arg0: i32) -> (i32, i32) {
    %c0_i32 = arith.constant 0 : i32
    %c0_i32_0 = arith.constant 0 : i32
    %c0_i32_1 = arith.constant 0 : i32
    return %c0_i32, %c0_i32_0 : i32, i32
  }
  func.func @transform_3(%arg0: i32) -> (i32, i32) {
    %c0_i32 = arith.constant 0 : i32
    %c0_i32_0 = arith.constant 0 : i32
    %c0_i32_1 = arith.constant 0 : i32
    return %c0_i32, %c0_i32_0 : i32, i32
  }
  func.func @transform_4(%arg0: i32) -> (i32, i32) {
    %c0_i32 = arith.constant 0 : i32
    %c0_i32_0 = arith.constant 0 : i32
    %c0_i32_1 = arith.constant 0 : i32
    return %c0_i32, %c0_i32_0 : i32, i32
  }
  func.func @transform_5(%arg0: i32) -> (i32, i32) {
    %c0_i32 = arith.constant 0 : i32
    %c0_i32_0 = arith.constant 0 : i32
    %c0_i32_1 = arith.constant 0 : i32
    return %c0_i32, %c0_i32_0 : i32, i32
  }
  func.func @transform_6(%arg0: i32) -> (i32, i32) {
    %c0_i32 = arith.constant 0 : i32
    %c0_i32_0 = arith.constant 0 : i32
    return %arg0, %c0_i32 : i32, i32
  }
}

</mosaic_0001>

<llo_original>
// kernel: tpu_custom_call.1
$region0: #{tpu_custom_call.1}
  #allocation0 [shape = 'u32[]', space=smem, size = 0x4, offset = 0x4, fixed_abs, tag = 'smem constant byte address 0x4 - core index']
  #allocation1 [shape = 'u32[144,128]{1,0:T(1,128)}', space=vmem, size = 0x12000, scoped, tag = 'internal scratch']
  #allocation2 [shape = 'f32[8,128]{1,0:T(8,128)}', space=vmem, size = 0x1000, scoped, tag = 'scratch operand']
  #allocation3 [shape = 'f32[8,1152]{1,0:T(8,128)}', space=vmem, size = 0x9000, scoped, tag = 'scratch operand']
  %s0 = inlined_call_operand.vmem [shape: f32[8,10,32], index: 0, kind: input, shape index: {}]
  %s1 = inlined_call_operand.vmem [shape: f32[1,32], index: 1, kind: input, shape index: {}]
  %s2 = inlined_call_operand.hbm [shape: f32[1152,128], index: 2, kind: input, shape index: {}]
  %s3 = inlined_call_operand.hbm [shape: f32[1152,128], index: 3, kind: input, shape index: {}]
  %s4 = inlined_call_operand.vmem [shape: f32[128,128], index: 4, kind: input, shape index: {}]
  %s5 = inlined_call_operand.vmem [shape: f32[1,128], index: 5, kind: input, shape index: {}]
  %s6 = inlined_call_operand.hbm [shape: f32[8,128], index: 6, kind: output, shape index: {}]
  %s7 = sld [smem:[#allocation0]]
  $region42: #{tpu_custom_call.1} parent=0
    _
  %s9 = ssub.s32 1, %s7
  %s10 = scalar_select 0, %s9, %s7
  $region1: #{tpu_custom_call.1} parent=0
    #allocation4 [shape = 'u8[589824]{0}', space=vmem, size = 0x90000, scoped, tag = 'input window, operand 2, single buffered']
    #allocation5 [shape = 's32[1]{0}', space=sflag, size = 0x4, scoped, tag = 'scoped memory for tpu_custom_call.1']
    #allocation6 [shape = 's32[1]{0}', space=sflag, size = 0x4, scoped, tag = 'scoped memory for tpu_custom_call.1']
    #allocation7 [shape = 'u8[589824]{0}', space=vmem, size = 0x90000, scoped, tag = 'input window, operand 3, single buffered']
    #allocation8 [shape = 's32[1]{0}', space=sflag, size = 0x4, scoped, tag = 'scoped memory for tpu_custom_call.1']
    #allocation9 [shape = 'u8[4096]{0}', space=vmem, size = 0x1000, scoped, tag = 'output window, operand 0, single buffered']
    %11 = vsyncpa [#allocation5], 0
    %12 = vsyncpa [#allocation8], 0
    %13 = vsyncpa [#allocation6], 0
    // Predicated region
    $region2: #{tpu_custom_call.1} parent=1 // pred_check
      _
    $region3: #{tpu_custom_call.1} parent=1 // pred_check_branch
      %15 = sbr.rel (0) target = $region5
    $region4: #{tpu_custom_call.1} parent=1 // pred_region
      _
    $region5: #{tpu_custom_call.1} parent=1 // pred_fallthru
      _
    // Predicated region
    $region6: #{tpu_custom_call.1} parent=1 // pred_check
      _
    $region7: #{tpu_custom_call.1} parent=1 // pred_check_branch
      %17 = sbr.rel (0) target = $region9
    $region8: #{tpu_custom_call.1} parent=1 // pred_region
      _
    $region9: #{tpu_custom_call.1} parent=1 // pred_fallthru
      _
    // Predicated region
    $region10: #{tpu_custom_call.1} parent=1 // pred_check
      _
    $region11: #{tpu_custom_call.1} parent=1 // pred_check_branch
      %19 = sbr.rel (0) target = $region13
    $region12: #{tpu_custom_call.1} parent=1 // pred_region
      %s21 = ssub.s32 18432, 18432
      %22 = vsyncadd [#allocation5], %s21
      %s23 = sshll.u32 [#allocation4], 4
      %s24 = int_to_ptr.vmem [resolvable:$true] %s23
      %29 = dma.hbm_to_vmem [thread:$0]  %s2, 18432, %s24, [#allocation5], 128, 128, 8
    $region13: #{tpu_custom_call.1} parent=1 // pred_fallthru
      _
    // Predicated region
    $region14: #{tpu_custom_call.1} parent=1 // pred_check
      _
    $region15: #{tpu_custom_call.1} parent=1 // pred_check_branch
      %31 = sbr.rel (0) target = $region17
    $region16: #{tpu_custom_call.1} parent=1 // pred_region
      %s33 = ssub.s32 18432, 18432
      %34 = vsyncadd [#allocation8], %s33
      %s35 = sshll.u32 [#allocation7], 4
      %s36 = int_to_ptr.vmem [resolvable:$true] %s35
      %41 = dma.hbm_to_vmem [thread:$0]  %s3, 18432, %s36, [#allocation8], 128, 128, 8
    $region17: #{tpu_custom_call.1} parent=1 // pred_fallthru
      _
    // Predicated region
    $region18: #{tpu_custom_call.1} parent=1 // pred_check
      _
    $region19: #{tpu_custom_call.1} parent=1 // pred_check_branch
      %43 = sbr.rel (0) target = $region21
    $region20: #{tpu_custom_call.1} parent=1 // pred_region
      _
    $region21: #{tpu_custom_call.1} parent=1 // pred_fallthru
      _
    // Predicated region
    $region22: #{tpu_custom_call.1} parent=1 // pred_check
      _
    $region23: #{tpu_custom_call.1} parent=1 // pred_check_branch
      %45 = sbr.rel (0) target = $region25
    $region24: #{tpu_custom_call.1} parent=1 // pred_region
      _
    $region25: #{tpu_custom_call.1} parent=1 // pred_fallthru
      _
    // Predicated region
    $region26: #{tpu_custom_call.1} parent=1 // pred_check
      _
    $region27: #{tpu_custom_call.1} parent=1 // pred_check_branch
      %47 = sbr.rel (0) target = $region29
    $region28: #{tpu_custom_call.1} parent=1 // pred_region
      %48 = dma.done [#allocation5], 18432
    $region29: #{tpu_custom_call.1} parent=1 // pred_fallthru
      _
    // Predicated region
    $region30: #{tpu_custom_call.1} parent=1 // pred_check
      _
    $region31: #{tpu_custom_call.1} parent=1 // pred_check_branch
      %50 = sbr.rel (0) target = $region33
    $region32: #{tpu_custom_call.1} parent=1 // pred_region
      %51 = dma.done [#allocation8], 18432
    $region33: #{tpu_custom_call.1} parent=1 // pred_fallthru
      _
    %v52 = vld [vmem:[%s0] sm:$0xff]
    %v53 = vld [vmem:[%s0 + $0x8] sm:$0x3]
    %v54 = vld [vmem:[%s0 + $0x10] sm:$0xff]
    %v55 = vld [vmem:[%s0 + $0x18] sm:$0x3]
    %v56 = vld [vmem:[%s0 + $0x20] sm:$0xff]
    %v57 = vld [vmem:[%s0 + $0x28] sm:$0x3]
    %v58 = vld [vmem:[%s0 + $0x30] sm:$0xff]
    %v59 = vld [vmem:[%s0 + $0x38] sm:$0x3]
    %v60 = vld [vmem:[%s0 + $0x40] sm:$0xff]
    %v61 = vld [vmem:[%s0 + $0x48] sm:$0x3]
    %v62 = vld [vmem:[%s0 + $0x50] sm:$0xff]
    %v63 = vld [vmem:[%s0 + $0x58] sm:$0x3]
    %v64 = vld [vmem:[%s0 + $0x60] sm:$0xff]
    %v65 = vld [vmem:[%s0 + $0x68] sm:$0x3]
    %v66 = vld [vmem:[%s0 + $0x70] sm:$0xff]
    %v67 = vld [vmem:[%s0 + $0x78] sm:$0x3]
    %v68 = vld [vmem:[%s1] sm:$0x1]
    %v70 = vlaneseq
    %v71 = vshrl.u32 %v70, 7
    %v72 = vsub.s32 0, %v71
    %v73 = vrot.slane %v68, %v72
    %v75 = vmul.f32 %v52, %v73
    %v76 = vmul.f32 %v53, %v73
    %v77 = vmul.f32 %v54, %v73
    %v78 = vmul.f32 %v55, %v73
    %v79 = vmul.f32 %v56, %v73
    %v80 = vmul.f32 %v57, %v73
    %v81 = vmul.f32 %v58, %v73
    %v82 = vmul.f32 %v59, %v73
    %v83 = vmul.f32 %v60, %v73
    %v84 = vmul.f32 %v61, %v73
    %v85 = vmul.f32 %v62, %v73
    %v86 = vmul.f32 %v63, %v73
    %v87 = vmul.f32 %v64, %v73
    %v88 = vmul.f32 %v65, %v73
    %v89 = vmul.f32 %v66, %v73
    %v90 = vmul.f32 %v67, %v73
    %vm91 = vcmask 261120
    %v92 = vsel %vm91, %v75, 0.0
    %93 = vadd.xlane.f32.xlu0 %v92
    %v94 = vpop.xlane.xlu0 %93
    %vm95 = vcmask 254976
    %v96 = vsel %vm95, %v76, 0.0
    %97 = vadd.xlane.f32.xlu0 %v96
    %v98 = vpop.xlane.xlu0 %97
    %v99 = vsel %vm91, %v77, 0.0
    %100 = vadd.xlane.f32.xlu0 %v99
    %v101 = vpop.xlane.xlu0 %100
    %v102 = vsel %vm95, %v78, 0.0
    %103 = vadd.xlane.f32.xlu0 %v102
    %v104 = vpop.xlane.xlu0 %103
    %v105 = vsel %vm91, %v79, 0.0
    %106 = vadd.xlane.f32.xlu0 %v105
    %v107 = vpop.xlane.xlu0 %106
    %v108 = vsel %vm95, %v80, 0.0
    %109 = vadd.xlane.f32.xlu0 %v108
    %v110 = vpop.xlane.xlu0 %109
    %v111 = vsel %vm91, %v81, 0.0
    %112 = vadd.xlane.f32.xlu0 %v111
    %v113 = vpop.xlane.xlu0 %112
    %v114 = vsel %vm95, %v82, 0.0
    %115 = vadd.xlane.f32.xlu0 %v114
    %v116 = vpop.xlane.xlu0 %115
    %v117 = vsel %vm91, %v83, 0.0
    %118 = vadd.xlane.f32.xlu0 %v117
    %v119 = vpop.xlane.xlu0 %118
    %v120 = vsel %vm95, %v84, 0.0
    %121 = vadd.xlane.f32.xlu0 %v120
    %v122 = vpop.xlane.xlu0 %121
    %v123 = vsel %vm91, %v85, 0.0
    %124 = vadd.xlane.f32.xlu0 %v123
    %v125 = vpop.xlane.xlu0 %124
    %v126 = vsel %vm95, %v86, 0.0
    %127 = vadd.xlane.f32.xlu0 %v126
    %v128 = vpop.xlane.xlu0 %127
    %v129 = vsel %vm91, %v87, 0.0
    %130 = vadd.xlane.f32.xlu0 %v129
    %v131 = vpop.xlane.xlu0 %130
    %v132 = vsel %vm95, %v88, 0.0
    %133 = vadd.xlane.f32.xlu0 %v132
    %v134 = vpop.xlane.xlu0 %133
    %v135 = vsel %vm91, %v89, 0.0
    %136 = vadd.xlane.f32.xlu0 %v135
    %v137 = vpop.xlane.xlu0 %136
    %v138 = vsel %vm95, %v90, 0.0
    %139 = vadd.xlane.f32.xlu0 %v138
    %v140 = vpop.xlane.xlu0 %139
    %v157 = vlaneseq
    %v158 = vand.u32 %v157, 127
    %v159 = vlaneseq
    %v160 = vshrl.u32 %v159, 7
    %v161 = vsub.s32 %v158, %v160
    %v162 = vrot.slane %v94, %v161
    %v163 = vadd.s32 %v158, 4294967288
    %v164 = vlaneseq
    %v165 = vshrl.u32 %v164, 7
    %v166 = vsub.s32 %v163, %v165
    %v167 = vrot.slane %v98, %v166
    %vm168 = vcmask 130112
    %v169 = vsel %vm168, %v167, %v162
    %v170 = vlaneseq
    %v171 = vshrl.u32 %v170, 7
    %v172 = vsub.s32 %v158, %v171
    %v173 = vrot.slane %v101, %v172
    %v174 = vlaneseq
    %v175 = vshrl.u32 %v174, 7
    %v176 = vsub.s32 %v163, %v175
    %v177 = vrot.slane %v104, %v176
    %v178 = vsel %vm168, %v177, %v173
    %v179 = vlaneseq
    %v180 = vshrl.u32 %v179, 7
    %v181 = vsub.s32 %v158, %v180
    %v182 = vrot.slane %v107, %v181
    %v183 = vlaneseq
    %v184 = vshrl.u32 %v183, 7
    %v185 = vsub.s32 %v163, %v184
    %v186 = vrot.slane %v110, %v185
    %v187 = vsel %vm168, %v186, %v182
    %v188 = vlaneseq
    %v189 = vshrl.u32 %v188, 7
    %v190 = vsub.s32 %v158, %v189
    %v191 = vrot.slane %v113, %v190
    %v192 = vlaneseq
    %v193 = vshrl.u32 %v192, 7
    %v194 = vsub.s32 %v163, %v193
    %v195 = vrot.slane %v116, %v194
    %v196 = vsel %vm168, %v195, %v191
    %v197 = vlaneseq
    %v198 = vshrl.u32 %v197, 7
    %v199 = vsub.s32 %v158, %v198
    %v200 = vrot.slane %v119, %v199
    %v201 = vlaneseq
    %v202 = vshrl.u32 %v201, 7
    %v203 = vsub.s32 %v163, %v202
    %v204 = vrot.slane %v122, %v203
    %v205 = vsel %vm168, %v204, %v200
    %v206 = vlaneseq
    %v207 = vshrl.u32 %v206, 7
    %v208 = vsub.s32 %v158, %v207
    %v209 = vrot.slane %v125, %v208
    %v210 = vlaneseq
    %v211 = vshrl.u32 %v210, 7
    %v212 = vsub.s32 %v163, %v211
    %v213 = vrot.slane %v128, %v212
    %v214 = vsel %vm168, %v213, %v209
    %v215 = vlaneseq
    %v216 = vshrl.u32 %v215, 7
    %v217 = vsub.s32 %v158, %v216
    %v218 = vrot.slane %v131, %v217
    %v219 = vlaneseq
    %v220 = vshrl.u32 %v219, 7
    %v221 = vsub.s32 %v163, %v220
    %v222 = vrot.slane %v134, %v221
    %v223 = vsel %vm168, %v222, %v218
    %v224 = vlaneseq
    %v225 = vshrl.u32 %v224, 7
    %v226 = vsub.s32 %v158, %v225
    %v227 = vrot.slane %v137, %v226
    %v228 = vlaneseq
    %v229 = vshrl.u32 %v228, 7
    %v230 = vsub.s32 %v163, %v229
    %v231 = vrot.slane %v140, %v230
    %v232 = vsel %vm168, %v231, %v227
    %vm233 = vcmask 1041409
    %v234 = vsel %vm233, %v178, %v169
    %vm235 = vcmask 1042434
    %v236 = vsel %vm235, %v187, %v234
    %vm237 = vcmask 1043459
    %v238 = vsel %vm237, %v196, %v236
    %vm239 = vcmask 1044484
    %v240 = vsel %vm239, %v205, %v238
    %vm241 = vcmask 1045509
    %v242 = vsel %vm241, %v214, %v240
    %vm243 = vcmask 1046534
    %v244 = vsel %vm243, %v223, %v242
    %vm245 = vcmask 1047559
    %v246 = vsel %vm245, %v232, %v244
    %vm248 = vcmask 80896
    %v249 = vsel %vm248, %v246, -inf
    %250 = vmax.xlane.f32.xlu0 %v249
    %v251 = vpop.xlane.xlu0 %250
    %v253 = vlaneseq
    %v254 = vshrl.u32 %v253, 7
    %v255 = vsub.s32 0, %v254
    %v256 = vrot.slane %v251, %v255
    %v257 = vlaneseq
    %v258 = vshrl.u32 %v257, 7
    %v259 = vsub.s32 1, %v258
    %v260 = vrot.slane %v251, %v259
    %v261 = vlaneseq
    %v262 = vshrl.u32 %v261, 7
    %v263 = vsub.s32 2, %v262
    %v264 = vrot.slane %v251, %v263
    %v265 = vlaneseq
    %v266 = vshrl.u32 %v265, 7
    %v267 = vsub.s32 3, %v266
    %v268 = vrot.slane %v251, %v267
    %v269 = vlaneseq
    %v270 = vshrl.u32 %v269, 7
    %v271 = vsub.s32 4, %v270
    %v272 = vrot.slane %v251, %v271
    %v273 = vlaneseq
    %v274 = vshrl.u32 %v273, 7
    %v275 = vsub.s32 5, %v274
    %v276 = vrot.slane %v251, %v275
    %v277 = vlaneseq
    %v278 = vshrl.u32 %v277, 7
    %v279 = vsub.s32 6, %v278
    %v280 = vrot.slane %v251, %v279
    %v281 = vlaneseq
    %v282 = vshrl.u32 %v281, 7
    %v283 = vsub.s32 7, %v282
    %v284 = vrot.slane %v251, %v283
    %v293 = vsub.f32 %v94, %v256
    %v294 = vsub.f32 %v98, %v256
    %v295 = vsub.f32 %v101, %v260
    %v296 = vsub.f32 %v104, %v260
    %v297 = vsub.f32 %v107, %v264
    %v298 = vsub.f32 %v110, %v264
    %v299 = vsub.f32 %v113, %v268
    %v300 = vsub.f32 %v116, %v268
    %v301 = vsub.f32 %v119, %v272
    %v302 = vsub.f32 %v122, %v272
    %v303 = vsub.f32 %v125, %v276
    %v304 = vsub.f32 %v128, %v276
    %v305 = vsub.f32 %v131, %v280
    %v306 = vsub.f32 %v134, %v280
    %v307 = vsub.f32 %v137, %v284
    %v308 = vsub.f32 %v140, %v284
    %v309 = vmul.f32 %v293, 1.442695
    %v310 = vpow.pop %v309
    %v311 = vmul.f32 %v294, 1.442695
    %v312 = vpow.pop %v311
    %v313 = vmul.f32 %v295, 1.442695
    %v314 = vpow.pop %v313
    %v315 = vmul.f32 %v296, 1.442695
    %v316 = vpow.pop %v315
    %v317 = vmul.f32 %v297, 1.442695
    %v318 = vpow.pop %v317
    %v319 = vmul.f32 %v298, 1.442695
    %v320 = vpow.pop %v319
    %v321 = vmul.f32 %v299, 1.442695
    %v322 = vpow.pop %v321
    %v323 = vmul.f32 %v300, 1.442695
    %v324 = vpow.pop %v323
    %v325 = vmul.f32 %v301, 1.442695
    %v326 = vpow.pop %v325
    %v327 = vmul.f32 %v302, 1.442695
    %v328 = vpow.pop %v327
    %v329 = vmul.f32 %v303, 1.442695
    %v330 = vpow.pop %v329
    %v331 = vmul.f32 %v304, 1.442695
    %v332 = vpow.pop %v331
    %v333 = vmul.f32 %v305, 1.442695
    %v334 = vpow.pop %v333
    %v335 = vmul.f32 %v306, 1.442695
    %v336 = vpow.pop %v335
    %v337 = vmul.f32 %v307, 1.442695
    %v338 = vpow.pop %v337
    %v339 = vmul.f32 %v308, 1.442695
    %v340 = vpow.pop %v339
    %357 = vset.pattern.permute.xlu0 0
    %358 = vperm.xlu0 %357, %v310
    %v359 = vpop.permute.xlu0 %358
    %360 = vset.pattern.permute.xlu0 0
    %361 = vperm.xlu0 %360, %v312
    %v362 = vpop.permute.xlu0 %361
    %363 = vset.pattern.permute.xlu0 0
    %364 = vperm.xlu0 %363, %v314
    %v365 = vpop.permute.xlu0 %364
    %366 = vset.pattern.permute.xlu0 0
    %367 = vperm.xlu0 %366, %v316
    %v368 = vpop.permute.xlu0 %367
    %369 = vset.pattern.permute.xlu0 0
    %370 = vperm.xlu0 %369, %v318
    %v371 = vpop.permute.xlu0 %370
    %372 = vset.pattern.permute.xlu0 0
    %373 = vperm.xlu0 %372, %v320
    %v374 = vpop.permute.xlu0 %373
    %375 = vset.pattern.permute.xlu0 0
    %376 = vperm.xlu0 %375, %v322
    %v377 = vpop.permute.xlu0 %376
    %378 = vset.pattern.permute.xlu0 0
    %379 = vperm.xlu0 %378, %v324
    %v380 = vpop.permute.xlu0 %379
    %381 = vset.pattern.permute.xlu0 0
    %382 = vperm.xlu0 %381, %v326
    %v383 = vpop.permute.xlu0 %382
    %384 = vset.pattern.permute.xlu0 0
    %385 = vperm.xlu0 %384, %v328
    %v386 = vpop.permute.xlu0 %385
    %387 = vset.pattern.permute.xlu0 0
    %388 = vperm.xlu0 %387, %v330
    %v389 = vpop.permute.xlu0 %388
    %390 = vset.pattern.permute.xlu0 0
    %391 = vperm.xlu0 %390, %v332
    %v392 = vpop.permute.xlu0 %391
    %393 = vset.pattern.permute.xlu0 0
    %394 = vperm.xlu0 %393, %v334
    %v395 = vpop.permute.xlu0 %394
    %396 = vset.pattern.permute.xlu0 0
    %397 = vperm.xlu0 %396, %v336
    %v398 = vpop.permute.xlu0 %397
    %399 = vset.pattern.permute.xlu0 0
    %400 = vperm.xlu0 %399, %v338
    %v401 = vpop.permute.xlu0 %400
    %402 = vset.pattern.permute.xlu0 0
    %403 = vperm.xlu0 %402, %v340
    %v404 = vpop.permute.xlu0 %403
    %v405 = vlaneseq
    %v406 = vshrl.u32 %v405, 7
    %v407 = vsub.s32 %v158, %v406
    %v408 = vrot.slane %v359, %v407
    %v409 = vlaneseq
    %v410 = vshrl.u32 %v409, 7
    %v411 = vsub.s32 %v163, %v410
    %v412 = vrot.slane %v362, %v411
    %v413 = vsel %vm168, %v412, %v408
    %v414 = vlaneseq
    %v415 = vshrl.u32 %v414, 7
    %v416 = vsub.s32 %v158, %v415
    %v417 = vrot.slane %v365, %v416
    %v418 = vlaneseq
    %v419 = vshrl.u32 %v418, 7
    %v420 = vsub.s32 %v163, %v419
    %v421 = vrot.slane %v368, %v420
    %v422 = vsel %vm168, %v421, %v417
    %v423 = vlaneseq
    %v424 = vshrl.u32 %v423, 7
    %v425 = vsub.s32 %v158, %v424
    %v426 = vrot.slane %v371, %v425
    %v427 = vlaneseq
    %v428 = vshrl.u32 %v427, 7
    %v429 = vsub.s32 %v163, %v428
    %v430 = vrot.slane %v374, %v429
    %v431 = vsel %vm168, %v430, %v426
    %v432 = vlaneseq
    %v433 = vshrl.u32 %v432, 7
    %v434 = vsub.s32 %v158, %v433
    %v435 = vrot.slane %v377, %v434
    %v436 = vlaneseq
    %v437 = vshrl.u32 %v436, 7
    %v438 = vsub.s32 %v163, %v437
    %v439 = vrot.slane %v380, %v438
    %v440 = vsel %vm168, %v439, %v435
    %v441 = vlaneseq
    %v442 = vshrl.u32 %v441, 7
    %v443 = vsub.s32 %v158, %v442
    %v444 = vrot.slane %v383, %v443
    %v445 = vlaneseq
    %v446 = vshrl.u32 %v445, 7
    %v447 = vsub.s32 %v163, %v446
    %v448 = vrot.slane %v386, %v447
    %v449 = vsel %vm168, %v448, %v444
    %v450 = vlaneseq
    %v451 = vshrl.u32 %v450, 7
    %v452 = vsub.s32 %v158, %v451
    %v453 = vrot.slane %v389, %v452
    %v454 = vlaneseq
    %v455 = vshrl.u32 %v454, 7
    %v456 = vsub.s32 %v163, %v455
    %v457 = vrot.slane %v392, %v456
    %v458 = vsel %vm168, %v457, %v453
    %v459 = vlaneseq
    %v460 = vshrl.u32 %v459, 7
    %v461 = vsub.s32 %v158, %v460
    %v462 = vrot.slane %v395, %v461
    %v463 = vlaneseq
    %v464 = vshrl.u32 %v463, 7
    %v465 = vsub.s32 %v163, %v464
    %v466 = vrot.slane %v398, %v465
    %v467 = vsel %vm168, %v466, %v462
    %v468 = vlaneseq
    %v469 = vshrl.u32 %v468, 7
    %v470 = vsub.s32 %v158, %v469
    %v471 = vrot.slane %v401, %v470
    %v472 = vlaneseq
    %v473 = vshrl.u32 %v472, 7
    %v474 = vsub.s32 %v163, %v473
    %v475 = vrot.slane %v404, %v474
    %v476 = vsel %vm168, %v475, %v471
    %v477 = vsel %vm233, %v422, %v413
    %v478 = vsel %vm235, %v431, %v477
    %v479 = vsel %vm237, %v440, %v478
    %v480 = vsel %vm239, %v449, %v479
    %v481 = vsel %vm241, %v458, %v480
    %v482 = vsel %vm243, %v467, %v481
    %v483 = vsel %vm245, %v476, %v482
    %v485 = vsel %vm248, %v483, 0.0
    %486 = vadd.xlane.f32.xlu0 %v485
    %v487 = vpop.xlane.xlu0 %486
    %v489 = vlaneseq
    %v490 = vshrl.u32 %v489, 7
    %v491 = vsub.s32 0, %v490
    %v492 = vrot.slane %v487, %v491
    %v493 = vlaneseq
    %v494 = vshrl.u32 %v493, 7
    %v495 = vsub.s32 1, %v494
    %v496 = vrot.slane %v487, %v495
    %v497 = vlaneseq
    %v498 = vshrl.u32 %v497, 7
    %v499 = vsub.s32 2, %v498
    %v500 = vrot.slane %v487, %v499
    %v501 = vlaneseq
    %v502 = vshrl.u32 %v501, 7
    %v503 = vsub.s32 3, %v502
    %v504 = vrot.slane %v487, %v503
    %v505 = vlaneseq
    %v506 = vshrl.u32 %v505, 7
    %v507 = vsub.s32 4, %v506
    %v508 = vrot.slane %v487, %v507
    %v509 = vlaneseq
    %v510 = vshrl.u32 %v509, 7
    %v511 = vsub.s32 5, %v510
    %v512 = vrot.slane %v487, %v511
    %v513 = vlaneseq
    %v514 = vshrl.u32 %v513, 7
    %v515 = vsub.s32 6, %v514
    %v516 = vrot.slane %v487, %v515
    %v517 = vlaneseq
    %v518 = vshrl.u32 %v517, 7
    %v519 = vsub.s32 7, %v518
    %v520 = vrot.slane %v487, %v519
    %v529 = vrcp.pop %v492
    %v530 = vmul.f32 %v310, %v529
    %v531 = vmul.f32 %v312, %v529
    %v532 = vrcp.pop %v496
    %v533 = vmul.f32 %v314, %v532
    %v534 = vmul.f32 %v316, %v532
    %v535 = vrcp.pop %v500
    %v536 = vmul.f32 %v318, %v535
    %v537 = vmul.f32 %v320, %v535
    %v538 = vrcp.pop %v504
    %v539 = vmul.f32 %v322, %v538
    %v540 = vmul.f32 %v324, %v538
    %v541 = vrcp.pop %v508
    %v542 = vmul.f32 %v326, %v541
    %v543 = vmul.f32 %v328, %v541
    %v544 = vrcp.pop %v512
    %v545 = vmul.f32 %v330, %v544
    %v546 = vmul.f32 %v332, %v544
    %v547 = vrcp.pop %v516
    %v548 = vmul.f32 %v334, %v547
    %v549 = vmul.f32 %v336, %v547
    %v550 = vrcp.pop %v520
    %v551 = vmul.f32 %v338, %v550
    %v552 = vmul.f32 %v340, %v550
    %554 = vset.pattern.permute.xlu0 0
    %555 = vperm.xlu0 %554, %v530
    %v556 = vpop.permute.xlu0 %555
    %559 = vset.pattern.permute.xlu0 0
    %560 = vperm.xlu0 %559, %v531
    %v561 = vpop.permute.xlu0 %560
    %564 = vset.pattern.permute.xlu0 0
    %565 = vperm.xlu0 %564, %v533
    %v566 = vpop.permute.xlu0 %565
    %569 = vset.pattern.permute.xlu0 0
    %570 = vperm.xlu0 %569, %v534
    %v571 = vpop.permute.xlu0 %570
    %574 = vset.pattern.permute.xlu0 0
    %575 = vperm.xlu0 %574, %v536
    %v576 = vpop.permute.xlu0 %575
    %579 = vset.pattern.permute.xlu0 0
    %580 = vperm.xlu0 %579, %v537
    %v581 = vpop.permute.xlu0 %580
    %584 = vset.pattern.permute.xlu0 0
    %585 = vperm.xlu0 %584, %v539
    %v586 = vpop.permute.xlu0 %585
    %589 = vset.pattern.permute.xlu0 0
    %590 = vperm.xlu0 %589, %v540
    %v591 = vpop.permute.xlu0 %590
    %594 = vset.pattern.permute.xlu0 0
    %595 = vperm.xlu0 %594, %v542
    %v596 = vpop.permute.xlu0 %595
    %599 = vset.pattern.permute.xlu0 0
    %600 = vperm.xlu0 %599, %v543
    %v601 = vpop.permute.xlu0 %600
    %604 = vset.pattern.permute.xlu0 0
    %605 = vperm.xlu0 %604, %v545
    %v606 = vpop.permute.xlu0 %605
    %609 = vset.pattern.permute.xlu0 0
    %610 = vperm.xlu0 %609, %v546
    %v611 = vpop.permute.xlu0 %610
    %614 = vset.pattern.permute.xlu0 0
    %615 = vperm.xlu0 %614, %v548
    %v616 = vpop.permute.xlu0 %615
    %619 = vset.pattern.permute.xlu0 0
    %620 = vperm.xlu0 %619, %v549
    %v621 = vpop.permute.xlu0 %620
    %624 = vset.pattern.permute.xlu0 0
    %625 = vperm.xlu0 %624, %v551
    %v626 = vpop.permute.xlu0 %625
    %629 = vset.pattern.permute.xlu0 0
    %630 = vperm.xlu0 %629, %v552
    %v631 = vpop.permute.xlu0 %630
    %v633 = vmul.f32 %v52, %v556
    %v634 = vmul.f32 %v53, %v561
    %v635 = vmul.f32 %v54, %v566
    %v636 = vmul.f32 %v55, %v571
    %v637 = vmul.f32 %v56, %v576
    %v638 = vmul.f32 %v57, %v581
    %v639 = vmul.f32 %v58, %v586
    %v640 = vmul.f32 %v59, %v591
    %v641 = vmul.f32 %v60, %v596
    %v642 = vmul.f32 %v61, %v601
    %v643 = vmul.f32 %v62, %v606
    %v644 = vmul.f32 %v63, %v611
    %v645 = vmul.f32 %v64, %v616
    %v646 = vmul.f32 %v65, %v621
    %v647 = vmul.f32 %v66, %v626
    %v648 = vmul.f32 %v67, %v631
    %v649 = vsel %vm91, %v633, 0.0
    %v650 = vsel %vm95, %v634, 0.0
    %v651 = vadd.f32 %v649, %v650
    %v652 = vrot.slane %v651, 4
    %v653 = vadd.f32 %v651, %v652
    %v654 = vrot.slane %v653, 2
    %v655 = vadd.f32 %v653, %v654
    %v656 = vrot.slane %v655, 1
    %v657 = vadd.f32 %v655, %v656
    %v658 = vsel %vm91, %v635, 0.0
    %v659 = vsel %vm95, %v636, 0.0
    %v660 = vadd.f32 %v658, %v659
    %v661 = vrot.slane %v660, 4
    %v662 = vadd.f32 %v660, %v661
    %v663 = vrot.slane %v662, 2
    %v664 = vadd.f32 %v662, %v663
    %v665 = vrot.slane %v664, 1
    %v666 = vadd.f32 %v664, %v665
    %v667 = vsel %vm91, %v637, 0.0
    %v668 = vsel %vm95, %v638, 0.0
    %v669 = vadd.f32 %v667, %v668
    %v670 = vrot.slane %v669, 4
    %v671 = vadd.f32 %v669, %v670
    %v672 = vrot.slane %v671, 2
    %v673 = vadd.f32 %v671, %v672
    %v674 = vrot.slane %v673, 1
    %v675 = vadd.f32 %v673, %v674
    %v676 = vsel %vm91, %v639, 0.0
    %v677 = vsel %vm95, %v640, 0.0
    %v678 = vadd.f32 %v676, %v677
    %v679 = vrot.slane %v678, 4
    %v680 = vadd.f32 %v678, %v679
    %v681 = vrot.slane %v680, 2
    %v682 = vadd.f32 %v680, %v681
    %v683 = vrot.slane %v682, 1
    %v684 = vadd.f32 %v682, %v683
    %v685 = vsel %vm91, %v641, 0.0
    %v686 = vsel %vm95, %v642, 0.0
    %v687 = vadd.f32 %v685, %v686
    %v688 = vrot.slane %v687, 4
    %v689 = vadd.f32 %v687, %v688
    %v690 = vrot.slane %v689, 2
    %v691 = vadd.f32 %v689, %v690
    %v692 = vrot.slane %v691, 1
    %v693 = vadd.f32 %v691, %v692
    %v694 = vsel %vm91, %v643, 0.0
    %v695 = vsel %vm95, %v644, 0.0
    %v696 = vadd.f32 %v694, %v695
    %v697 = vrot.slane %v696, 4
    %v698 = vadd.f32 %v696, %v697
    %v699 = vrot.slane %v698, 2
    %v700 = vadd.f32 %v698, %v699
    %v701 = vrot.slane %v700, 1
    %v702 = vadd.f32 %v700, %v701
    %v703 = vsel %vm91, %v645, 0.0
    %v704 = vsel %vm95, %v646, 0.0
    %v705 = vadd.f32 %v703, %v704
    %v706 = vrot.slane %v705, 4
    %v707 = vadd.f32 %v705, %v706
    %v708 = vrot.slane %v707, 2
    %v709 = vadd.f32 %v707, %v708
    %v710 = vrot.slane %v709, 1
    %v711 = vadd.f32 %v709, %v710
    %v712 = vsel %vm91, %v647, 0.0
    %v713 = vsel %vm95, %v648, 0.0
    %v714 = vadd.f32 %v712, %v713
    %v715 = vrot.slane %v714, 4
    %v716 = vadd.f32 %v714, %v715
    %v717 = vrot.slane %v716, 2
    %v718 = vadd.f32 %v716, %v717
    %v719 = vrot.slane %v718, 1
    %v720 = vadd.f32 %v718, %v719
    %v721 = vsel %vm91, %v52, 0.0
    %v722 = vsel %vm95, %v53, 0.0
    %v723 = vadd.f32 %v721, %v722
    %v724 = vrot.slane %v723, 4
    %v725 = vadd.f32 %v723, %v724
    %v726 = vrot.slane %v725, 2
    %v727 = vadd.f32 %v725, %v726
    %v728 = vrot.slane %v727, 1
    %v729 = vadd.f32 %v727, %v728
    %v730 = vsel %vm91, %v54, 0.0
    %v731 = vsel %vm95, %v55, 0.0
    %v732 = vadd.f32 %v730, %v731
    %v733 = vrot.slane %v732, 4
    %v734 = vadd.f32 %v732, %v733
    %v735 = vrot.slane %v734, 2
    %v736 = vadd.f32 %v734, %v735
    %v737 = vrot.slane %v736, 1
    %v738 = vadd.f32 %v736, %v737
    %v739 = vsel %vm91, %v56, 0.0
    %v740 = vsel %vm95, %v57, 0.0
    %v741 = vadd.f32 %v739, %v740
    %v742 = vrot.slane %v741, 4
    %v743 = vadd.f32 %v741, %v742
    %v744 = vrot.slane %v743, 2
    %v745 = vadd.f32 %v743, %v744
    %v746 = vrot.slane %v745, 1
    %v747 = vadd.f32 %v745, %v746
    %v748 = vsel %vm91, %v58, 0.0
    %v749 = vsel %vm95, %v59, 0.0
    %v750 = vadd.f32 %v748, %v749
    %v751 = vrot.slane %v750, 4
    %v752 = vadd.f32 %v750, %v751
    %v753 = vrot.slane %v752, 2
    %v754 = vadd.f32 %v752, %v753
    %v755 = vrot.slane %v754, 1
    %v756 = vadd.f32 %v754, %v755
    %v757 = vsel %vm91, %v60, 0.0
    %v758 = vsel %vm95, %v61, 0.0
    %v759 = vadd.f32 %v757, %v758
    %v760 = vrot.slane %v759, 4
    %v761 = vadd.f32 %v759, %v760
    %v762 = vrot.slane %v761, 2
    %v763 = vadd.f32 %v761, %v762
    %v764 = vrot.slane %v763, 1
    %v765 = vadd.f32 %v763, %v764
    %v766 = vsel %vm91, %v62, 0.0
    %v767 = vsel %vm95, %v63, 0.0
    %v768 = vadd.f32 %v766, %v767
    %v769 = vrot.slane %v768, 4
    %v770 = vadd.f32 %v768, %v769
    %v771 = vrot.slane %v770, 2
    %v772 = vadd.f32 %v770, %v771
    %v773 = vrot.slane %v772, 1
    %v774 = vadd.f32 %v772, %v773
    %v775 = vsel %vm91, %v64, 0.0
    %v776 = vsel %vm95, %v65, 0.0
    %v777 = vadd.f32 %v775, %v776
    %v778 = vrot.slane %v777, 4
    %v779 = vadd.f32 %v777, %v778
    %v780 = vrot.slane %v779, 2
    %v781 = vadd.f32 %v779, %v780
    %v782 = vrot.slane %v781, 1
    %v783 = vadd.f32 %v781, %v782
    %v784 = vsel %vm91, %v66, 0.0
    %v785 = vsel %vm95, %v67, 0.0
    %v786 = vadd.f32 %v784, %v785
    %v787 = vrot.slane %v786, 4
    %v788 = vadd.f32 %v786, %v787
    %v789 = vrot.slane %v788, 2
    %v790 = vadd.f32 %v788, %v789
    %v791 = vrot.slane %v790, 1
    %v792 = vadd.f32 %v790, %v791
    %v793 = vrcp.pop 10.0
    %v794 = vmul.f32 %v729, %v793
    %v795 = vmul.f32 %v738, %v793
    %v796 = vmul.f32 %v747, %v793
    %v797 = vmul.f32 %v756, %v793
    %v798 = vmul.f32 %v765, %v793
    %v799 = vmul.f32 %v774, %v793
    %v800 = vmul.f32 %v783, %v793
    %v801 = vmul.f32 %v792, %v793
    %v802 = vsel %vm91, %v52, -inf
    %v803 = vsel %vm95, %v53, -inf
    %v804 = vmax.f32 %v802, %v803
    %v805 = vrot.slane %v804, 4
    %v806 = vmax.f32 %v804, %v805
    %v807 = vrot.slane %v806, 2
    %v808 = vmax.f32 %v806, %v807
    %v809 = vrot.slane %v808, 1
    %v810 = vmax.f32 %v808, %v809
    %v811 = vsel %vm91, %v54, -inf
    %v812 = vsel %vm95, %v55, -inf
    %v813 = vmax.f32 %v811, %v812
    %v814 = vrot.slane %v813, 4
    %v815 = vmax.f32 %v813, %v814
    %v816 = vrot.slane %v815, 2
    %v817 = vmax.f32 %v815, %v816
    %v818 = vrot.slane %v817, 1
    %v819 = vmax.f32 %v817, %v818
    %v820 = vsel %vm91, %v56, -inf
    %v821 = vsel %vm95, %v57, -inf
    %v822 = vmax.f32 %v820, %v821
    %v823 = vrot.slane %v822, 4
    %v824 = vmax.f32 %v822, %v823
    %v825 = vrot.slane %v824, 2
    %v826 = vmax.f32 %v824, %v825
    %v827 = vrot.slane %v826, 1
    %v828 = vmax.f32 %v826, %v827
    %v829 = vsel %vm91, %v58, -inf
    %v830 = vsel %vm95, %v59, -inf
    %v831 = vmax.f32 %v829, %v830
    %v832 = vrot.slane %v831, 4
    %v833 = vmax.f32 %v831, %v832
    %v834 = vrot.slane %v833, 2
    %v835 = vmax.f32 %v833, %v834
    %v836 = vrot.slane %v835, 1
    %v837 = vmax.f32 %v835, %v836
    %v838 = vsel %vm91, %v60, -inf
    %v839 = vsel %vm95, %v61, -inf
    %v840 = vmax.f32 %v838, %v839
    %v841 = vrot.slane %v840, 4
    %v842 = vmax.f32 %v840, %v841
    %v843 = vrot.slane %v842, 2
    %v844 = vmax.f32 %v842, %v843
    %v845 = vrot.slane %v844, 1
    %v846 = vmax.f32 %v844, %v845
    %v847 = vsel %vm91, %v62, -inf
    %v848 = vsel %vm95, %v63, -inf
    %v849 = vmax.f32 %v847, %v848
    %v850 = vrot.slane %v849, 4
    %v851 = vmax.f32 %v849, %v850
    %v852 = vrot.slane %v851, 2
    %v853 = vmax.f32 %v851, %v852
    %v854 = vrot.slane %v853, 1
    %v855 = vmax.f32 %v853, %v854
    %v856 = vsel %vm91, %v64, -inf
    %v857 = vsel %vm95, %v65, -inf
    %v858 = vmax.f32 %v856, %v857
    %v859 = vrot.slane %v858, 4
    %v860 = vmax.f32 %v858, %v859
    %v861 = vrot.slane %v860, 2
    %v862 = vmax.f32 %v860, %v861
    %v863 = vrot.slane %v862, 1
    %v864 = vmax.f32 %v862, %v863
    %v865 = vsel %vm91, %v66, -inf
    %v866 = vsel %vm95, %v67, -inf
    %v867 = vmax.f32 %v865, %v866
    %v868 = vrot.slane %v867, 4
    %v869 = vmax.f32 %v867, %v868
    %v870 = vrot.slane %v869, 2
    %v871 = vmax.f32 %v869, %v870
    %v872 = vrot.slane %v871, 1
    %v873 = vmax.f32 %v871, %v872
    %v882 = vsel %vm233, %v666, %v657
    %v883 = vsel %vm235, %v675, %v882
    %v884 = vsel %vm237, %v684, %v883
    %v885 = vsel %vm239, %v693, %v884
    %v886 = vsel %vm241, %v702, %v885
    %v887 = vsel %vm243, %v711, %v886
    %v888 = vsel %vm245, %v720, %v887
    %v898 = vsel %vm233, %v795, %v794
    %v899 = vsel %vm235, %v796, %v898
    %v900 = vsel %vm237, %v797, %v899
    %v901 = vsel %vm239, %v798, %v900
    %v902 = vsel %vm241, %v799, %v901
    %v903 = vsel %vm243, %v800, %v902
    %v904 = vsel %vm245, %v801, %v903
    %905 = vrot.lane.b32.xlu0 %v904, 32
    %v906 = vpop.permute.xlu0 %905
    %v916 = vsel %vm233, %v819, %v810
    %v917 = vsel %vm235, %v828, %v916
    %v918 = vsel %vm237, %v837, %v917
    %v919 = vsel %vm239, %v846, %v918
    %v920 = vsel %vm241, %v855, %v919
    %v921 = vsel %vm243, %v864, %v920
    %v922 = vsel %vm245, %v873, %v921
    %923 = vrot.lane.b32.xlu0 %v922, 64
    %v924 = vpop.permute.xlu0 %923
    %v926 = vsel %vm91, %v888, %v906
    %vm927 = vcmask 523264
    %v928 = vsel %vm927, %v926, %v924
    %vm929 = vcmask 785408
    %v930 = vsel %vm929, %v928, 0.0
    %931 = vst [vmem:[#allocation2] sm:$0xff] %v930
    %v932 = vld [vmem:[#allocation2] sm:$0xff]
    %v933 = vsub.f32 0.0, %v932
    %v934 = vmul.f32 %v933, 1.442695
    %v935 = vpow.pop %v934
    %v936 = vadd.f32 %v935, 1.0
    %v937 = vrcp.pop %v936
    %v938 = vmul.f32 %v932, %v937
    %939 = vst [vmem:[#allocation3] sm:$0xff] %v938
    %v940 = vsub.f32 %v932, -2.2
    %v941 = vmul.f32 %v940, 2.5
    %v942 = vfloor.f32 %v941
    %v943 = vsub.f32 %v941, %v942
    %v944 = vmul.f32 %v943, %v943
    %v945 = vmul.f32 %v944, %v943
    %v946 = vmul.f32 %v945, 0.16666667
    %v947 = vsub.f32 1.0, %v943
    %v948 = vmul.f32 %v947, %v947
    %v949 = vmul.f32 %v948, %v947
    %v950 = vmul.f32 %v949, 0.16666667
    %v951 = vmul.f32 %v943, 0.5
    %v952 = vsub.f32 %v951, 1.0
    %v953 = vmul.f32 %v944, %v952
    %v954 = vadd.f32 %v953, 0.6666667
    %v955 = vadd.f32 %v950, %v954
    %v956 = vadd.f32 %v955, %v946
    %v957 = vsub.f32 1.0, %v956
    %vm958 = vcmp.eq.f32.partialorder %v942, 0.0
    %vm959 = vcmp.eq.f32.partialorder %v942, 1.0
    %vm960 = vcmp.eq.f32.partialorder %v942, 2.0
    %vm961 = vcmp.eq.f32.partialorder %v942, 3.0
    %v962 = vsel %vm961, %v950, 0.0
    %v963 = vsel %vm960, %v954, %v962
    %v964 = vsel %vm959, %v957, %v963
    %v965 = vsel %vm958, %v946, %v964
    %966 = vst [vmem:[#allocation3 + $0x8] sm:$0xff] %v965
    %v967 = vsub.f32 %v942, 1.0
    %vm968 = vcmp.eq.f32.partialorder %v967, 0.0
    %vm969 = vcmp.eq.f32.partialorder %v967, 1.0
    %vm970 = vcmp.eq.f32.partialorder %v967, 2.0
    %vm971 = vcmp.eq.f32.partialorder %v967, 3.0
    %v972 = vsel %vm971, %v950, 0.0
    %v973 = vsel %vm970, %v954, %v972
    %v974 = vsel %vm969, %v957, %v973
    %v975 = vsel %vm968, %v946, %v974
    %976 = vst [vmem:[#allocation3 + $0x10] sm:$0xff] %v975
    %v977 = vsub.f32 %v942, 2.0
    %vm978 = vcmp.eq.f32.partialorder %v977, 0.0
    %vm979 = vcmp.eq.f32.partialorder %v977, 1.0
    %vm980 = vcmp.eq.f32.partialorder %v977, 2.0
    %vm981 = vcmp.eq.f32.partialorder %v977, 3.0
    %v982 = vsel %vm981, %v950, 0.0
    %v983 = vsel %vm980, %v954, %v982
    %v984 = vsel %vm979, %v957, %v983
    %v985 = vsel %vm978, %v946, %v984
    %986 = vst [vmem:[#allocation3 + $0x18] sm:$0xff] %v985
    %v987 = vsub.f32 %v942, 3.0
    %vm988 = vcmp.eq.f32.partialorder %v987, 0.0
    %vm989 = vcmp.eq.f32.partialorder %v987, 1.0
    %vm990 = vcmp.eq.f32.partialorder %v987, 2.0
    %vm991 = vcmp.eq.f32.partialorder %v987, 3.0
    %v992 = vsel %vm991, %v950, 0.0
    %v993 = vsel %vm990, %v954, %v992
    %v994 = vsel %vm989, %v957, %v993
    %v995 = vsel %vm988, %v946, %v994
    %996 = vst [vmem:[#allocation3 + $0x20] sm:$0xff] %v995
    %v997 = vsub.f32 %v942, 4.0
    %vm998 = vcmp.eq.f32.partialorder %v997, 0.0
    %vm999 = vcmp.eq.f32.partialorder %v997, 1.0
    %vm1000 = vcmp.eq.f32.partialorder %v997, 2.0
    %vm1001 = vcmp.eq.f32.partialorder %v997, 3.0
    %v1002 = vsel %vm1001, %v950, 0.0
    %v1003 = vsel %vm1000, %v954, %v1002
    %v1004 = vsel %vm999, %v957, %v1003
    %v1005 = vsel %vm998, %v946, %v1004
    %1006 = vst [vmem:[#allocation3 + $0x28] sm:$0xff] %v1005
    %v1007 = vsub.f32 %v942, 5.0
    %vm1008 = vcmp.eq.f32.partialorder %v1007, 0.0
    %vm1009 = vcmp.eq.f32.partialorder %v1007, 1.0
    %vm1010 = vcmp.eq.f32.partialorder %v1007, 2.0
    %vm1011 = vcmp.eq.f32.partialorder %v1007, 3.0
    %v1012 = vsel %vm1011, %v950, 0.0
    %v1013 = vsel %vm1010, %v954, %v1012
    %v1014 = vsel %vm1009, %v957, %v1013
    %v1015 = vsel %vm1008, %v946, %v1014
    %1016 = vst [vmem:[#allocation3 + $0x30] sm:$0xff] %v1015
    %v1017 = vsub.f32 %v942, 6.0
    %vm1018 = vcmp.eq.f32.partialorder %v1017, 0.0
    %vm1019 = vcmp.eq.f32.partialorder %v1017, 1.0
    %vm1020 = vcmp.eq.f32.partialorder %v1017, 2.0
    %vm1021 = vcmp.eq.f32.partialorder %v1017, 3.0
    %v1022 = vsel %vm1021, %v950, 0.0
    %v1023 = vsel %vm1020, %v954, %v1022
    %v1024 = vsel %vm1019, %v957, %v1023
    %v1025 = vsel %vm1018, %v946, %v1024
    %1026 = vst [vmem:[#allocation3 + $0x38] sm:$0xff] %v1025
    %v1027 = vsub.f32 %v942, 7.0
    %vm1028 = vcmp.eq.f32.partialorder %v1027, 0.0
    %vm1029 = vcmp.eq.f32.partialorder %v1027, 1.0
    %vm1030 = vcmp.eq.f32.partialorder %v1027, 2.0
    %vm1031 = vcmp.eq.f32.partialorder %v1027, 3.0
    %v1032 = vsel %vm1031, %v950, 0.0
    %v1033 = vsel %vm1030, %v954, %v1032
    %v1034 = vsel %vm1029, %v957, %v1033
    %v1035 = vsel %vm1028, %v946, %v1034
    %1036 = vst [vmem:[#allocation3 + $0x40] sm:$0xff] %v1035
    %v1037 = vld [vmem:[#allocation3] sm:$0xff]
    %v1038 = vld [vmem:[#allocation3 + $0x8] sm:$0xff]
    %v1039 = vld [vmem:[#allocation3 + $0x10] sm:$0xff]
    %v1040 = vld [vmem:[#allocation3 + $0x18] sm:$0xff]
    %v1041 = vld [vmem:[#allocation3 + $0x20] sm:$0xff]
    %v1042 = vld [vmem:[#allocation3 + $0x28] sm:$0xff]
    %v1043 = vld [vmem:[#allocation3 + $0x30] sm:$0xff]
    %v1044 = vld [vmem:[#allocation3 + $0x38] sm:$0xff]
    %v1045 = vld [vmem:[#allocation3 + $0x40] sm:$0xff]
    %v1046 = vld [vmem:[#allocation4] sm:$0xff]
    %v1047 = vld [vmem:[#allocation4 + $0x8] sm:$0xff]
    %v1048 = vld [vmem:[#allocation4 + $0x10] sm:$0xff]
    %v1049 = vld [vmem:[#allocation4 + $0x18] sm:$0xff]
    %v1050 = vld [vmem:[#allocation4 + $0x20] sm:$0xff]
    %v1051 = vld [vmem:[#allocation4 + $0x28] sm:$0xff]
    %v1052 = vld [vmem:[#allocation4 + $0x30] sm:$0xff]
    %v1053 = vld [vmem:[#allocation4 + $0x38] sm:$0xff]
    %v1054 = vld [vmem:[#allocation4 + $0x40] sm:$0xff]
    %v1055 = vld [vmem:[#allocation4 + $0x48] sm:$0xff]
    %v1056 = vld [vmem:[#allocation4 + $0x50] sm:$0xff]
    %v1057 = vld [vmem:[#allocation4 + $0x58] sm:$0xff]
    %v1058 = vld [vmem:[#allocation4 + $0x60] sm:$0xff]
    %v1059 = vld [vmem:[#allocation4 + $0x68] sm:$0xff]
    %v1060 = vld [vmem:[#allocation4 + $0x70] sm:$0xff]
    %v1061 = vld [vmem:[#allocation4 + $0x78] sm:$0xff]
    %v1062 = vld [vmem:[#allocation4 + $0x80] sm:$0xff]
    %v1063 = vld [vmem:[#allocation4 + $0x88] sm:$0xff]
    %v1064 = vld [vmem:[#allocation4 + $0x90] sm:$0xff]
    %v1065 = vld [vmem:[#allocation4 + $0x98] sm:$0xff]
    %v1066 = vld [vmem:[#allocation4 + $0xa0] sm:$0xff]
    %v1067 = vld [vmem:[#allocation4 + $0xa8] sm:$0xff]
    %v1068 = vld [vmem:[#allocation4 + $0xb0] sm:$0xff]
    %v1069 = vld [vmem:[#allocation4 + $0xb8] sm:$0xff]
    %v1070 = vld [vmem:[#allocation4 + $0xc0] sm:$0xff]
    %v1071 = vld [vmem:[#allocation4 + $0xc8] sm:$0xff]
    %v1072 = vld [vmem:[#allocation4 + $0xd0] sm:$0xff]
    %v1073 = vld [vmem:[#allocation4 + $0xd8] sm:$0xff]
    %v1074 = vld [vmem:[#allocation4 + $0xe0] sm:$0xff]
    %v1075 = vld [vmem:[#allocation4 + $0xe8] sm:$0xff]
    %v1076 = vld [vmem:[#allocation4 + $0xf0] sm:$0xff]
    %v1077 = vld [vmem:[#allocation4 + $0xf8] sm:$0xff]
    %v1078 = vld [vmem:[#allocation4 + $0x100] sm:$0xff]
    %v1079 = vld [vmem:[#allocation4 + $0x108] sm:$0xff]
    %v1080 = vld [vmem:[#allocation4 + $0x110] sm:$0xff]
    %v1081 = vld [vmem:[#allocation4 + $0x118] sm:$0xff]
    %v1082 = vld [vmem:[#allocation4 + $0x120] sm:$0xff]
    %v1083 = vld [vmem:[#allocation4 + $0x128] sm:$0xff]
    %v1084 = vld [vmem:[#allocation4 + $0x130] sm:$0xff]
    %v1085 = vld [vmem:[#allocation4 + $0x138] sm:$0xff]
    %v1086 = vld [vmem:[#allocation4 + $0x140] sm:$0xff]
    %v1087 = vld [vmem:[#allocation4 + $0x148] sm:$0xff]
    %v1088 = vld [vmem:[#allocation4 + $0x150] sm:$0xff]
    %v1089 = vld [vmem:[#allocation4 + $0x158] sm:$0xff]
    %v1090 = vld [vmem:[#allocation4 + $0x160] sm:$0xff]
    %v1091 = vld [vmem:[#allocation4 + $0x168] sm:$0xff]
    %v1092 = vld [vmem:[#allocation4 + $0x170] sm:$0xff]
    %v1093 = vld [vmem:[#allocation4 + $0x178] sm:$0xff]
    %v1094 = vld [vmem:[#allocation4 + $0x180] sm:$0xff]
    %v1095 = vld [vmem:[#allocation4 + $0x188] sm:$0xff]
    %v1096 = vld [vmem:[#allocation4 + $0x190] sm:$0xff]
    %v1097 = vld [vmem:[#allocation4 + $0x198] sm:$0xff]
    %v1098 = vld [vmem:[#allocation4 + $0x1a0] sm:$0xff]
    %v1099 = vld [vmem:[#allocation4 + $0x1a8] sm:$0xff]
    %v1100 = vld [vmem:[#allocation4 + $0x1b0] sm:$0xff]
    %v1101 = vld [vmem:[#allocation4 + $0x1b8] sm:$0xff]
    %v1102 = vld [vmem:[#allocation4 + $0x1c0] sm:$0xff]
    %v1103 = vld [vmem:[#allocation4 + $0x1c8] sm:$0xff]
    %v1104 = vld [vmem:[#allocation4 + $0x1d0] sm:$0xff]
    %v1105 = vld [vmem:[#allocation4 + $0x1d8] sm:$0xff]
    %v1106 = vld [vmem:[#allocation4 + $0x1e0] sm:$0xff]
    %v1107 = vld [vmem:[#allocation4 + $0x1e8] sm:$0xff]
    %v1108 = vld [vmem:[#allocation4 + $0x1f0] sm:$0xff]
    %v1109 = vld [vmem:[#allocation4 + $0x1f8] sm:$0xff]
    %v1110 = vld [vmem:[#allocation4 + $0x200] sm:$0xff]
    %v1111 = vld [vmem:[#allocation4 + $0x208] sm:$0xff]
    %v1112 = vld [vmem:[#allocation4 + $0x210] sm:$0xff]
    %v1113 = vld [vmem:[#allocation4 + $0x218] sm:$0xff]
    %v1114 = vld [vmem:[#allocation4 + $0x220] sm:$0xff]
    %v1115 = vld [vmem:[#allocation4 + $0x228] sm:$0xff]
    %v1116 = vld [vmem:[#allocation4 + $0x230] sm:$0xff]
    %v1117 = vld [vmem:[#allocation4 + $0x238] sm:$0xff]
    %v1118 = vld [vmem:[#allocation4 + $0x240] sm:$0xff]
    %v1119 = vld [vmem:[#allocation4 + $0x248] sm:$0xff]
    %v1120 = vld [vmem:[#allocation4 + $0x250] sm:$0xff]
    %v1121 = vld [vmem:[#allocation4 + $0x258] sm:$0xff]
    %v1122 = vld [vmem:[#allocation4 + $0x260] sm:$0xff]
    %v1123 = vld [vmem:[#allocation4 + $0x268] sm:$0xff]
    %v1124 = vld [vmem:[#allocation4 + $0x270] sm:$0xff]
    %v1125 = vld [vmem:[#allocation4 + $0x278] sm:$0xff]
    %v1126 = vld [vmem:[#allocation4 + $0x280] sm:$0xff]
    %v1127 = vld [vmem:[#allocation4 + $0x288] sm:$0xff]
    %v1128 = vld [vmem:[#allocation4 + $0x290] sm:$0xff]
    %v1129 = vld [vmem:[#allocation4 + $0x298] sm:$0xff]
    %v1130 = vld [vmem:[#allocation4 + $0x2a0] sm:$0xff]
    %v1131 = vld [vmem:[#allocation4 + $0x2a8] sm:$0xff]
    %v1132 = vld [vmem:[#allocation4 + $0x2b0] sm:$0xff]
    %v1133 = vld [vmem:[#allocation4 + $0x2b8] sm:$0xff]
    %v1134 = vld [vmem:[#allocation4 + $0x2c0] sm:$0xff]
    %v1135 = vld [vmem:[#allocation4 + $0x2c8] sm:$0xff]
    %v1136 = vld [vmem:[#allocation4 + $0x2d0] sm:$0xff]
    %v1137 = vld [vmem:[#allocation4 + $0x2d8] sm:$0xff]
    %v1138 = vld [vmem:[#allocation4 + $0x2e0] sm:$0xff]
    %v1139 = vld [vmem:[#allocation4 + $0x2e8] sm:$0xff]
    %v1140 = vld [vmem:[#allocation4 + $0x2f0] sm:$0xff]
    %v1141 = vld [vmem:[#allocation4 + $0x2f8] sm:$0xff]
    %v1142 = vld [vmem:[#allocation4 + $0x300] sm:$0xff]
    %v1143 = vld [vmem:[#allocation4 + $0x308] sm:$0xff]
    %v1144 = vld [vmem:[#allocation4 + $0x310] sm:$0xff]
    %v1145 = vld [vmem:[#allocation4 + $0x318] sm:$0xff]
    %v1146 = vld [vmem:[#allocation4 + $0x320] sm:$0xff]
    %v1147 = vld [vmem:[#allocation4 + $0x328] sm:$0xff]
    %v1148 = vld [vmem:[#allocation4 + $0x330] sm:$0xff]
    %v1149 = vld [vmem:[#allocation4 + $0x338] sm:$0xff]
    %v1150 = vld [vmem:[#allocation4 + $0x340] sm:$0xff]
    %v1151 = vld [vmem:[#allocation4 + $0x348] sm:$0xff]
    %v1152 = vld [vmem:[#allocation4 + $0x350] sm:$0xff]
    %v1153 = vld [vmem:[#allocation4 + $0x358] sm:$0xff]
    %v1154 = vld [vmem:[#allocation4 + $0x360] sm:$0xff]
    %v1155 = vld [vmem:[#allocation4 + $0x368] sm:$0xff]
    %v1156 = vld [vmem:[#allocation4 + $0x370] sm:$0xff]
    %v1157 = vld [vmem:[#allocation4 + $0x378] sm:$0xff]
    %v1158 = vld [vmem:[#allocation4 + $0x380] sm:$0xff]
    %v1159 = vld [vmem:[#allocation4 + $0x388] sm:$0xff]
    %v1160 = vld [vmem:[#allocation4 + $0x390] sm:$0xff]
    %v1161 = vld [vmem:[#allocation4 + $0x398] sm:$0xff]
    %v1162 = vld [vmem:[#allocation4 + $0x3a0] sm:$0xff]
    %v1163 = vld [vmem:[#allocation4 + $0x3a8] sm:$0xff]
    %v1164 = vld [vmem:[#allocation4 + $0x3b0] sm:$0xff]
    %v1165 = vld [vmem:[#allocation4 + $0x3b8] sm:$0xff]
    %v1166 = vld [vmem:[#allocation4 + $0x3c0] sm:$0xff]
    %v1167 = vld [vmem:[#allocation4 + $0x3c8] sm:$0xff]
    %v1168 = vld [vmem:[#allocation4 + $0x3d0] sm:$0xff]
    %v1169 = vld [vmem:[#allocation4 + $0x3d8] sm:$0xff]
    %v1170 = vld [vmem:[#allocation4 + $0x3e0] sm:$0xff]
    %v1171 = vld [vmem:[#allocation4 + $0x3e8] sm:$0xff]
    %v1172 = vld [vmem:[#allocation4 + $0x3f0] sm:$0xff]
    %v1173 = vld [vmem:[#allocation4 + $0x3f8] sm:$0xff]
    %v1174 = vld [vmem:[#allocation4 + $0x400] sm:$0xff]
    %v1175 = vld [vmem:[#allocation4 + $0x408] sm:$0xff]
    %v1176 = vld [vmem:[#allocation4 + $0x410] sm:$0xff]
    %v1177 = vld [vmem:[#allocation4 + $0x418] sm:$0xff]
    %v1178 = vld [vmem:[#allocation4 + $0x420] sm:$0xff]
    %v1179 = vld [vmem:[#allocation4 + $0x428] sm:$0xff]
    %v1180 = vld [vmem:[#allocation4 + $0x430] sm:$0xff]
    %v1181 = vld [vmem:[#allocation4 + $0x438] sm:$0xff]
    %v1182 = vld [vmem:[#allocation4 + $0x440] sm:$0xff]
    %v1183 = vld [vmem:[#allocation4 + $0x448] sm:$0xff]
    %v1184 = vld [vmem:[#allocation4 + $0x450] sm:$0xff]
    %v1185 = vld [vmem:[#allocation4 + $0x458] sm:$0xff]
    %v1186 = vld [vmem:[#allocation4 + $0x460] sm:$0xff]
    %v1187 = vld [vmem:[#allocation4 + $0x468] sm:$0xff]
    %v1188 = vld [vmem:[#allocation4 + $0x470] sm:$0xff]
    %v1189 = vld [vmem:[#allocation4 + $0x478] sm:$0xff]
    %1190 = vmatprep.subr.mxu0 0.0
    %1191 = vmatpush1.msra.mxu0 %v1046
    %1192 = vmatprep.subr.mxu0 0.0
    %1193 = vmatpush1.msra.mxu0 %v1047
    %1194 = vmatprep.subr.mxu0 0.0
    %1195 = vmatpush1.msra.mxu0 %v1048
    %1196 = vmatprep.subr.mxu0 0.0
    %1197 = vmatpush1.msra.mxu0 %v1049
    %1198 = vmatprep.subr.mxu0 0.0
    %1199 = vmatpush1.msra.mxu0 %v1050
    %1200 = vmatprep.subr.mxu0 0.0
    %1201 = vmatpush1.msra.mxu0 %v1051
    %1202 = vmatprep.subr.mxu0 0.0
    %1203 = vmatpush1.msra.mxu0 %v1052
    %1204 = vmatprep.subr.mxu0 0.0
    %1205 = vmatpush1.msra.mxu0 %v1053
    %1206 = vmatprep.subr.mxu0 0.0
    %1207 = vmatpush1.msra.mxu0 %v1054
    %1208 = vmatprep.subr.mxu0 0.0
    %1209 = vmatpush1.msra.mxu0 %v1055
    %1210 = vmatprep.subr.mxu0 0.0
    %1211 = vmatpush1.msra.mxu0 %v1056
    %1212 = vmatprep.subr.mxu0 0.0
    %1213 = vmatpush1.msra.mxu0 %v1057
    %1214 = vmatprep.subr.mxu0 0.0
    %1215 = vmatpush1.msra.mxu0 %v1058
    %1216 = vmatprep.subr.mxu0 0.0
    %1217 = vmatpush1.msra.mxu0 %v1059
    %1218 = vmatprep.subr.mxu0 0.0
    %1219 = vmatpush1.msra.mxu0 %v1060
    %1220 = vmatprep.subr.mxu0 0.0
    %1221 = vmatpush1.msra.mxu0 %v1061
    %1222 = vmatprep.subr.mxu0 0.0
    %1223 = vmatpush1.msra.mxu0 %v1062
    %1224 = vmatprep.subr.mxu0 0.0
    %1225 = vmatpush1.msra.mxu0 %v1063
    %1226 = vmatprep.subr.mxu0 0.0
    %1227 = vmatpush1.msra.mxu0 %v1064
    %1228 = vmatprep.subr.mxu0 0.0
    %1229 = vmatpush1.msra.mxu0 %v1065
    %1230 = vmatprep.subr.mxu0 0.0
    %1231 = vmatpush1.msra.mxu0 %v1066
    %1232 = vmatprep.subr.mxu0 0.0
    %1233 = vmatpush1.msra.mxu0 %v1067
    %1234 = vmatprep.subr.mxu0 0.0
    %1235 = vmatpush1.msra.mxu0 %v1068
    %1236 = vmatprep.subr.mxu0 0.0
    %1237 = vmatpush1.msra.mxu0 %v1069
    %1238 = vmatprep.subr.mxu0 0.0
    %1239 = vmatpush1.msra.mxu0 %v1070
    %1240 = vmatprep.subr.mxu0 0.0
    %1241 = vmatpush1.msra.mxu0 %v1071
    %1242 = vmatprep.subr.mxu0 0.0
    %1243 = vmatpush1.msra.mxu0 %v1072
    %1244 = vmatprep.subr.mxu0 0.0
    %1245 = vmatpush1.msra.mxu0 %v1073
    %1246 = vmatprep.subr.mxu0 0.0
    %1247 = vmatpush1.msra.mxu0 %v1074
    %1248 = vmatprep.subr.mxu0 0.0
    %1249 = vmatpush1.msra.mxu0 %v1075
    %1250 = vmatprep.subr.mxu0 0.0
    %1251 = vmatpush1.msra.mxu0 %v1076
    %1252 = vmatprep.subr.mxu0 0.0
    %1253 = vmatpush1.msra.mxu0 %v1077
    %1254 = vmatprep.mubr.f32.mxu0 %v1038
    %1255 = vmatmul.mubr.f32.gmra.mrb[0].mxu0 %v1037
    %v1256 = vpop.f32.mrb[0].mxu0
    %v1257 = vadd.f32 0.0, %v1256
    %v1258 = vpop.f32.mrb[0].mxu0
    %1259 = vdwg.mxu0
    %1260 = vmatprep.subr.mxu0 0.0
    %1261 = vmatpush1.msra.mxu0 %v1078
    %1262 = vmatprep.subr.mxu0 0.0
    %1263 = vmatpush1.msra.mxu0 %v1079
    %1264 = vmatprep.subr.mxu0 0.0
    %1265 = vmatpush1.msra.mxu0 %v1080
    %1266 = vmatprep.subr.mxu0 0.0
    %1267 = vmatpush1.msra.mxu0 %v1081
    %1268 = vmatprep.subr.mxu0 0.0
    %1269 = vmatpush1.msra.mxu0 %v1082
    %1270 = vmatprep.subr.mxu0 0.0
    %1271 = vmatpush1.msra.mxu0 %v1083
    %1272 = vmatprep.subr.mxu0 0.0
    %1273 = vmatpush1.msra.mxu0 %v1084
    %1274 = vmatprep.subr.mxu0 0.0
    %1275 = vmatpush1.msra.mxu0 %v1085
    %1276 = vmatprep.subr.mxu0 0.0
    %1277 = vmatpush1.msra.mxu0 %v1086
    %1278 = vmatprep.subr.mxu0 0.0
    %1279 = vmatpush1.msra.mxu0 %v1087
    %1280 = vmatprep.subr.mxu0 0.0
    %1281 = vmatpush1.msra.mxu0 %v1088
    %1282 = vmatprep.subr.mxu0 0.0
    %1283 = vmatpush1.msra.mxu0 %v1089
    %1284 = vmatprep.subr.mxu0 0.0
    %1285 = vmatpush1.msra.mxu0 %v1090
    %1286 = vmatprep.subr.mxu0 0.0
    %1287 = vmatpush1.msra.mxu0 %v1091
    %1288 = vmatprep.subr.mxu0 0.0
    %1289 = vmatpush1.msra.mxu0 %v1092
    %1290 = vmatprep.subr.mxu0 0.0
    %1291 = vmatpush1.msra.mxu0 %v1093
    %1292 = vmatprep.subr.mxu0 0.0
    %1293 = vmatpush1.msra.mxu0 %v1094
    %1294 = vmatprep.subr.mxu0 0.0
    %1295 = vmatpush1.msra.mxu0 %v1095
    %1296 = vmatprep.subr.mxu0 0.0
    %1297 = vmatpush1.msra.mxu0 %v1096
    %1298 = vmatprep.subr.mxu0 0.0
    %1299 = vmatpush1.msra.mxu0 %v1097
    %1300 = vmatprep.subr.mxu0 0.0
    %1301 = vmatpush1.msra.mxu0 %v1098
    %1302 = vmatprep.subr.mxu0 0.0
    %1303 = vmatpush1.msra.mxu0 %v1099
    %1304 = vmatprep.subr.mxu0 0.0
    %1305 = vmatpush1.msra.mxu0 %v1100
    %1306 = vmatprep.subr.mxu0 0.0
    %1307 = vmatpush1.msra.mxu0 %v1101
    %1308 = vmatprep.subr.mxu0 0.0
    %1309 = vmatpush1.msra.mxu0 %v1102
    %1310 = vmatprep.subr.mxu0 0.0
    %1311 = vmatpush1.msra.mxu0 %v1103
    %1312 = vmatprep.subr.mxu0 0.0
    %1313 = vmatpush1.msra.mxu0 %v1104
    %1314 = vmatprep.subr.mxu0 0.0
    %1315 = vmatpush1.msra.mxu0 %v1105
    %1316 = vmatprep.subr.mxu0 0.0
    %1317 = vmatpush1.msra.mxu0 %v1106
    %1318 = vmatprep.subr.mxu0 0.0
    %1319 = vmatpush1.msra.mxu0 %v1107
    %1320 = vmatprep.subr.mxu0 0.0
    %1321 = vmatpush1.msra.mxu0 %v1108
    %1322 = vmatprep.subr.mxu0 0.0
    %1323 = vmatpush1.msra.mxu0 %v1109
    %1324 = vmatprep.mubr.f32.mxu0 %v1040
    %1325 = vmatmul.mubr.f32.gmra.mrb[0].mxu0 %v1039
    %v1326 = vpop.f32.mrb[0].mxu0
    %v1327 = vadd.f32 %v1257, %v1326
    %v1328 = vpop.f32.mrb[0].mxu0
    %1329 = vdwg.mxu0
    %1330 = vmatprep.subr.mxu0 0.0
    %1331 = vmatpush1.msra.mxu0 %v1110
    %1332 = vmatprep.subr.mxu0 0.0
    %1333 = vmatpush1.msra.mxu0 %v1111
    %1334 = vmatprep.subr.mxu0 0.0
    %1335 = vmatpush1.msra.mxu0 %v1112
    %1336 = vmatprep.subr.mxu0 0.0
    %1337 = vmatpush1.msra.mxu0 %v1113
    %1338 = vmatprep.subr.mxu0 0.0
    %1339 = vmatpush1.msra.mxu0 %v1114
    %1340 = vmatprep.subr.mxu0 0.0
    %1341 = vmatpush1.msra.mxu0 %v1115
    %1342 = vmatprep.subr.mxu0 0.0
    %1343 = vmatpush1.msra.mxu0 %v1116
    %1344 = vmatprep.subr.mxu0 0.0
    %1345 = vmatpush1.msra.mxu0 %v1117
    %1346 = vmatprep.subr.mxu0 0.0
    %1347 = vmatpush1.msra.mxu0 %v1118
    %1348 = vmatprep.subr.mxu0 0.0
    %1349 = vmatpush1.msra.mxu0 %v1119
    %1350 = vmatprep.subr.mxu0 0.0
    %1351 = vmatpush1.msra.mxu0 %v1120
    %1352 = vmatprep.subr.mxu0 0.0
    %1353 = vmatpush1.msra.mxu0 %v1121
    %1354 = vmatprep.subr.mxu0 0.0
    %1355 = vmatpush1.msra.mxu0 %v1122
    %1356 = vmatprep.subr.mxu0 0.0
    %1357 = vmatpush1.msra.mxu0 %v1123
    %1358 = vmatprep.subr.mxu0 0.0
    %1359 = vmatpush1.msra.mxu0 %v1124
    %1360 = vmatprep.subr.mxu0 0.0
    %1361 = vmatpush1.msra.mxu0 %v1125
    %1362 = vmatprep.subr.mxu0 0.0
    %1363 = vmatpush1.msra.mxu0 %v1126
    %1364 = vmatprep.subr.mxu0 0.0
    %1365 = vmatpush1.msra.mxu0 %v1127
    %1366 = vmatprep.subr.mxu0 0.0
    %1367 = vmatpush1.msra.mxu0 %v1128
    %1368 = vmatprep.subr.mxu0 0.0
    %1369 = vmatpush1.msra.mxu0 %v1129
    %1370 = vmatprep.subr.mxu0 0.0
    %1371 = vmatpush1.msra.mxu0 %v1130
    %1372 = vmatprep.subr.mxu0 0.0
    %1373 = vmatpush1.msra.mxu0 %v1131
    %1374 = vmatprep.subr.mxu0 0.0
    %1375 = vmatpush1.msra.mxu0 %v1132
    %1376 = vmatprep.subr.mxu0 0.0
    %1377 = vmatpush1.msra.mxu0 %v1133
    %1378 = vmatprep.subr.mxu0 0.0
    %1379 = vmatpush1.msra.mxu0 %v1134
    %1380 = vmatprep.subr.mxu0 0.0
    %1381 = vmatpush1.msra.mxu0 %v1135
    %1382 = vmatprep.subr.mxu0 0.0
    %1383 = vmatpush1.msra.mxu0 %v1136
    %1384 = vmatprep.subr.mxu0 0.0
    %1385 = vmatpush1.msra.mxu0 %v1137
    %1386 = vmatprep.subr.mxu0 0.0
    %1387 = vmatpush1.msra.mxu0 %v1138
    %1388 = vmatprep.subr.mxu0 0.0
    %1389 = vmatpush1.msra.mxu0 %v1139
    %1390 = vmatprep.subr.mxu0 0.0
    %1391 = vmatpush1.msra.mxu0 %v1140
    %1392 = vmatprep.subr.mxu0 0.0
    %1393 = vmatpush1.msra.mxu0 %v1141
    %1394 = vmatprep.mubr.f32.mxu0 %v1042
    %1395 = vmatmul.mubr.f32.gmra.mrb[0].mxu0 %v1041
    %v1396 = vpop.f32.mrb[0].mxu0
    %v1397 = vadd.f32 %v1327, %v1396
    %v1398 = vpop.f32.mrb[0].mxu0
    %1399 = vdwg.mxu0
    %1400 = vmatprep.subr.mxu0 0.0
    %1401 = vmatpush1.msra.mxu0 %v1142
    %1402 = vmatprep.subr.mxu0 0.0
    %1403 = vmatpush1.msra.mxu0 %v1143
    %1404 = vmatprep.subr.mxu0 0.0
    %1405 = vmatpush1.msra.mxu0 %v1144
    %1406 = vmatprep.subr.mxu0 0.0
    %1407 = vmatpush1.msra.mxu0 %v1145
    %1408 = vmatprep.subr.mxu0 0.0
    %1409 = vmatpush1.msra.mxu0 %v1146
    %1410 = vmatprep.subr.mxu0 0.0
    %1411 = vmatpush1.msra.mxu0 %v1147
    %1412 = vmatprep.subr.mxu0 0.0
    %1413 = vmatpush1.msra.mxu0 %v1148
    %1414 = vmatprep.subr.mxu0 0.0
    %1415 = vmatpush1.msra.mxu0 %v1149
    %1416 = vmatprep.subr.mxu0 0.0
    %1417 = vmatpush1.msra.mxu0 %v1150
    %1418 = vmatprep.subr.mxu0 0.0
    %1419 = vmatpush1.msra.mxu0 %v1151
    %1420 = vmatprep.subr.mxu0 0.0
    %1421 = vmatpush1.msra.mxu0 %v1152
    %1422 = vmatprep.subr.mxu0 0.0
    %1423 = vmatpush1.msra.mxu0 %v1153
    %1424 = vmatprep.subr.mxu0 0.0
    %1425 = vmatpush1.msra.mxu0 %v1154
    %1426 = vmatprep.subr.mxu0 0.0
    %1427 = vmatpush1.msra.mxu0 %v1155
    %1428 = vmatprep.subr.mxu0 0.0
    %1429 = vmatpush1.msra.mxu0 %v1156
    %1430 = vmatprep.subr.mxu0 0.0
    %1431 = vmatpush1.msra.mxu0 %v1157
    %1432 = vmatprep.subr.mxu0 0.0
    %1433 = vmatpush1.msra.mxu0 %v1158
    %1434 = vmatprep.subr.mxu0 0.0
    %1435 = vmatpush1.msra.mxu0 %v1159
    %1436 = vmatprep.subr.mxu0 0.0
    %1437 = vmatpush1.msra.mxu0 %v1160
    %1438 = vmatprep.subr.mxu0 0.0
    %1439 = vmatpush1.msra.mxu0 %v1161
    %1440 = vmatprep.subr.mxu0 0.0
    %1441 = vmatpush1.msra.mxu0 %v1162
    %1442 = vmatprep.subr.mxu0 0.0
    %1443 = vmatpush1.msra.mxu0 %v1163
    %1444 = vmatprep.subr.mxu0 0.0
    %1445 = vmatpush1.msra.mxu0 %v1164
    %1446 = vmatprep.subr.mxu0 0.0
    %1447 = vmatpush1.msra.mxu0 %v1165
    %1448 = vmatprep.subr.mxu0 0.0
    %1449 = vmatpush1.msra.mxu0 %v1166
    %1450 = vmatprep.subr.mxu0 0.0
    %1451 = vmatpush1.msra.mxu0 %v1167
    %1452 = vmatprep.subr.mxu0 0.0
    %1453 = vmatpush1.msra.mxu0 %v1168
    %1454 = vmatprep.subr.mxu0 0.0
    %1455 = vmatpush1.msra.mxu0 %v1169
    %1456 = vmatprep.subr.mxu0 0.0
    %1457 = vmatpush1.msra.mxu0 %v1170
    %1458 = vmatprep.subr.mxu0 0.0
    %1459 = vmatpush1.msra.mxu0 %v1171
    %1460 = vmatprep.subr.mxu0 0.0
    %1461 = vmatpush1.msra.mxu0 %v1172
    %1462 = vmatprep.subr.mxu0 0.0
    %1463 = vmatpush1.msra.mxu0 %v1173
    %1464 = vmatprep.mubr.f32.mxu0 %v1044
    %1465 = vmatmul.mubr.f32.gmra.mrb[0].mxu0 %v1043
    %v1466 = vpop.f32.mrb[0].mxu0
    %v1467 = vadd.f32 %v1397, %v1466
    %v1468 = vpop.f32.mrb[0].mxu0
    %1469 = vdwg.mxu0
    %1470 = vmatprep.subr.mxu0 0.0
    %1471 = vmatpush1.msra.mxu0 %v1174
    %1472 = vmatprep.subr.mxu0 0.0
    %1473 = vmatpush1.msra.mxu0 %v1175
    %1474 = vmatprep.subr.mxu0 0.0
    %1475 = vmatpush1.msra.mxu0 %v1176
    %1476 = vmatprep.subr.mxu0 0.0
    %1477 = vmatpush1.msra.mxu0 %v1177
    %1478 = vmatprep.subr.mxu0 0.0
    %1479 = vmatpush1.msra.mxu0 %v1178
    %1480 = vmatprep.subr.mxu0 0.0
    %1481 = vmatpush1.msra.mxu0 %v1179
    %1482 = vmatprep.subr.mxu0 0.0
    %1483 = vmatpush1.msra.mxu0 %v1180
    %1484 = vmatprep.subr.mxu0 0.0
    %1485 = vmatpush1.msra.mxu0 %v1181
    %1486 = vmatprep.subr.mxu0 0.0
    %1487 = vmatpush1.msra.mxu0 %v1182
    %1488 = vmatprep.subr.mxu0 0.0
    %1489 = vmatpush1.msra.mxu0 %v1183
    %1490 = vmatprep.subr.mxu0 0.0
    %1491 = vmatpush1.msra.mxu0 %v1184
    %1492 = vmatprep.subr.mxu0 0.0
    %1493 = vmatpush1.msra.mxu0 %v1185
    %1494 = vmatprep.subr.mxu0 0.0
    %1495 = vmatpush1.msra.mxu0 %v1186
    %1496 = vmatprep.subr.mxu0 0.0
    %1497 = vmatpush1.msra.mxu0 %v1187
    %1498 = vmatprep.subr.mxu0 0.0
    %1499 = vmatpush1.msra.mxu0 %v1188
    %1500 = vmatprep.subr.mxu0 0.0
    %1501 = vmatpush1.msra.mxu0 %v1189
    %1502 = vmatprep.subr.mxu0 0.0
    %1503 = vmatpush1.msra.mxu0 0.0
    %1504 = vmatprep.subr.mxu0 0.0
    %1505 = vmatpush1.msra.mxu0 0.0
    %1506 = vmatprep.subr.mxu0 0.0
    %1507 = vmatpush1.msra.mxu0 0.0
    %1508 = vmatprep.subr.mxu0 0.0
    %1509 = vmatpush1.msra.mxu0 0.0
    %1510 = vmatprep.subr.mxu0 0.0
    %1511 = vmatpush1.msra.mxu0 0.0
    %1512 = vmatprep.subr.mxu0 0.0
    %1513 = vmatpush1.msra.mxu0 0.0
    %1514 = vmatprep.subr.mxu0 0.0
    %1515 = vmatpush1.msra.mxu0 0.0
    %1516 = vmatprep.subr.mxu0 0.0
    %1517 = vmatpush1.msra.mxu0 0.0
    %1518 = vmatprep.subr.mxu0 0.0
    %1519 = vmatpush1.msra.mxu0 0.0
    %1520 = vmatprep.subr.mxu0 0.0
    %1521 = vmatpush1.msra.mxu0 0.0
    %1522 = vmatprep.subr.mxu0 0.0
    %1523 = vmatpush1.msra.mxu0 0.0
    %1524 = vmatprep.subr.mxu0 0.0
    %1525 = vmatpush1.msra.mxu0 0.0
    %1526 = vmatprep.subr.mxu0 0.0
    %1527 = vmatpush1.msra.mxu0 0.0
    %1528 = vmatprep.subr.mxu0 0.0
    %1529 = vmatpush1.msra.mxu0 0.0
    %1530 = vmatprep.subr.mxu0 0.0
    %1531 = vmatpush1.msra.mxu0 0.0
    %1532 = vmatprep.subr.mxu0 0.0
    %1533 = vmatpush1.msra.mxu0 0.0
    %1534 = vmatprep.mubr.f32.mxu0 0.0
    %1535 = vmatmul.mubr.f32.gmra.mrb[0].mxu0 %v1045
    %v1536 = vpop.f32.mrb[0].mxu0
    %v1537 = vadd.f32 %v1467, %v1536
    %v1538 = vpop.f32.mrb[0].mxu0
    %1539 = vdwg.mxu0
    %1540 = vst [vmem:[#allocation2] sm:$0xff] %v1537
    %v1541 = vld [vmem:[#allocation2] sm:$0xff]
    %v1542 = vsub.f32 0.0, %v1541
    %v1543 = vmul.f32 %v1542, 1.442695
    %v1544 = vpow.pop %v1543
    %v1545 = vadd.f32 %v1544, 1.0
    %v1546 = vrcp.pop %v1545
    %v1547 = vmul.f32 %v1541, %v1546
    %1548 = vst [vmem:[#allocation3] sm:$0xff] %v1547
    %v1549 = vsub.f32 %v1541, -2.2
    %v1550 = vmul.f32 %v1549, 2.5
    %v1551 = vfloor.f32 %v1550
    %v1552 = vsub.f32 %v1550, %v1551
    %v1553 = vmul.f32 %v1552, %v1552
    %v1554 = vmul.f32 %v1553, %v1552
    %v1555 = vmul.f32 %v1554, 0.16666667
    %v1556 = vsub.f32 1.0, %v1552
    %v1557 = vmul.f32 %v1556, %v1556
    %v1558 = vmul.f32 %v1557, %v1556
    %v1559 = vmul.f32 %v1558, 0.16666667
    %v1560 = vmul.f32 %v1552, 0.5
    %v1561 = vsub.f32 %v1560, 1.0
    %v1562 = vmul.f32 %v1553, %v1561
    %v1563 = vadd.f32 %v1562, 0.6666667
    %v1564 = vadd.f32 %v1559, %v1563
    %v1565 = vadd.f32 %v1564, %v1555
    %v1566 = vsub.f32 1.0, %v1565
    %vm1567 = vcmp.eq.f32.partialorder %v1551, 0.0
    %vm1568 = vcmp.eq.f32.partialorder %v1551, 1.0
    %vm1569 = vcmp.eq.f32.partialorder %v1551, 2.0
    %vm1570 = vcmp.eq.f32.partialorder %v1551, 3.0
    %v1571 = vsel %vm1570, %v1559, 0.0
    %v1572 = vsel %vm1569, %v1563, %v1571
    %v1573 = vsel %vm1568, %v1566, %v1572
    %v1574 = vsel %vm1567, %v1555, %v1573
    %1575 = vst [vmem:[#allocation3 + $0x8] sm:$0xff] %v1574
    %v1576 = vsub.f32 %v1551, 1.0
    %vm1577 = vcmp.eq.f32.partialorder %v1576, 0.0
    %vm1578 = vcmp.eq.f32.partialorder %v1576, 1.0
    %vm1579 = vcmp.eq.f32.partialorder %v1576, 2.0
    %vm1580 = vcmp.eq.f32.partialorder %v1576, 3.0
    %v1581 = vsel %vm1580, %v1559, 0.0
    %v1582 = vsel %vm1579, %v1563, %v1581
    %v1583 = vsel %vm1578, %v1566, %v1582
    %v1584 = vsel %vm1577, %v1555, %v1583
    %1585 = vst [vmem:[#allocation3 + $0x10] sm:$0xff] %v1584
    %v1586 = vsub.f32 %v1551, 2.0
    %vm1587 = vcmp.eq.f32.partialorder %v1586, 0.0
    %vm1588 = vcmp.eq.f32.partialorder %v1586, 1.0
    %vm1589 = vcmp.eq.f32.partialorder %v1586, 2.0
    %vm1590 = vcmp.eq.f32.partialorder %v1586, 3.0
    %v1591 = vsel %vm1590, %v1559, 0.0
    %v1592 = vsel %vm1589, %v1563, %v1591
    %v1593 = vsel %vm1588, %v1566, %v1592
    %v1594 = vsel %vm1587, %v1555, %v1593
    %1595 = vst [vmem:[#allocation3 + $0x18] sm:$0xff] %v1594
    %v1596 = vsub.f32 %v1551, 3.0
    %vm1597 = vcmp.eq.f32.partialorder %v1596, 0.0
    %vm1598 = vcmp.eq.f32.partialorder %v1596, 1.0
    %vm1599 = vcmp.eq.f32.partialorder %v1596, 2.0
    %vm1600 = vcmp.eq.f32.partialorder %v1596, 3.0
    %v1601 = vsel %vm1600, %v1559, 0.0
    %v1602 = vsel %vm1599, %v1563, %v1601
    %v1603 = vsel %vm1598, %v1566, %v1602
    %v1604 = vsel %vm1597, %v1555, %v1603
    %1605 = vst [vmem:[#allocation3 + $0x20] sm:$0xff] %v1604
    %v1606 = vsub.f32 %v1551, 4.0
    %vm1607 = vcmp.eq.f32.partialorder %v1606, 0.0
    %vm1608 = vcmp.eq.f32.partialorder %v1606, 1.0
    %vm1609 = vcmp.eq.f32.partialorder %v1606, 2.0
    %vm1610 = vcmp.eq.f32.partialorder %v1606, 3.0
    %v1611 = vsel %vm1610, %v1559, 0.0
    %v1612 = vsel %vm1609, %v1563, %v1611
    %v1613 = vsel %vm1608, %v1566, %v1612
    %v1614 = vsel %vm1607, %v1555, %v1613
    %1615 = vst [vmem:[#allocation3 + $0x28] sm:$0xff] %v1614
    %v1616 = vsub.f32 %v1551, 5.0
    %vm1617 = vcmp.eq.f32.partialorder %v1616, 0.0
    %vm1618 = vcmp.eq.f32.partialorder %v1616, 1.0
    %vm1619 = vcmp.eq.f32.partialorder %v1616, 2.0
    %vm1620 = vcmp.eq.f32.partialorder %v1616, 3.0
    %v1621 = vsel %vm1620, %v1559, 0.0
    %v1622 = vsel %vm1619, %v1563, %v1621
    %v1623 = vsel %vm1618, %v1566, %v1622
    %v1624 = vsel %vm1617, %v1555, %v1623
    %1625 = vst [vmem:[#allocation3 + $0x30] sm:$0xff] %v1624
    %v1626 = vsub.f32 %v1551, 6.0
    %vm1627 = vcmp.eq.f32.partialorder %v1626, 0.0
    %vm1628 = vcmp.eq.f32.partialorder %v1626, 1.0
    %vm1629 = vcmp.eq.f32.partialorder %v1626, 2.0
    %vm1630 = vcmp.eq.f32.partialorder %v1626, 3.0
    %v1631 = vsel %vm1630, %v1559, 0.0
    %v1632 = vsel %vm1629, %v1563, %v1631
    %v1633 = vsel %vm1628, %v1566, %v1632
    %v1634 = vsel %vm1627, %v1555, %v1633
    %1635 = vst [vmem:[#allocation3 + $0x38] sm:$0xff] %v1634
    %v1636 = vsub.f32 %v1551, 7.0
    %vm1637 = vcmp.eq.f32.partialorder %v1636, 0.0
    %vm1638 = vcmp.eq.f32.partialorder %v1636, 1.0
    %vm1639 = vcmp.eq.f32.partialorder %v1636, 2.0
    %vm1640 = vcmp.eq.f32.partialorder %v1636, 3.0
    %v1641 = vsel %vm1640, %v1559, 0.0
    %v1642 = vsel %vm1639, %v1563, %v1641
    %v1643 = vsel %vm1638, %v1566, %v1642
    %v1644 = vsel %vm1637, %v1555, %v1643
    %1645 = vst [vmem:[#allocation3 + $0x40] sm:$0xff] %v1644
    %v1646 = vld [vmem:[#allocation3] sm:$0xff]
    %v1647 = vld [vmem:[#allocation3 + $0x8] sm:$0xff]
    %v1648 = vld [vmem:[#allocation3 + $0x10] sm:$0xff]
    %v1649 = vld [vmem:[#allocation3 + $0x18] sm:$0xff]
    %v1650 = vld [vmem:[#allocation3 + $0x20] sm:$0xff]
    %v1651 = vld [vmem:[#allocation3 + $0x28] sm:$0xff]
    %v1652 = vld [vmem:[#allocation3 + $0x30] sm:$0xff]
    %v1653 = vld [vmem:[#allocation3 + $0x38] sm:$0xff]
    %v1654 = vld [vmem:[#allocation3 + $0x40] sm:$0xff]
    %v1655 = vld [vmem:[#allocation7] sm:$0xff]
    %v1656 = vld [vmem:[#allocation7 + $0x8] sm:$0xff]
    %v1657 = vld [vmem:[#allocation7 + $0x10] sm:$0xff]
    %v1658 = vld [vmem:[#allocation7 + $0x18] sm:$0xff]
    %v1659 = vld [vmem:[#allocation7 + $0x20] sm:$0xff]
    %v1660 = vld [vmem:[#allocation7 + $0x28] sm:$0xff]
    %v1661 = vld [vmem:[#allocation7 + $0x30] sm:$0xff]
    %v1662 = vld [vmem:[#allocation7 + $0x38] sm:$0xff]
    %v1663 = vld [vmem:[#allocation7 + $0x40] sm:$0xff]
    %v1664 = vld [vmem:[#allocation7 + $0x48] sm:$0xff]
    %v1665 = vld [vmem:[#allocation7 + $0x50] sm:$0xff]
    %v1666 = vld [vmem:[#allocation7 + $0x58] sm:$0xff]
    %v1667 = vld [vmem:[#allocation7 + $0x60] sm:$0xff]
    %v1668 = vld [vmem:[#allocation7 + $0x68] sm:$0xff]
    %v1669 = vld [vmem:[#allocation7 + $0x70] sm:$0xff]
    %v1670 = vld [vmem:[#allocation7 + $0x78] sm:$0xff]
    %v1671 = vld [vmem:[#allocation7 + $0x80] sm:$0xff]
    %v1672 = vld [vmem:[#allocation7 + $0x88] sm:$0xff]
    %v1673 = vld [vmem:[#allocation7 + $0x90] sm:$0xff]
    %v1674 = vld [vmem:[#allocation7 + $0x98] sm:$0xff]
    %v1675 = vld [vmem:[#allocation7 + $0xa0] sm:$0xff]
    %v1676 = vld [vmem:[#allocation7 + $0xa8] sm:$0xff]
    %v1677 = vld [vmem:[#allocation7 + $0xb0] sm:$0xff]
    %v1678 = vld [vmem:[#allocation7 + $0xb8] sm:$0xff]
    %v1679 = vld [vmem:[#allocation7 + $0xc0] sm:$0xff]
    %v1680 = vld [vmem:[#allocation7 + $0xc8] sm:$0xff]
    %v1681 = vld [vmem:[#allocation7 + $0xd0] sm:$0xff]
    %v1682 = vld [vmem:[#allocation7 + $0xd8] sm:$0xff]
    %v1683 = vld [vmem:[#allocation7 + $0xe0] sm:$0xff]
    %v1684 = vld [vmem:[#allocation7 + $0xe8] sm:$0xff]
    %v1685 = vld [vmem:[#allocation7 + $0xf0] sm:$0xff]
    %v1686 = vld [vmem:[#allocation7 + $0xf8] sm:$0xff]
    %v1687 = vld [vmem:[#allocation7 + $0x100] sm:$0xff]
    %v1688 = vld [vmem:[#allocation7 + $0x108] sm:$0xff]
    %v1689 = vld [vmem:[#allocation7 + $0x110] sm:$0xff]
    %v1690 = vld [vmem:[#allocation7 + $0x118] sm:$0xff]
    %v1691 = vld [vmem:[#allocation7 + $0x120] sm:$0xff]
    %v1692 = vld [vmem:[#allocation7 + $0x128] sm:$0xff]
    %v1693 = vld [vmem:[#allocation7 + $0x130] sm:$0xff]
    %v1694 = vld [vmem:[#allocation7 + $0x138] sm:$0xff]
    %v1695 = vld [vmem:[#allocation7 + $0x140] sm:$0xff]
    %v1696 = vld [vmem:[#allocation7 + $0x148] sm:$0xff]
    %v1697 = vld [vmem:[#allocation7 + $0x150] sm:$0xff]
    %v1698 = vld [vmem:[#allocation7 + $0x158] sm:$0xff]
    %v1699 = vld [vmem:[#allocation7 + $0x160] sm:$0xff]
    %v1700 = vld [vmem:[#allocation7 + $0x168] sm:$0xff]
    %v1701 = vld [vmem:[#allocation7 + $0x170] sm:$0xff]
    %v1702 = vld [vmem:[#allocation7 + $0x178] sm:$0xff]
    %v1703 = vld [vmem:[#allocation7 + $0x180] sm:$0xff]
    %v1704 = vld [vmem:[#allocation7 + $0x188] sm:$0xff]
    %v1705 = vld [vmem:[#allocation7 + $0x190] sm:$0xff]
    %v1706 = vld [vmem:[#allocation7 + $0x198] sm:$0xff]
    %v1707 = vld [vmem:[#allocation7 + $0x1a0] sm:$0xff]
    %v1708 = vld [vmem:[#allocation7 + $0x1a8] sm:$0xff]
    %v1709 = vld [vmem:[#allocation7 + $0x1b0] sm:$0xff]
    %v1710 = vld [vmem:[#allocation7 + $0x1b8] sm:$0xff]
    %v1711 = vld [vmem:[#allocation7 + $0x1c0] sm:$0xff]
    %v1712 = vld [vmem:[#allocation7 + $0x1c8] sm:$0xff]
    %v1713 = vld [vmem:[#allocation7 + $0x1d0] sm:$0xff]
    %v1714 = vld [vmem:[#allocation7 + $0x1d8] sm:$0xff]
    %v1715 = vld [vmem:[#allocation7 + $0x1e0] sm:$0xff]
    %v1716 = vld [vmem:[#allocation7 + $0x1e8] sm:$0xff]
    %v1717 = vld [vmem:[#allocation7 + $0x1f0] sm:$0xff]
    %v1718 = vld [vmem:[#allocation7 + $0x1f8] sm:$0xff]
    %v1719 = vld [vmem:[#allocation7 + $0x200] sm:$0xff]
    %v1720 = vld [vmem:[#allocation7 + $0x208] sm:$0xff]
    %v1721 = vld [vmem:[#allocation7 + $0x210] sm:$0xff]
    %v1722 = vld [vmem:[#allocation7 + $0x218] sm:$0xff]
    %v1723 = vld [vmem:[#allocation7 + $0x220] sm:$0xff]
    %v1724 = vld [vmem:[#allocation7 + $0x228] sm:$0xff]
    %v1725 = vld [vmem:[#allocation7 + $0x230] sm:$0xff]
    %v1726 = vld [vmem:[#allocation7 + $0x238] sm:$0xff]
    %v1727 = vld [vmem:[#allocation7 + $0x240] sm:$0xff]
    %v1728 = vld [vmem:[#allocation7 + $0x248] sm:$0xff]
    %v1729 = vld [vmem:[#allocation7 + $0x250] sm:$0xff]
    %v1730 = vld [vmem:[#allocation7 + $0x258] sm:$0xff]
    %v1731 = vld [vmem:[#allocation7 + $0x260] sm:$0xff]
    %v1732 = vld [vmem:[#allocation7 + $0x268] sm:$0xff]
    %v1733 = vld [vmem:[#allocation7 + $0x270] sm:$0xff]
    %v1734 = vld [vmem:[#allocation7 + $0x278] sm:$0xff]
    %v1735 = vld [vmem:[#allocation7 + $0x280] sm:$0xff]
    %v1736 = vld [vmem:[#allocation7 + $0x288] sm:$0xff]
    %v1737 = vld [vmem:[#allocation7 + $0x290] sm:$0xff]
    %v1738 = vld [vmem:[#allocation7 + $0x298] sm:$0xff]
    %v1739 = vld [vmem:[#allocation7 + $0x2a0] sm:$0xff]
    %v1740 = vld [vmem:[#allocation7 + $0x2a8] sm:$0xff]
    %v1741 = vld [vmem:[#allocation7 + $0x2b0] sm:$0xff]
    %v1742 = vld [vmem:[#allocation7 + $0x2b8] sm:$0xff]
    %v1743 = vld [vmem:[#allocation7 + $0x2c0] sm:$0xff]
    %v1744 = vld [vmem:[#allocation7 + $0x2c8] sm:$0xff]
    %v1745 = vld [vmem:[#allocation7 + $0x2d0] sm:$0xff]
    %v1746 = vld [vmem:[#allocation7 + $0x2d8] sm:$0xff]
    %v1747 = vld [vmem:[#allocation7 + $0x2e0] sm:$0xff]
    %v1748 = vld [vmem:[#allocation7 + $0x2e8] sm:$0xff]
    %v1749 = vld [vmem:[#allocation7 + $0x2f0] sm:$0xff]
    %v1750 = vld [vmem:[#allocation7 + $0x2f8] sm:$0xff]
    %v1751 = vld [vmem:[#allocation7 + $0x300] sm:$0xff]
    %v1752 = vld [vmem:[#allocation7 + $0x308] sm:$0xff]
    %v1753 = vld [vmem:[#allocation7 + $0x310] sm:$0xff]
    %v1754 = vld [vmem:[#allocation7 + $0x318] sm:$0xff]
    %v1755 = vld [vmem:[#allocation7 + $0x320] sm:$0xff]
    %v1756 = vld [vmem:[#allocation7 + $0x328] sm:$0xff]
    %v1757 = vld [vmem:[#allocation7 + $0x330] sm:$0xff]
    %v1758 = vld [vmem:[#allocation7 + $0x338] sm:$0xff]
    %v1759 = vld [vmem:[#allocation7 + $0x340] sm:$0xff]
    %v1760 = vld [vmem:[#allocation7 + $0x348] sm:$0xff]
    %v1761 = vld [vmem:[#allocation7 + $0x350] sm:$0xff]
    %v1762 = vld [vmem:[#allocation7 + $0x358] sm:$0xff]
    %v1763 = vld [vmem:[#allocation7 + $0x360] sm:$0xff]
    %v1764 = vld [vmem:[#allocation7 + $0x368] sm:$0xff]
    %v1765 = vld [vmem:[#allocation7 + $0x370] sm:$0xff]
    %v1766 = vld [vmem:[#allocation7 + $0x378] sm:$0xff]
    %v1767 = vld [vmem:[#allocation7 + $0x380] sm:$0xff]
    %v1768 = vld [vmem:[#allocation7 + $0x388] sm:$0xff]
    %v1769 = vld [vmem:[#allocation7 + $0x390] sm:$0xff]
    %v1770 = vld [vmem:[#allocation7 + $0x398] sm:$0xff]
    %v1771 = vld [vmem:[#allocation7 + $0x3a0] sm:$0xff]
    %v1772 = vld [vmem:[#allocation7 + $0x3a8] sm:$0xff]
    %v1773 = vld [vmem:[#allocation7 + $0x3b0] sm:$0xff]
    %v1774 = vld [vmem:[#allocation7 + $0x3b8] sm:$0xff]
    %v1775 = vld [vmem:[#allocation7 + $0x3c0] sm:$0xff]
    %v1776 = vld [vmem:[#allocation7 + $0x3c8] sm:$0xff]
    %v1777 = vld [vmem:[#allocation7 + $0x3d0] sm:$0xff]
    %v1778 = vld [vmem:[#allocation7 + $0x3d8] sm:$0xff]
    %v1779 = vld [vmem:[#allocation7 + $0x3e0] sm:$0xff]
    %v1780 = vld [vmem:[#allocation7 + $0x3e8] sm:$0xff]
    %v1781 = vld [vmem:[#allocation7 + $0x3f0] sm:$0xff]
    %v1782 = vld [vmem:[#allocation7 + $0x3f8] sm:$0xff]
    %v1783 = vld [vmem:[#allocation7 + $0x400] sm:$0xff]
    %v1784 = vld [vmem:[#allocation7 + $0x408] sm:$0xff]
    %v1785 = vld [vmem:[#allocation7 + $0x410] sm:$0xff]
    %v1786 = vld [vmem:[#allocation7 + $0x418] sm:$0xff]
    %v1787 = vld [vmem:[#allocation7 + $0x420] sm:$0xff]
    %v1788 = vld [vmem:[#allocation7 + $0x428] sm:$0xff]
    %v1789 = vld [vmem:[#allocation7 + $0x430] sm:$0xff]
    %v1790 = vld [vmem:[#allocation7 + $0x438] sm:$0xff]
    %v1791 = vld [vmem:[#allocation7 + $0x440] sm:$0xff]
    %v1792 = vld [vmem:[#allocation7 + $0x448] sm:$0xff]
    %v1793 = vld [vmem:[#allocation7 + $0x450] sm:$0xff]
    %v1794 = vld [vmem:[#allocation7 + $0x458] sm:$0xff]
    %v1795 = vld [vmem:[#allocation7 + $0x460] sm:$0xff]
    %v1796 = vld [vmem:[#allocation7 + $0x468] sm:$0xff]
    %v1797 = vld [vmem:[#allocation7 + $0x470] sm:$0xff]
    %v1798 = vld [vmem:[#allocation7 + $0x478] sm:$0xff]
    %1799 = vmatprep.subr.mxu0 0.0
    %1800 = vmatpush1.msra.mxu0 %v1655
    %1801 = vmatprep.subr.mxu0 0.0
    %1802 = vmatpush1.msra.mxu0 %v1656
    %1803 = vmatprep.subr.mxu0 0.0
    %1804 = vmatpush1.msra.mxu0 %v1657
    %1805 = vmatprep.subr.mxu0 0.0
    %1806 = vmatpush1.msra.mxu0 %v1658
    %1807 = vmatprep.subr.mxu0 0.0
    %1808 = vmatpush1.msra.mxu0 %v1659
    %1809 = vmatprep.subr.mxu0 0.0
    %1810 = vmatpush1.msra.mxu0 %v1660
    %1811 = vmatprep.subr.mxu0 0.0
    %1812 = vmatpush1.msra.mxu0 %v1661
    %1813 = vmatprep.subr.mxu0 0.0
    %1814 = vmatpush1.msra.mxu0 %v1662
    %1815 = vmatprep.subr.mxu0 0.0
    %1816 = vmatpush1.msra.mxu0 %v1663
    %1817 = vmatprep.subr.mxu0 0.0
    %1818 = vmatpush1.msra.mxu0 %v1664
    %1819 = vmatprep.subr.mxu0 0.0
    %1820 = vmatpush1.msra.mxu0 %v1665
    %1821 = vmatprep.subr.mxu0 0.0
    %1822 = vmatpush1.msra.mxu0 %v1666
    %1823 = vmatprep.subr.mxu0 0.0
    %1824 = vmatpush1.msra.mxu0 %v1667
    %1825 = vmatprep.subr.mxu0 0.0
    %1826 = vmatpush1.msra.mxu0 %v1668
    %1827 = vmatprep.subr.mxu0 0.0
    %1828 = vmatpush1.msra.mxu0 %v1669
    %1829 = vmatprep.subr.mxu0 0.0
    %1830 = vmatpush1.msra.mxu0 %v1670
    %1831 = vmatprep.subr.mxu0 0.0
    %1832 = vmatpush1.msra.mxu0 %v1671
    %1833 = vmatprep.subr.mxu0 0.0
    %1834 = vmatpush1.msra.mxu0 %v1672
    %1835 = vmatprep.subr.mxu0 0.0
    %1836 = vmatpush1.msra.mxu0 %v1673
    %1837 = vmatprep.subr.mxu0 0.0
    %1838 = vmatpush1.msra.mxu0 %v1674
    %1839 = vmatprep.subr.mxu0 0.0
    %1840 = vmatpush1.msra.mxu0 %v1675
    %1841 = vmatprep.subr.mxu0 0.0
    %1842 = vmatpush1.msra.mxu0 %v1676
    %1843 = vmatprep.subr.mxu0 0.0
    %1844 = vmatpush1.msra.mxu0 %v1677
    %1845 = vmatprep.subr.mxu0 0.0
    %1846 = vmatpush1.msra.mxu0 %v1678
    %1847 = vmatprep.subr.mxu0 0.0
    %1848 = vmatpush1.msra.mxu0 %v1679
    %1849 = vmatprep.subr.mxu0 0.0
    %1850 = vmatpush1.msra.mxu0 %v1680
    %1851 = vmatprep.subr.mxu0 0.0
    %1852 = vmatpush1.msra.mxu0 %v1681
    %1853 = vmatprep.subr.mxu0 0.0
    %1854 = vmatpush1.msra.mxu0 %v1682
    %1855 = vmatprep.subr.mxu0 0.0
    %1856 = vmatpush1.msra.mxu0 %v1683
    %1857 = vmatprep.subr.mxu0 0.0
    %1858 = vmatpush1.msra.mxu0 %v1684
    %1859 = vmatprep.subr.mxu0 0.0
    %1860 = vmatpush1.msra.mxu0 %v1685
    %1861 = vmatprep.subr.mxu0 0.0
    %1862 = vmatpush1.msra.mxu0 %v1686
    %1863 = vmatprep.mubr.f32.mxu0 %v1647
    %1864 = vmatmul.mubr.f32.gmra.mrb[0].mxu0 %v1646
    %v1865 = vpop.f32.mrb[0].mxu0
    %v1866 = vadd.f32 0.0, %v1865
    %v1867 = vpop.f32.mrb[0].mxu0
    %1868 = vdwg.mxu0
    %1869 = vmatprep.subr.mxu0 0.0
    %1870 = vmatpush1.msra.mxu0 %v1687
    %1871 = vmatprep.subr.mxu0 0.0
    %1872 = vmatpush1.msra.mxu0 %v1688
    %1873 = vmatprep.subr.mxu0 0.0
    %1874 = vmatpush1.msra.mxu0 %v1689
    %1875 = vmatprep.subr.mxu0 0.0
    %1876 = vmatpush1.msra.mxu0 %v1690
    %1877 = vmatprep.subr.mxu0 0.0
    %1878 = vmatpush1.msra.mxu0 %v1691
    %1879 = vmatprep.subr.mxu0 0.0
    %1880 = vmatpush1.msra.mxu0 %v1692
    %1881 = vmatprep.subr.mxu0 0.0
    %1882 = vmatpush1.msra.mxu0 %v1693
    %1883 = vmatprep.subr.mxu0 0.0
    %1884 = vmatpush1.msra.mxu0 %v1694
    %1885 = vmatprep.subr.mxu0 0.0
    %1886 = vmatpush1.msra.mxu0 %v1695
    %1887 = vmatprep.subr.mxu0 0.0
    %1888 = vmatpush1.msra.mxu0 %v1696
    %1889 = vmatprep.subr.mxu0 0.0
    %1890 = vmatpush1.msra.mxu0 %v1697
    %1891 = vmatprep.subr.mxu0 0.0
    %1892 = vmatpush1.msra.mxu0 %v1698
    %1893 = vmatprep.subr.mxu0 0.0
    %1894 = vmatpush1.msra.mxu0 %v1699
    %1895 = vmatprep.subr.mxu0 0.0
    %1896 = vmatpush1.msra.mxu0 %v1700
    %1897 = vmatprep.subr.mxu0 0.0
    %1898 = vmatpush1.msra.mxu0 %v1701
    %1899 = vmatprep.subr.mxu0 0.0
    %1900 = vmatpush1.msra.mxu0 %v1702
    %1901 = vmatprep.subr.mxu0 0.0
    %1902 = vmatpush1.msra.mxu0 %v1703
    %1903 = vmatprep.subr.mxu0 0.0
    %1904 = vmatpush1.msra.mxu0 %v1704
    %1905 = vmatprep.subr.mxu0 0.0
    %1906 = vmatpush1.msra.mxu0 %v1705
    %1907 = vmatprep.subr.mxu0 0.0
    %1908 = vmatpush1.msra.mxu0 %v1706
    %1909 = vmatprep.subr.mxu0 0.0
    %1910 = vmatpush1.msra.mxu0 %v1707
    %1911 = vmatprep.subr.mxu0 0.0
    %1912 = vmatpush1.msra.mxu0 %v1708
    %1913 = vmatprep.subr.mxu0 0.0
    %1914 = vmatpush1.msra.mxu0 %v1709
    %1915 = vmatprep.subr.mxu0 0.0
    %1916 = vmatpush1.msra.mxu0 %v1710
    %1917 = vmatprep.subr.mxu0 0.0
    %1918 = vmatpush1.msra.mxu0 %v1711
    %1919 = vmatprep.subr.mxu0 0.0
    %1920 = vmatpush1.msra.mxu0 %v1712
    %1921 = vmatprep.subr.mxu0 0.0
    %1922 = vmatpush1.msra.mxu0 %v1713
    %1923 = vmatprep.subr.mxu0 0.0
    %1924 = vmatpush1.msra.mxu0 %v1714
    %1925 = vmatprep.subr.mxu0 0.0
    %1926 = vmatpush1.msra.mxu0 %v1715
    %1927 = vmatprep.subr.mxu0 0.0
    %1928 = vmatpush1.msra.mxu0 %v1716
    %1929 = vmatprep.subr.mxu0 0.0
    %1930 = vmatpush1.msra.mxu0 %v1717
    %1931 = vmatprep.subr.mxu0 0.0
    %1932 = vmatpush1.msra.mxu0 %v1718
    %1933 = vmatprep.mubr.f32.mxu0 %v1649
    %1934 = vmatmul.mubr.f32.gmra.mrb[0].mxu0 %v1648
    %v1935 = vpop.f32.mrb[0].mxu0
    %v1936 = vadd.f32 %v1866, %v1935
    %v1937 = vpop.f32.mrb[0].mxu0
    %1938 = vdwg.mxu0
    %1939 = vmatprep.subr.mxu0 0.0
    %1940 = vmatpush1.msra.mxu0 %v1719
    %1941 = vmatprep.subr.mxu0 0.0
    %1942 = vmatpush1.msra.mxu0 %v1720
    %1943 = vmatprep.subr.mxu0 0.0
    %1944 = vmatpush1.msra.mxu0 %v1721
    %1945 = vmatprep.subr.mxu0 0.0
    %1946 = vmatpush1.msra.mxu0 %v1722
    %1947 = vmatprep.subr.mxu0 0.0
    %1948 = vmatpush1.msra.mxu0 %v1723
    %1949 = vmatprep.subr.mxu0 0.0
    %1950 = vmatpush1.msra.mxu0 %v1724
    %1951 = vmatprep.subr.mxu0 0.0
    %1952 = vmatpush1.msra.mxu0 %v1725
    %1953 = vmatprep.subr.mxu0 0.0
    %1954 = vmatpush1.msra.mxu0 %v1726
    %1955 = vmatprep.subr.mxu0 0.0
    %1956 = vmatpush1.msra.mxu0 %v1727
    %1957 = vmatprep.subr.mxu0 0.0
    %1958 = vmatpush1.msra.mxu0 %v1728
    %1959 = vmatprep.subr.mxu0 0.0
    %1960 = vmatpush1.msra.mxu0 %v1729
    %1961 = vmatprep.subr.mxu0 0.0
    %1962 = vmatpush1.msra.mxu0 %v1730
    %1963 = vmatprep.subr.mxu0 0.0
    %1964 = vmatpush1.msra.mxu0 %v1731
    %1965 = vmatprep.subr.mxu0 0.0
    %1966 = vmatpush1.msra.mxu0 %v1732
    %1967 = vmatprep.subr.mxu0 0.0
    %1968 = vmatpush1.msra.mxu0 %v1733
    %1969 = vmatprep.subr.mxu0 0.0
    %1970 = vmatpush1.msra.mxu0 %v1734
    %1971 = vmatprep.subr.mxu0 0.0
    %1972 = vmatpush1.msra.mxu0 %v1735
    %1973 = vmatprep.subr.mxu0 0.0
    %1974 = vmatpush1.msra.mxu0 %v1736
    %1975 = vmatprep.subr.mxu0 0.0
    %1976 = vmatpush1.msra.mxu0 %v1737
    %1977 = vmatprep.subr.mxu0 0.0
    %1978 = vmatpush1.msra.mxu0 %v1738
    %1979 = vmatprep.subr.mxu0 0.0
    %1980 = vmatpush1.msra.mxu0 %v1739
    %1981 = vmatprep.subr.mxu0 0.0
    %1982 = vmatpush1.msra.mxu0 %v1740
    %1983 = vmatprep.subr.mxu0 0.0
    %1984 = vmatpush1.msra.mxu0 %v1741
    %1985 = vmatprep.subr.mxu0 0.0
    %1986 = vmatpush1.msra.mxu0 %v1742
    %1987 = vmatprep.subr.mxu0 0.0
    %1988 = vmatpush1.msra.mxu0 %v1743
    %1989 = vmatprep.subr.mxu0 0.0
    %1990 = vmatpush1.msra.mxu0 %v1744
    %1991 = vmatprep.subr.mxu0 0.0
    %1992 = vmatpush1.msra.mxu0 %v1745
    %1993 = vmatprep.subr.mxu0 0.0
    %1994 = vmatpush1.msra.mxu0 %v1746
    %1995 = vmatprep.subr.mxu0 0.0
    %1996 = vmatpush1.msra.mxu0 %v1747
    %1997 = vmatprep.subr.mxu0 0.0
    %1998 = vmatpush1.msra.mxu0 %v1748
    %1999 = vmatprep.subr.mxu0 0.0
    %2000 = vmatpush1.msra.mxu0 %v1749
    %2001 = vmatprep.subr.mxu0 0.0
    %2002 = vmatpush1.msra.mxu0 %v1750
    %2003 = vmatprep.mubr.f32.mxu0 %v1651
    %2004 = vmatmul.mubr.f32.gmra.mrb[0].mxu0 %v1650
    %v2005 = vpop.f32.mrb[0].mxu0
    %v2006 = vadd.f32 %v1936, %v2005
    %v2007 = vpop.f32.mrb[0].mxu0
    %2008 = vdwg.mxu0
    %2009 = vmatprep.subr.mxu0 0.0
    %2010 = vmatpush1.msra.mxu0 %v1751
    %2011 = vmatprep.subr.mxu0 0.0
    %2012 = vmatpush1.msra.mxu0 %v1752
    %2013 = vmatprep.subr.mxu0 0.0
    %2014 = vmatpush1.msra.mxu0 %v1753
    %2015 = vmatprep.subr.mxu0 0.0
    %2016 = vmatpush1.msra.mxu0 %v1754
    %2017 = vmatprep.subr.mxu0 0.0
    %2018 = vmatpush1.msra.mxu0 %v1755
    %2019 = vmatprep.subr.mxu0 0.0
    %2020 = vmatpush1.msra.mxu0 %v1756
    %2021 = vmatprep.subr.mxu0 0.0
    %2022 = vmatpush1.msra.mxu0 %v1757
    %2023 = vmatprep.subr.mxu0 0.0
    %2024 = vmatpush1.msra.mxu0 %v1758
    %2025 = vmatprep.subr.mxu0 0.0
    %2026 = vmatpush1.msra.mxu0 %v1759
    %2027 = vmatprep.subr.mxu0 0.0
    %2028 = vmatpush1.msra.mxu0 %v1760
    %2029 = vmatprep.subr.mxu0 0.0
    %2030 = vmatpush1.msra.mxu0 %v1761
    %2031 = vmatprep.subr.mxu0 0.0
    %2032 = vmatpush1.msra.mxu0 %v1762
    %2033 = vmatprep.subr.mxu0 0.0
    %2034 = vmatpush1.msra.mxu0 %v1763
    %2035 = vmatprep.subr.mxu0 0.0
    %2036 = vmatpush1.msra.mxu0 %v1764
    %2037 = vmatprep.subr.mxu0 0.0
    %2038 = vmatpush1.msra.mxu0 %v1765
    %2039 = vmatprep.subr.mxu0 0.0
    %2040 = vmatpush1.msra.mxu0 %v1766
    %2041 = vmatprep.subr.mxu0 0.0
    %2042 = vmatpush1.msra.mxu0 %v1767
    %2043 = vmatprep.subr.mxu0 0.0
    %2044 = vmatpush1.msra.mxu0 %v1768
    %2045 = vmatprep.subr.mxu0 0.0
    %2046 = vmatpush1.msra.mxu0 %v1769
    %2047 = vmatprep.subr.mxu0 0.0
    %2048 = vmatpush1.msra.mxu0 %v1770
    %2049 = vmatprep.subr.mxu0 0.0
    %2050 = vmatpush1.msra.mxu0 %v1771
    %2051 = vmatprep.subr.mxu0 0.0
    %2052 = vmatpush1.msra.mxu0 %v1772
    %2053 = vmatprep.subr.mxu0 0.0
    %2054 = vmatpush1.msra.mxu0 %v1773
    %2055 = vmatprep.subr.mxu0 0.0
    %2056 = vmatpush1.msra.mxu0 %v1774
    %2057 = vmatprep.subr.mxu0 0.0
    %2058 = vmatpush1.msra.mxu0 %v1775
    %2059 = vmatprep.subr.mxu0 0.0
    %2060 = vmatpush1.msra.mxu0 %v1776
    %2061 = vmatprep.subr.mxu0 0.0
    %2062 = vmatpush1.msra.mxu0 %v1777
    %2063 = vmatprep.subr.mxu0 0.0
    %2064 = vmatpush1.msra.mxu0 %v1778
    %2065 = vmatprep.subr.mxu0 0.0
    %2066 = vmatpush1.msra.mxu0 %v1779
    %2067 = vmatprep.subr.mxu0 0.0
    %2068 = vmatpush1.msra.mxu0 %v1780
    %2069 = vmatprep.subr.mxu0 0.0
    %2070 = vmatpush1.msra.mxu0 %v1781
    %2071 = vmatprep.subr.mxu0 0.0
    %2072 = vmatpush1.msra.mxu0 %v1782
    %2073 = vmatprep.mubr.f32.mxu0 %v1653
    %2074 = vmatmul.mubr.f32.gmra.mrb[0].mxu0 %v1652
    %v2075 = vpop.f32.mrb[0].mxu0
    %v2076 = vadd.f32 %v2006, %v2075
    %v2077 = vpop.f32.mrb[0].mxu0
    %2078 = vdwg.mxu0
    %2079 = vmatprep.subr.mxu0 0.0
    %2080 = vmatpush1.msra.mxu0 %v1783
    %2081 = vmatprep.subr.mxu0 0.0
    %2082 = vmatpush1.msra.mxu0 %v1784
    %2083 = vmatprep.subr.mxu0 0.0
    %2084 = vmatpush1.msra.mxu0 %v1785
    %2085 = vmatprep.subr.mxu0 0.0
    %2086 = vmatpush1.msra.mxu0 %v1786
    %2087 = vmatprep.subr.mxu0 0.0
    %2088 = vmatpush1.msra.mxu0 %v1787
    %2089 = vmatprep.subr.mxu0 0.0
    %2090 = vmatpush1.msra.mxu0 %v1788
    %2091 = vmatprep.subr.mxu0 0.0
    %2092 = vmatpush1.msra.mxu0 %v1789
    %2093 = vmatprep.subr.mxu0 0.0
    %2094 = vmatpush1.msra.mxu0 %v1790
    %2095 = vmatprep.subr.mxu0 0.0
    %2096 = vmatpush1.msra.mxu0 %v1791
    %2097 = vmatprep.subr.mxu0 0.0
    %2098 = vmatpush1.msra.mxu0 %v1792
    %2099 = vmatprep.subr.mxu0 0.0
    %2100 = vmatpush1.msra.mxu0 %v1793
    %2101 = vmatprep.subr.mxu0 0.0
    %2102 = vmatpush1.msra.mxu0 %v1794
    %2103 = vmatprep.subr.mxu0 0.0
    %2104 = vmatpush1.msra.mxu0 %v1795
    %2105 = vmatprep.subr.mxu0 0.0
    %2106 = vmatpush1.msra.mxu0 %v1796
    %2107 = vmatprep.subr.mxu0 0.0
    %2108 = vmatpush1.msra.mxu0 %v1797
    %2109 = vmatprep.subr.mxu0 0.0
    %2110 = vmatpush1.msra.mxu0 %v1798
    %2111 = vmatprep.subr.mxu0 0.0
    %2112 = vmatpush1.msra.mxu0 0.0
    %2113 = vmatprep.subr.mxu0 0.0
    %2114 = vmatpush1.msra.mxu0 0.0
    %2115 = vmatprep.subr.mxu0 0.0
    %2116 = vmatpush1.msra.mxu0 0.0
    %2117 = vmatprep.subr.mxu0 0.0
    %2118 = vmatpush1.msra.mxu0 0.0
    %2119 = vmatprep.subr.mxu0 0.0
    %2120 = vmatpush1.msra.mxu0 0.0
    %2121 = vmatprep.subr.mxu0 0.0
    %2122 = vmatpush1.msra.mxu0 0.0
    %2123 = vmatprep.subr.mxu0 0.0
    %2124 = vmatpush1.msra.mxu0 0.0
    %2125 = vmatprep.subr.mxu0 0.0
    %2126 = vmatpush1.msra.mxu0 0.0
    %2127 = vmatprep.subr.mxu0 0.0
    %2128 = vmatpush1.msra.mxu0 0.0
    %2129 = vmatprep.subr.mxu0 0.0
    %2130 = vmatpush1.msra.mxu0 0.0
    %2131 = vmatprep.subr.mxu0 0.0
    %2132 = vmatpush1.msra.mxu0 0.0
    %2133 = vmatprep.subr.mxu0 0.0
    %2134 = vmatpush1.msra.mxu0 0.0
    %2135 = vmatprep.subr.mxu0 0.0
    %2136 = vmatpush1.msra.mxu0 0.0
    %2137 = vmatprep.subr.mxu0 0.0
    %2138 = vmatpush1.msra.mxu0 0.0
    %2139 = vmatprep.subr.mxu0 0.0
    %2140 = vmatpush1.msra.mxu0 0.0
    %2141 = vmatprep.subr.mxu0 0.0
    %2142 = vmatpush1.msra.mxu0 0.0
    %2143 = vmatprep.mubr.f32.mxu0 0.0
    %2144 = vmatmul.mubr.f32.gmra.mrb[0].mxu0 %v1654
    %v2145 = vpop.f32.mrb[0].mxu0
    %v2146 = vadd.f32 %v2076, %v2145
    %v2147 = vpop.f32.mrb[0].mxu0
    %2148 = vdwg.mxu0
    %v2149 = vld [vmem:[%s4] sm:$0xff]
    %v2150 = vld [vmem:[%s4 + $0x8] sm:$0xff]
    %v2151 = vld [vmem:[%s4 + $0x10] sm:$0xff]
    %v2152 = vld [vmem:[%s4 + $0x18] sm:$0xff]
    %v2153 = vld [vmem:[%s4 + $0x20] sm:$0xff]
    %v2154 = vld [vmem:[%s4 + $0x28] sm:$0xff]
    %v2155 = vld [vmem:[%s4 + $0x30] sm:$0xff]
    %v2156 = vld [vmem:[%s4 + $0x38] sm:$0xff]
    %v2157 = vld [vmem:[%s4 + $0x40] sm:$0xff]
    %v2158 = vld [vmem:[%s4 + $0x48] sm:$0xff]
    %v2159 = vld [vmem:[%s4 + $0x50] sm:$0xff]
    %v2160 = vld [vmem:[%s4 + $0x58] sm:$0xff]
    %v2161 = vld [vmem:[%s4 + $0x60] sm:$0xff]
    %v2162 = vld [vmem:[%s4 + $0x68] sm:$0xff]
    %v2163 = vld [vmem:[%s4 + $0x70] sm:$0xff]
    %v2164 = vld [vmem:[%s4 + $0x78] sm:$0xff]
    %v2165 = vld [vmem:[%s5] sm:$0x1]
    %v2167 = vlaneseq
    %v2168 = vshrl.u32 %v2167, 7
    %v2169 = vsub.s32 0, %v2168
    %v2170 = vrot.slane %v2165, %v2169
    %2172 = vmatprep.subr.mxu0 0.0
    %2173 = vmatpush1.msra.mxu0 %v2149
    %2174 = vmatprep.subr.mxu0 0.0
    %2175 = vmatpush1.msra.mxu0 %v2150
    %2176 = vmatprep.subr.mxu0 0.0
    %2177 = vmatpush1.msra.mxu0 %v2151
    %2178 = vmatprep.subr.mxu0 0.0
    %2179 = vmatpush1.msra.mxu0 %v2152
    %2180 = vmatprep.subr.mxu0 0.0
    %2181 = vmatpush1.msra.mxu0 %v2153
    %2182 = vmatprep.subr.mxu0 0.0
    %2183 = vmatpush1.msra.mxu0 %v2154
    %2184 = vmatprep.subr.mxu0 0.0
    %2185 = vmatpush1.msra.mxu0 %v2155
    %2186 = vmatprep.subr.mxu0 0.0
    %2187 = vmatpush1.msra.mxu0 %v2156
    %2188 = vmatprep.subr.mxu0 0.0
    %2189 = vmatpush1.msra.mxu0 %v2157
    %2190 = vmatprep.subr.mxu0 0.0
    %2191 = vmatpush1.msra.mxu0 %v2158
    %2192 = vmatprep.subr.mxu0 0.0
    %2193 = vmatpush1.msra.mxu0 %v2159
    %2194 = vmatprep.subr.mxu0 0.0
    %2195 = vmatpush1.msra.mxu0 %v2160
    %2196 = vmatprep.subr.mxu0 0.0
    %2197 = vmatpush1.msra.mxu0 %v2161
    %2198 = vmatprep.subr.mxu0 0.0
    %2199 = vmatpush1.msra.mxu0 %v2162
    %2200 = vmatprep.subr.mxu0 0.0
    %2201 = vmatpush1.msra.mxu0 %v2163
    %2202 = vmatprep.subr.mxu0 0.0
    %2203 = vmatpush1.msra.mxu0 %v2164
    %2204 = vmatprep.subr.mxu0 0.0
    %2205 = vmatpush1.msra.mxu0 0.0
    %2206 = vmatprep.subr.mxu0 0.0
    %2207 = vmatpush1.msra.mxu0 0.0
    %2208 = vmatprep.subr.mxu0 0.0
    %2209 = vmatpush1.msra.mxu0 0.0
    %2210 = vmatprep.subr.mxu0 0.0
    %2211 = vmatpush1.msra.mxu0 0.0
    %2212 = vmatprep.subr.mxu0 0.0
    %2213 = vmatpush1.msra.mxu0 0.0
    %2214 = vmatprep.subr.mxu0 0.0
    %2215 = vmatpush1.msra.mxu0 0.0
    %2216 = vmatprep.subr.mxu0 0.0
    %2217 = vmatpush1.msra.mxu0 0.0
    %2218 = vmatprep.subr.mxu0 0.0
    %2219 = vmatpush1.msra.mxu0 0.0
    %2220 = vmatprep.subr.mxu0 0.0
    %2221 = vmatpush1.msra.mxu0 0.0
    %2222 = vmatprep.subr.mxu0 0.0
    %2223 = vmatpush1.msra.mxu0 0.0
    %2224 = vmatprep.subr.mxu0 0.0
    %2225 = vmatpush1.msra.mxu0 0.0
    %2226 = vmatprep.subr.mxu0 0.0
    %2227 = vmatpush1.msra.mxu0 0.0
    %2228 = vmatprep.subr.mxu0 0.0
    %2229 = vmatpush1.msra.mxu0 0.0
    %2230 = vmatprep.subr.mxu0 0.0
    %2231 = vmatpush1.msra.mxu0 0.0
    %2232 = vmatprep.subr.mxu0 0.0
    %2233 = vmatpush1.msra.mxu0 0.0
    %2234 = vmatprep.subr.mxu0 0.0
    %2235 = vmatpush1.msra.mxu0 0.0
    %2236 = vmatprep.mubr.f32.mxu0 0.0
    %2237 = vmatmul.mubr.f32.gmra.mrb[0].mxu0 %v2146
    %v2238 = vpop.f32.mrb[0].mxu0
    %v2239 = vadd.f32 %v2170, %v2238
    %v2240 = vpop.f32.mrb[0].mxu0
    %2241 = vdwg.mxu0
    %2242 = vst [vmem:[#allocation9] sm:$0xff] %v2239
    // Predicated region
    $region34: #{tpu_custom_call.1} parent=1 // pred_check
      _
    $region35: #{tpu_custom_call.1} parent=1 // pred_check_branch
      %2244 = sbr.rel (0) target = $region37
    $region36: #{tpu_custom_call.1} parent=1 // pred_region
      %s2246 = ssub.s32 128, 128
      %2247 = vsyncadd [#allocation6], %s2246
      %s2249 = sshll.u32 [#allocation9], 4
      %s2250 = int_to_ptr.vmem [resolvable:$true] %s2249
      %2252 = dma.vmem_to_hbm [thread:$0]  %s2250, 128, %s6, [#allocation6]
    $region37: #{tpu_custom_call.1} parent=1 // pred_fallthru
      _
    // Predicated region
    $region38: #{tpu_custom_call.1} parent=1 // pred_check
      _
    $region39: #{tpu_custom_call.1} parent=1 // pred_check_branch
      %2254 = sbr.rel (0) target = $region41
    $region40: #{tpu_custom_call.1} parent=1 // pred_region
      %2255 = dma.done [#allocation6], 128
    $region41: #{tpu_custom_call.1} parent=1 // pred_fallthru
      _
    %2256 = vsyncpa [#allocation5], 1
    %2257 = vsyncpa [#allocation8], 1
    %2258 = vsyncpa [#allocation6], 1

</llo_original>
